<compile_context>
chip_gen: v7x
topology: tpu7x:2x2x1
jax: 0.10.0
libtpu: 0.0.40
codegen_flags: <defaults>
</compile_context>

<pallas_src>
import functools

import jax
import jax.numpy as jnp
import numpy as np
from jax.experimental import pallas as pl
from jax.experimental.pallas import tpu as pltpu

SELU_ALPHA = 1.6732632423543772848170429916717
SELU_SCALE = 1.0507009873554804934193349852946
LANE = 128


def _selu(x):
    return SELU_SCALE * jnp.where(x > 0, x, SELU_ALPHA * (jnp.exp(x) - 1.0))


# ----------------------------- fused forward kernel -------------------------
def _rdecoder_fused_kernel(y_ref, wih0_ref, whh0_ref, b0_ref,
                           wih1_ref, whh1_ref, b1_ref,
                           wo1_ref, bo1_ref, bns_ref, bnb_ref,
                           wo2_ref, bo2_ref,
                           attn_ref, out_ref, h1b_sc, *, T, N, H):
    """One invocation computes the whole forward.

    y_ref      : [T, N, H]     time-major input (H = 2*hidden_size)
    wih0/whh0  : [H, 4H]       LSTM layer-0 input / recurrent weights
    wih1/whh1  : [H, 4H]       LSTM layer-1 input / recurrent weights
    b0 / b1    : [1, 4H]       combined LSTM biases
    wo1 / bo1  : [H, 64]/[1,64]   head linear 1
    bns / bnb  : [T*N, 1]      eval-mode BatchNorm scale/bias, t-major rows
    wo2 / bo2  : [64, Wp]/[1,Wp]  head linear 2, zero-padded to 128 lanes
    attn_ref   : [T, N, H]     attention weights (time-major)
    out_ref    : [T*N, Wp]     head output, t-major rows, lane-padded
    h1b_sc     : [T*N, H]      VMEM scratch: pass-2 layer-1 outputs, t-major
    """
    f32 = jnp.float32

    def gates(g, c_prev):
        sif = jax.nn.sigmoid(g[:, :2 * H])          # i,f from one contiguous slice
        i_g = sif[:, :H]
        f_g = sif[:, H:]
        g_g = jnp.tanh(g[:, 2 * H:3 * H])
        o_g = jax.nn.sigmoid(g[:, 3 * H:])
        c_new = f_g * c_prev + i_g * g_g
        return o_g * jnp.tanh(c_new), c_new

    wih0 = wih0_ref[...]
    whh0 = whh0_ref[...]
    b0 = b0_ref[...]
    wih1 = wih1_ref[...]
    whh1 = whh1_ref[...]
    b1 = b1_ref[...]

    zero = jnp.zeros((N, H), f32)

    # ---- prologue: LSTM pass-1 step 0 from zero state (recurrent dots skipped,
    #      review #9: don't rely on the compiler folding dot(0, W)) ----
    g = jnp.dot(y_ref[0], wih0, preferred_element_type=f32) + b0
    h0a, c0a = gates(g, zero)
    g = jnp.dot(h0a, wih1, preferred_element_type=f32) + b1
    h1a, c1a = gates(g, zero)

    # skewed stacked state (review #5): rows [0:N) = pass-1 after step t,
    #                                   rows [N:2N) = pass-2 after step t-1.
    h0_st = jnp.concatenate([h0a, zero], axis=0)
    c0_st = jnp.concatenate([c0a, zero], axis=0)
    h1_st = jnp.concatenate([h1a, zero], axis=0)
    c1_st = jnp.concatenate([c1a, zero], axis=0)

    for t in range(T):                              # fully unrolled (T small, static)
        y_t = y_ref[t]                              # [N, H]
        h1a_t = h1_st[:N, :]                        # pass-1 top-layer output at t

        # recurrent projections for BOTH passes: operands known at iteration
        # start, so these dots sit off the attention -> pass-2 critical chain.
        r0 = jnp.dot(h0_st, whh0, preferred_element_type=f32)     # [2N, 4H]
        r1 = jnp.dot(h1_st, whh1, preferred_element_type=f32)     # [2N, 4H]

        # ---- attention at step t: softmax over the N rows.  tanh bounds the
        #      logits to (-1, 1), so exp cannot overflow -> max-shift dropped.
        ew = jnp.exp(jnp.tanh(h1a_t * y_t))
        attn_t = ew * pl.reciprocal(jnp.sum(ew, axis=0, keepdims=True))
        attn_ref[t] = attn_t
        x2_t = y_t * attn_t

        # ---- batched layer 0: top rows = pass-1 step t+1, bottom = pass-2 step t
        y_next = y_ref[t + 1] if t + 1 < T else y_t   # last step: dummy, discarded
        g0 = (jnp.dot(jnp.concatenate([y_next, x2_t], axis=0), wih0,
                      preferred_element_type=f32) + r0 + b0)
        h0_st, c0_st = gates(g0, c0_st)

        # ---- batched layer 1 (its input IS the stacked layer-0 output) ----
        g1 = jnp.dot(h0_st, wih1, preferred_element_type=f32) + r1 + b1
        h1_st, c1_st = gates(g1, c1_st)

        # stash pass-2 layer-1 output (t-major rows) for the batched head
        h1b_sc[pl.ds(t * N, N), :] = h1_st[N:, :]

    # ---- MLP head hoisted out of the recurrence (review #2): two batched
    #      [T*N, .] matmuls + vectorized SELU/BN + one dense lane-padded store.
    x = _selu(h1b_sc[...])                                         # [T*N, H]
    h = jnp.dot(x, wo1_ref[...], preferred_element_type=f32) + bo1_ref[...]
    h = _selu(h * bns_ref[...] + bnb_ref[...])
    out_ref[...] = _selu(jnp.dot(h, wo2_ref[...], preferred_element_type=f32)
                         + bo2_ref[...])


# ----------------------------- parameter packing ----------------------------
def prepare_kernel_params(params, seq_len, num_size):
    """One-time repack of the module parameters into kernel-ready layout."""
    wih0, whh0, b0, wih1, whh1, b1 = params['lstm']   # (H,4H),(H,4H),(1,4H),...
    wo1, bo1, bn_scale, bn_bias, w2, b2 = params['head']
    T, N = seq_len, num_size
    window = w2.shape[1]
    w_pad = LANE * ((window + LANE - 1) // LANE)

    # lane-dense head output: pad second linear to a multiple of 128 columns
    w2p = jnp.pad(w2, ((0, 0), (0, w_pad - window)))
    b2p = jnp.pad(b2, ((0, 0), (0, w_pad - window)))

    # eval-mode BatchNorm1d(num_size): flat row f = n*T + t -> channel f % N.
    # The kernel's head rows are t-major (r = t*N + n), so remap per row.
    r = jnp.arange(T * N)
    ch = ((r % N) * T + r // N) % N                    # channel of t-major row r
    bns_rows = bn_scale[ch][:, None]                   # [T*N, 1]
    bnb_rows = bn_bias[ch][:, None]

    return dict(wih0=wih0, whh0=whh0, b0=b0, wih1=wih1, whh1=whh1, b1=b1,
                wo1=wo1, bo1=bo1, bns=bns_rows, bnb=bnb_rows, w2p=w2p, b2p=b2p)


# ------------------------------- full forward -------------------------------
def rdecoder_forward(y_data, kp, *, num_size, window):
    B, T, I = y_data.shape
    N = num_size
    assert B == N, "attention reshape semantics require batch == num_size"
    H = I
    w_pad = kp['w2p'].shape[1]

    # Single remaining wrapper prologue op: 4 KiB time-major relayout.
    y_tm = jnp.transpose(y_data, (1, 0, 2))                       # [T, N, H]

    # advisory cost hint for XLA's scheduler (review #12)
    flops = int(2 * (2 * N) * H * (4 * H) * 4 * T                 # in-loop LSTM dots
                + 2 * N * H * (4 * H) * 2                         # prologue
                + 2 * T * N * (H * 64 + 64 * w_pad))              # batched head
    transcendentals = int(T * (2 * N) * (4 * H) * 2 + T * N * (3 * H)
                          + T * N * (2 * 64 + w_pad))
    bytes_accessed = int(4 * (y_tm.size + T * N * H + T * N * w_pad
                              + 4 * H * 4 * H + H * 64 + 64 * w_pad
                              + 2 * T * N + 4 * 4 * H + 64 + w_pad))

    kern = functools.partial(_rdecoder_fused_kernel, T=T, N=N, H=H)
    vspec = pl.BlockSpec(memory_space=pltpu.MemorySpace.VMEM)
    attn_tm, out_flat = pl.pallas_call(
        kern,
        out_shape=(jax.ShapeDtypeStruct((T, N, H), jnp.float32),
                   jax.ShapeDtypeStruct((T * N, w_pad), jnp.float32)),
        in_specs=[vspec] * 13,
        out_specs=(vspec, vspec),
        scratch_shapes=[pltpu.VMEM((T * N, H), jnp.float32)],
        cost_estimate=pl.CostEstimate(flops=flops,
                                      transcendentals=transcendentals,
                                      bytes_accessed=bytes_accessed),
    )(y_tm, kp['wih0'], kp['whh0'], kp['b0'], kp['wih1'], kp['whh1'], kp['b1'],
      kp['wo1'], kp['bo1'], kp['bns'], kp['bnb'], kp['w2p'], kp['b2p'])

    # tiny epilogue (fused by XLA): undo time-major layout and apply the
    # PyTorch reshape-not-transpose quirk (flat order r = n*T + t -> [T', N, w]).
    attn = jnp.transpose(attn_tm, (1, 0, 2))                      # [N, T, H]
    out = jnp.transpose(out_flat.reshape(T, N, w_pad)[:, :, :window], (1, 0, 2))
    out = out.reshape(-1, N, window)                              # [T', N, w]
    return out, attn


# ------------------------------ pure-JAX reference ---------------------------
def _lstm2_ref(x_btc, lstm_params):
    wih0, whh0, b0, wih1, whh1, b1 = lstm_params
    B, T, I = x_btc.shape
    H = I

    def cell(x_in, h, c, w_t, u_t, b):
        g = x_in @ w_t + h @ u_t + b
        i = jax.nn.sigmoid(g[:, :H])
        f = jax.nn.sigmoid(g[:, H:2 * H])
        gg = jnp.tanh(g[:, 2 * H:3 * H])
        o = jax.nn.sigmoid(g[:, 3 * H:])
        c = f * c + i * gg
        return o * jnp.tanh(c), c

    def step(carry, x_t):
        h0, c0, h1, c1 = carry
        h0, c0 = cell(x_t, h0, c0, wih0, whh0, b0)
        h1, c1 = cell(h0, h1, c1, wih1, whh1, b1)
        return (h0, c0, h1, c1), h1

    init = tuple(jnp.zeros((B, H), jnp.float32) for _ in range(4))
    _, ys = jax.lax.scan(step, init, jnp.transpose(x_btc, (1, 0, 2)))
    return jnp.transpose(ys, (1, 0, 2))


def rdecoder_ref(y, params, num_size):
    B, T, I = y.shape
    N = num_size
    out1 = _lstm2_ref(y, params['lstm'])
    eout = y.reshape(N, -1, I)
    out1_r = out1.reshape(N, -1, I)
    attn = jax.nn.softmax(jnp.tanh(out1_r * eout), axis=0)
    x2 = eout * attn
    out2 = _lstm2_ref(x2, params['lstm'])
    out2 = _selu(out2).reshape(-1, N, I)
    w1, b1, bns, bnb, w2, b2 = params['head']
    h = out2 @ w1 + b1[None]
    h = h * bns[None, :, None] + bnb[None, :, None]
    h = _selu(h)
    o = _selu(h @ w2 + b2[None])
    return o, attn


# ------------------------------- parameter init ------------------------------
def init_params(key, hidden_size, window, num_size):
    H2 = 2 * hidden_size
    G = 4 * H2
    keys = jax.random.split(key, 12)

    def u(kk, shape, bound):
        return jax.random.uniform(kk, shape, jnp.float32, -bound, bound)

    k = 1.0 / np.sqrt(H2)
    wih0 = u(keys[0], (G, H2), k)
    whh0 = u(keys[1], (G, H2), k)
    bih0 = u(keys[2], (G,), k)
    bhh0 = u(keys[3], (G,), k)
    wih1 = u(keys[4], (G, H2), k)
    whh1 = u(keys[5], (G, H2), k)
    bih1 = u(keys[6], (G,), k)
    bhh1 = u(keys[7], (G,), k)
    lstm = (wih0.T, whh0.T, (bih0 + bhh0).reshape(1, G),
            wih1.T, whh1.T, (bih1 + bhh1).reshape(1, G))

    k1 = 1.0 / np.sqrt(H2)
    w1 = u(keys[8], (64, H2), k1)
    b1 = u(keys[9], (64,), k1)
    k2 = 1.0 / np.sqrt(64)
    w2 = u(keys[10], (window, 64), k2)
    b2 = u(keys[11], (64,), k2)[:window] * 0 + u(keys[11], (window,), k2)

    eps = 1e-5
    gamma = jnp.ones((num_size,), jnp.float32)
    beta = jnp.zeros((num_size,), jnp.float32)
    rmean = jnp.zeros((num_size,), jnp.float32)
    rvar = jnp.ones((num_size,), jnp.float32)
    bn_scale = gamma / jnp.sqrt(rvar + eps)
    bn_bias = beta - rmean * bn_scale
    head = (w1.T, b1.reshape(1, 64), bn_scale, bn_bias, w2.T, b2.reshape(1, window))
    return {'lstm': lstm, 'head': head}


if __name__ == "__main__":
    window, hidden_size, num_size = 8, 16, 4
    B, T = num_size, 8
    H2 = 2 * hidden_size

    key = jax.random.PRNGKey(0)
    pkey, dkey = jax.random.split(key)
    params = init_params(pkey, hidden_size, window, num_size)
    y_data = jax.random.normal(dkey, (B, T, H2), jnp.float32)

    kparams = prepare_kernel_params(params, T, num_size)     # one-time repack
    fwd = jax.jit(functools.partial(rdecoder_forward,
                                    num_size=num_size, window=window))
    out, attn = jax.block_until_ready(fwd(y_data, kparams))

    ref_out, ref_attn = rdecoder_ref(y_data, params, num_size)
    np.testing.assert_allclose(np.asarray(attn), np.asarray(ref_attn),
                               rtol=1e-4, atol=1e-4)
    np.testing.assert_allclose(np.asarray(out), np.asarray(ref_out),
                               rtol=1e-4, atol=1e-4)
    print("KERNEL_OK")
</pallas_src>

<mosaic_0001>
module attributes {stable_mosaic.version = 11 : i64} {
  func.func @_rdecoder_fused_kernel(%arg0: memref<8x4x32xf32, #tpu.memory_space<vmem>>, %arg1: memref<32x128xf32, #tpu.memory_space<vmem>>, %arg2: memref<32x128xf32, #tpu.memory_space<vmem>>, %arg3: memref<1x128xf32, #tpu.memory_space<vmem>>, %arg4: memref<32x128xf32, #tpu.memory_space<vmem>>, %arg5: memref<32x128xf32, #tpu.memory_space<vmem>>, %arg6: memref<1x128xf32, #tpu.memory_space<vmem>>, %arg7: memref<32x64xf32, #tpu.memory_space<vmem>>, %arg8: memref<1x64xf32, #tpu.memory_space<vmem>>, %arg9: memref<32x1xf32, #tpu.memory_space<vmem>>, %arg10: memref<32x1xf32, #tpu.memory_space<vmem>>, %arg11: memref<64x128xf32, #tpu.memory_space<vmem>>, %arg12: memref<1x128xf32, #tpu.memory_space<vmem>>, %arg13: memref<8x4x32xf32, #tpu.memory_space<vmem>>, %arg14: memref<32x128xf32, #tpu.memory_space<vmem>>, %arg15: memref<32x32xf32, #tpu.memory_space<vmem>>) attributes {dimension_semantics = [], scalar_prefetch = 0 : i64, scratch_operands = 1 : i64, tpu.core_type = #tpu.core_type<tc>} {
    %c0 = arith.constant 0 : index
    %c0_0 = arith.constant 0 : index
    %0 = vector.load %arg1[%c0, %c0_0] : memref<32x128xf32, #tpu.memory_space<vmem>>, vector<32x128xf32>
    %c0_1 = arith.constant 0 : index
    %c0_2 = arith.constant 0 : index
    %1 = vector.load %arg2[%c0_1, %c0_2] : memref<32x128xf32, #tpu.memory_space<vmem>>, vector<32x128xf32>
    %c0_3 = arith.constant 0 : index
    %c0_4 = arith.constant 0 : index
    %2 = vector.load %arg3[%c0_3, %c0_4] : memref<1x128xf32, #tpu.memory_space<vmem>>, vector<1x128xf32>
    %c0_5 = arith.constant 0 : index
    %c0_6 = arith.constant 0 : index
    %3 = vector.load %arg4[%c0_5, %c0_6] : memref<32x128xf32, #tpu.memory_space<vmem>>, vector<32x128xf32>
    %c0_7 = arith.constant 0 : index
    %c0_8 = arith.constant 0 : index
    %4 = vector.load %arg5[%c0_7, %c0_8] : memref<32x128xf32, #tpu.memory_space<vmem>>, vector<32x128xf32>
    %c0_9 = arith.constant 0 : index
    %c0_10 = arith.constant 0 : index
    %5 = vector.load %arg6[%c0_9, %c0_10] : memref<1x128xf32, #tpu.memory_space<vmem>>, vector<1x128xf32>
    %cst = arith.constant 0.000000e+00 : f32
    %6 = vector.broadcast %cst : f32 to vector<4x32xf32>
    %c0_11 = arith.constant 0 : index
    %c0_12 = arith.constant 0 : index
    %c0_13 = arith.constant 0 : index
    %7 = vector.load %arg0[%c0_11, %c0_12, %c0_13] : memref<8x4x32xf32, #tpu.memory_space<vmem>>, vector<1x4x32xf32>
    %8 = vector.shape_cast %7 : vector<1x4x32xf32> to vector<4x32xf32>
    %cst_14 = arith.constant dense<0.000000e+00> : vector<4x128xf32>
    %9 = tpu.matmul %8, %0, %cst_14 {dimension_numbers = #tpu.dot_dimension_numbers<[1], [0], [0], [1], [0, 0, 1, 1], [], []>} : vector<4x32xf32>, vector<32x128xf32>, vector<4x128xf32> -> vector<4x128xf32>
    %10 = vector.broadcast %2 : vector<1x128xf32> to vector<4x128xf32>
    %11 = arith.addf %9, %10 : vector<4x128xf32>
    %12 = vector.extract_strided_slice %11 {offsets = [0, 0], sizes = [4, 64], strides = [1, 1]} : vector<4x128xf32> to vector<4x64xf32>
    %13 = arith.negf %12 : vector<4x64xf32>
    %14 = math.exp %13 : vector<4x64xf32>
    %cst_15 = arith.constant 1.000000e+00 : f32
    %15 = vector.broadcast %cst_15 : f32 to vector<4x64xf32>
    %16 = arith.addf %15, %14 : vector<4x64xf32>
    %17 = arith.divf %15, %16 : vector<4x64xf32>
    %18 = vector.extract_strided_slice %17 {offsets = [0, 0], sizes = [4, 32], strides = [1, 1]} : vector<4x64xf32> to vector<4x32xf32>
    %19 = vector.extract_strided_slice %17 {offsets = [0, 32], sizes = [4, 32], strides = [1, 1]} : vector<4x64xf32> to vector<4x32xf32>
    %20 = vector.extract_strided_slice %11 {offsets = [0, 64], sizes = [4, 32], strides = [1, 1]} : vector<4x128xf32> to vector<4x32xf32>
    %21 = math.tanh %20 : vector<4x32xf32>
    %22 = vector.extract_strided_slice %11 {offsets = [0, 96], sizes = [4, 32], strides = [1, 1]} : vector<4x128xf32> to vector<4x32xf32>
    %23 = arith.negf %22 : vector<4x32xf32>
    %24 = math.exp %23 : vector<4x32xf32>
    %cst_16 = arith.constant 1.000000e+00 : f32
    %25 = vector.broadcast %cst_16 : f32 to vector<4x32xf32>
    %26 = arith.addf %25, %24 : vector<4x32xf32>
    %27 = arith.divf %25, %26 : vector<4x32xf32>
    %28 = arith.mulf %19, %6 : vector<4x32xf32>
    %29 = arith.mulf %18, %21 : vector<4x32xf32>
    %30 = arith.addf %28, %29 : vector<4x32xf32>
    %31 = math.tanh %30 : vector<4x32xf32>
    %32 = arith.mulf %27, %31 : vector<4x32xf32>
    %cst_17 = arith.constant dense<0.000000e+00> : vector<4x128xf32>
    %33 = tpu.matmul %32, %3, %cst_17 {dimension_numbers = #tpu.dot_dimension_numbers<[1], [0], [0], [1], [0, 0, 1, 1], [], []>} : vector<4x32xf32>, vector<32x128xf32>, vector<4x128xf32> -> vector<4x128xf32>
    %34 = vector.broadcast %5 : vector<1x128xf32> to vector<4x128xf32>
    %35 = arith.addf %33, %34 : vector<4x128xf32>
    %36 = vector.extract_strided_slice %35 {offsets = [0, 0], sizes = [4, 64], strides = [1, 1]} : vector<4x128xf32> to vector<4x64xf32>
    %37 = arith.negf %36 : vector<4x64xf32>
    %38 = math.exp %37 : vector<4x64xf32>
    %cst_18 = arith.constant 1.000000e+00 : f32
    %39 = vector.broadcast %cst_18 : f32 to vector<4x64xf32>
    %40 = arith.addf %39, %38 : vector<4x64xf32>
    %41 = arith.divf %39, %40 : vector<4x64xf32>
    %42 = vector.extract_strided_slice %41 {offsets = [0, 0], sizes = [4, 32], strides = [1, 1]} : vector<4x64xf32> to vector<4x32xf32>
    %43 = vector.extract_strided_slice %41 {offsets = [0, 32], sizes = [4, 32], strides = [1, 1]} : vector<4x64xf32> to vector<4x32xf32>
    %44 = vector.extract_strided_slice %35 {offsets = [0, 64], sizes = [4, 32], strides = [1, 1]} : vector<4x128xf32> to vector<4x32xf32>
    %45 = math.tanh %44 : vector<4x32xf32>
    %46 = vector.extract_strided_slice %35 {offsets = [0, 96], sizes = [4, 32], strides = [1, 1]} : vector<4x128xf32> to vector<4x32xf32>
    %47 = arith.negf %46 : vector<4x32xf32>
    %48 = math.exp %47 : vector<4x32xf32>
    %cst_19 = arith.constant 1.000000e+00 : f32
    %49 = vector.broadcast %cst_19 : f32 to vector<4x32xf32>
    %50 = arith.addf %49, %48 : vector<4x32xf32>
    %51 = arith.divf %49, %50 : vector<4x32xf32>
    %52 = arith.mulf %43, %6 : vector<4x32xf32>
    %53 = arith.mulf %42, %45 : vector<4x32xf32>
    %54 = arith.addf %52, %53 : vector<4x32xf32>
    %55 = math.tanh %54 : vector<4x32xf32>
    %56 = arith.mulf %51, %55 : vector<4x32xf32>
    %57 = tpu.concatenate %32, %6 in 0 : vector<4x32xf32>, vector<4x32xf32> -> vector<8x32xf32>
    %58 = tpu.concatenate %30, %6 in 0 : vector<4x32xf32>, vector<4x32xf32> -> vector<8x32xf32>
    %59 = tpu.concatenate %56, %6 in 0 : vector<4x32xf32>, vector<4x32xf32> -> vector<8x32xf32>
    %60 = tpu.concatenate %54, %6 in 0 : vector<4x32xf32>, vector<4x32xf32> -> vector<8x32xf32>
    %c0_20 = arith.constant 0 : index
    %c0_21 = arith.constant 0 : index
    %c0_22 = arith.constant 0 : index
    %61 = vector.load %arg0[%c0_20, %c0_21, %c0_22] : memref<8x4x32xf32, #tpu.memory_space<vmem>>, vector<1x4x32xf32>
    %62 = vector.shape_cast %61 : vector<1x4x32xf32> to vector<4x32xf32>
    %63 = vector.extract_strided_slice %59 {offsets = [0, 0], sizes = [4, 32], strides = [1, 1]} : vector<8x32xf32> to vector<4x32xf32>
    %cst_23 = arith.constant dense<0.000000e+00> : vector<8x128xf32>
    %64 = tpu.matmul %57, %1, %cst_23 {dimension_numbers = #tpu.dot_dimension_numbers<[1], [0], [0], [1], [0, 0, 1, 1], [], []>} : vector<8x32xf32>, vector<32x128xf32>, vector<8x128xf32> -> vector<8x128xf32>
    %cst_24 = arith.constant dense<0.000000e+00> : vector<8x128xf32>
    %65 = tpu.matmul %59, %4, %cst_24 {dimension_numbers = #tpu.dot_dimension_numbers<[1], [0], [0], [1], [0, 0, 1, 1], [], []>} : vector<8x32xf32>, vector<32x128xf32>, vector<8x128xf32> -> vector<8x128xf32>
    %66 = arith.mulf %63, %62 : vector<4x32xf32>
    %67 = math.tanh %66 : vector<4x32xf32>
    %68 = math.exp %67 : vector<4x32xf32>
    %cst_25 = arith.constant dense<0.000000e+00> : vector<32xf32>
    %69 = vector.multi_reduction <add>, %68, %cst_25 [0] : vector<4x32xf32> to vector<32xf32>
    %70 = vector.shape_cast %69 : vector<32xf32> to vector<1x32xf32>
    %71 = tpu.reciprocal %70 : vector<1x32xf32> -> vector<1x32xf32>
    %72 = vector.broadcast %71 : vector<1x32xf32> to vector<4x32xf32>
    %73 = arith.mulf %68, %72 : vector<4x32xf32>
    %c0_26 = arith.constant 0 : index
    %c0_27 = arith.constant 0 : index
    %c0_28 = arith.constant 0 : index
    %74 = vector.load %arg13[%c0_26, %c0_27, %c0_28] : memref<8x4x32xf32, #tpu.memory_space<vmem>>, vector<1x4x32xf32>
    %75 = vector.shape_cast %74 : vector<1x4x32xf32> to vector<4x32xf32>
    %76 = vector.shape_cast %73 : vector<4x32xf32> to vector<1x4x32xf32>
    tpu.vector_store %arg13[%c0_26, %c0_27, %c0_28], %76 {strides = array<i32>} : memref<8x4x32xf32, #tpu.memory_space<vmem>>, vector<1x4x32xf32>,
    %77 = arith.mulf %62, %73 : vector<4x32xf32>
    %c1 = arith.constant 1 : index
    %c0_29 = arith.constant 0 : index
    %c0_30 = arith.constant 0 : index
    %78 = vector.load %arg0[%c1, %c0_29, %c0_30] : memref<8x4x32xf32, #tpu.memory_space<vmem>>, vector<1x4x32xf32>
    %79 = vector.shape_cast %78 : vector<1x4x32xf32> to vector<4x32xf32>
    %80 = tpu.concatenate %79, %77 in 0 : vector<4x32xf32>, vector<4x32xf32> -> vector<8x32xf32>
    %cst_31 = arith.constant dense<0.000000e+00> : vector<8x128xf32>
    %81 = tpu.matmul %80, %0, %cst_31 {dimension_numbers = #tpu.dot_dimension_numbers<[1], [0], [0], [1], [0, 0, 1, 1], [], []>} : vector<8x32xf32>, vector<32x128xf32>, vector<8x128xf32> -> vector<8x128xf32>
    %82 = arith.addf %81, %64 : vector<8x128xf32>
    %83 = vector.broadcast %2 : vector<1x128xf32> to vector<8x128xf32>
    %84 = arith.addf %82, %83 : vector<8x128xf32>
    %85 = vector.extract_strided_slice %84 {offsets = [0, 0], sizes = [8, 64], strides = [1, 1]} : vector<8x128xf32> to vector<8x64xf32>
    %86 = arith.negf %85 : vector<8x64xf32>
    %87 = math.exp %86 : vector<8x64xf32>
    %cst_32 = arith.constant 1.000000e+00 : f32
    %88 = vector.broadcast %cst_32 : f32 to vector<8x64xf32>
    %89 = arith.addf %88, %87 : vector<8x64xf32>
    %90 = arith.divf %88, %89 : vector<8x64xf32>
    %91 = vector.extract_strided_slice %90 {offsets = [0, 0], sizes = [8, 32], strides = [1, 1]} : vector<8x64xf32> to vector<8x32xf32>
    %92 = vector.extract_strided_slice %90 {offsets = [0, 32], sizes = [8, 32], strides = [1, 1]} : vector<8x64xf32> to vector<8x32xf32>
    %93 = vector.extract_strided_slice %84 {offsets = [0, 64], sizes = [8, 32], strides = [1, 1]} : vector<8x128xf32> to vector<8x32xf32>
    %94 = math.tanh %93 : vector<8x32xf32>
    %95 = vector.extract_strided_slice %84 {offsets = [0, 96], sizes = [8, 32], strides = [1, 1]} : vector<8x128xf32> to vector<8x32xf32>
    %96 = arith.negf %95 : vector<8x32xf32>
    %97 = math.exp %96 : vector<8x32xf32>
    %cst_33 = arith.constant 1.000000e+00 : f32
    %98 = vector.broadcast %cst_33 : f32 to vector<8x32xf32>
    %99 = arith.addf %98, %97 : vector<8x32xf32>
    %100 = arith.divf %98, %99 : vector<8x32xf32>
    %101 = arith.mulf %92, %58 : vector<8x32xf32>
    %102 = arith.mulf %91, %94 : vector<8x32xf32>
    %103 = arith.addf %101, %102 : vector<8x32xf32>
    %104 = math.tanh %103 : vector<8x32xf32>
    %105 = arith.mulf %100, %104 : vector<8x32xf32>
    %cst_34 = arith.constant dense<0.000000e+00> : vector<8x128xf32>
    %106 = tpu.matmul %105, %3, %cst_34 {dimension_numbers = #tpu.dot_dimension_numbers<[1], [0], [0], [1], [0, 0, 1, 1], [], []>} : vector<8x32xf32>, vector<32x128xf32>, vector<8x128xf32> -> vector<8x128xf32>
    %107 = arith.addf %106, %65 : vector<8x128xf32>
    %108 = vector.broadcast %5 : vector<1x128xf32> to vector<8x128xf32>
    %109 = arith.addf %107, %108 : vector<8x128xf32>
    %110 = vector.extract_strided_slice %109 {offsets = [0, 0], sizes = [8, 64], strides = [1, 1]} : vector<8x128xf32> to vector<8x64xf32>
    %111 = arith.negf %110 : vector<8x64xf32>
    %112 = math.exp %111 : vector<8x64xf32>
    %cst_35 = arith.constant 1.000000e+00 : f32
    %113 = vector.broadcast %cst_35 : f32 to vector<8x64xf32>
    %114 = arith.addf %113, %112 : vector<8x64xf32>
    %115 = arith.divf %113, %114 : vector<8x64xf32>
    %116 = vector.extract_strided_slice %115 {offsets = [0, 0], sizes = [8, 32], strides = [1, 1]} : vector<8x64xf32> to vector<8x32xf32>
    %117 = vector.extract_strided_slice %115 {offsets = [0, 32], sizes = [8, 32], strides = [1, 1]} : vector<8x64xf32> to vector<8x32xf32>
    %118 = vector.extract_strided_slice %109 {offsets = [0, 64], sizes = [8, 32], strides = [1, 1]} : vector<8x128xf32> to vector<8x32xf32>
    %119 = math.tanh %118 : vector<8x32xf32>
    %120 = vector.extract_strided_slice %109 {offsets = [0, 96], sizes = [8, 32], strides = [1, 1]} : vector<8x128xf32> to vector<8x32xf32>
    %121 = arith.negf %120 : vector<8x32xf32>
    %122 = math.exp %121 : vector<8x32xf32>
    %cst_36 = arith.constant 1.000000e+00 : f32
    %123 = vector.broadcast %cst_36 : f32 to vector<8x32xf32>
    %124 = arith.addf %123, %122 : vector<8x32xf32>
    %125 = arith.divf %123, %124 : vector<8x32xf32>
    %126 = arith.mulf %117, %60 : vector<8x32xf32>
    %127 = arith.mulf %116, %119 : vector<8x32xf32>
    %128 = arith.addf %126, %127 : vector<8x32xf32>
    %129 = math.tanh %128 : vector<8x32xf32>
    %130 = arith.mulf %125, %129 : vector<8x32xf32>
    %131 = vector.extract_strided_slice %130 {offsets = [4, 0], sizes = [4, 32], strides = [1, 1]} : vector<8x32xf32> to vector<4x32xf32>
    %c0_37 = arith.constant 0 : index
    %c0_38 = arith.constant 0 : index
    %132 = vector.load %arg15[%c0_37, %c0_38] : memref<32x32xf32, #tpu.memory_space<vmem>>, vector<4x32xf32>
    tpu.vector_store %arg15[%c0_37, %c0_38], %131 {strides = array<i32>} : memref<32x32xf32, #tpu.memory_space<vmem>>, vector<4x32xf32>,
    %c1_39 = arith.constant 1 : index
    %c0_40 = arith.constant 0 : index
    %c0_41 = arith.constant 0 : index
    %133 = vector.load %arg0[%c1_39, %c0_40, %c0_41] : memref<8x4x32xf32, #tpu.memory_space<vmem>>, vector<1x4x32xf32>
    %134 = vector.shape_cast %133 : vector<1x4x32xf32> to vector<4x32xf32>
    %135 = vector.extract_strided_slice %130 {offsets = [0, 0], sizes = [4, 32], strides = [1, 1]} : vector<8x32xf32> to vector<4x32xf32>
    %cst_42 = arith.constant dense<0.000000e+00> : vector<8x128xf32>
    %136 = tpu.matmul %105, %1, %cst_42 {dimension_numbers = #tpu.dot_dimension_numbers<[1], [0], [0], [1], [0, 0, 1, 1], [], []>} : vector<8x32xf32>, vector<32x128xf32>, vector<8x128xf32> -> vector<8x128xf32>
    %cst_43 = arith.constant dense<0.000000e+00> : vector<8x128xf32>
    %137 = tpu.matmul %130, %4, %cst_43 {dimension_numbers = #tpu.dot_dimension_numbers<[1], [0], [0], [1], [0, 0, 1, 1], [], []>} : vector<8x32xf32>, vector<32x128xf32>, vector<8x128xf32> -> vector<8x128xf32>
    %138 = arith.mulf %135, %134 : vector<4x32xf32>
    %139 = math.tanh %138 : vector<4x32xf32>
    %140 = math.exp %139 : vector<4x32xf32>
    %cst_44 = arith.constant dense<0.000000e+00> : vector<32xf32>
    %141 = vector.multi_reduction <add>, %140, %cst_44 [0] : vector<4x32xf32> to vector<32xf32>
    %142 = vector.shape_cast %141 : vector<32xf32> to vector<1x32xf32>
    %143 = tpu.reciprocal %142 : vector<1x32xf32> -> vector<1x32xf32>
    %144 = vector.broadcast %143 : vector<1x32xf32> to vector<4x32xf32>
    %145 = arith.mulf %140, %144 : vector<4x32xf32>
    %c1_45 = arith.constant 1 : index
    %c0_46 = arith.constant 0 : index
    %c0_47 = arith.constant 0 : index
    %146 = vector.load %arg13[%c1_45, %c0_46, %c0_47] : memref<8x4x32xf32, #tpu.memory_space<vmem>>, vector<1x4x32xf32>
    %147 = vector.shape_cast %146 : vector<1x4x32xf32> to vector<4x32xf32>
    %148 = vector.shape_cast %145 : vector<4x32xf32> to vector<1x4x32xf32>
    tpu.vector_store %arg13[%c1_45, %c0_46, %c0_47], %148 {strides = array<i32>} : memref<8x4x32xf32, #tpu.memory_space<vmem>>, vector<1x4x32xf32>,
    %149 = arith.mulf %134, %145 : vector<4x32xf32>
    %c2 = arith.constant 2 : index
    %c0_48 = arith.constant 0 : index
    %c0_49 = arith.constant 0 : index
    %150 = vector.load %arg0[%c2, %c0_48, %c0_49] : memref<8x4x32xf32, #tpu.memory_space<vmem>>, vector<1x4x32xf32>
    %151 = vector.shape_cast %150 : vector<1x4x32xf32> to vector<4x32xf32>
    %152 = tpu.concatenate %151, %149 in 0 : vector<4x32xf32>, vector<4x32xf32> -> vector<8x32xf32>
    %cst_50 = arith.constant dense<0.000000e+00> : vector<8x128xf32>
    %153 = tpu.matmul %152, %0, %cst_50 {dimension_numbers = #tpu.dot_dimension_numbers<[1], [0], [0], [1], [0, 0, 1, 1], [], []>} : vector<8x32xf32>, vector<32x128xf32>, vector<8x128xf32> -> vector<8x128xf32>
    %154 = arith.addf %153, %136 : vector<8x128xf32>
    %155 = vector.broadcast %2 : vector<1x128xf32> to vector<8x128xf32>
    %156 = arith.addf %154, %155 : vector<8x128xf32>
    %157 = vector.extract_strided_slice %156 {offsets = [0, 0], sizes = [8, 64], strides = [1, 1]} : vector<8x128xf32> to vector<8x64xf32>
    %158 = arith.negf %157 : vector<8x64xf32>
    %159 = math.exp %158 : vector<8x64xf32>
    %cst_51 = arith.constant 1.000000e+00 : f32
    %160 = vector.broadcast %cst_51 : f32 to vector<8x64xf32>
    %161 = arith.addf %160, %159 : vector<8x64xf32>
    %162 = arith.divf %160, %161 : vector<8x64xf32>
    %163 = vector.extract_strided_slice %162 {offsets = [0, 0], sizes = [8, 32], strides = [1, 1]} : vector<8x64xf32> to vector<8x32xf32>
    %164 = vector.extract_strided_slice %162 {offsets = [0, 32], sizes = [8, 32], strides = [1, 1]} : vector<8x64xf32> to vector<8x32xf32>
    %165 = vector.extract_strided_slice %156 {offsets = [0, 64], sizes = [8, 32], strides = [1, 1]} : vector<8x128xf32> to vector<8x32xf32>
    %166 = math.tanh %165 : vector<8x32xf32>
    %167 = vector.extract_strided_slice %156 {offsets = [0, 96], sizes = [8, 32], strides = [1, 1]} : vector<8x128xf32> to vector<8x32xf32>
    %168 = arith.negf %167 : vector<8x32xf32>
    %169 = math.exp %168 : vector<8x32xf32>
    %cst_52 = arith.constant 1.000000e+00 : f32
    %170 = vector.broadcast %cst_52 : f32 to vector<8x32xf32>
    %171 = arith.addf %170, %169 : vector<8x32xf32>
    %172 = arith.divf %170, %171 : vector<8x32xf32>
    %173 = arith.mulf %164, %103 : vector<8x32xf32>
    %174 = arith.mulf %163, %166 : vector<8x32xf32>
    %175 = arith.addf %173, %174 : vector<8x32xf32>
    %176 = math.tanh %175 : vector<8x32xf32>
    %177 = arith.mulf %172, %176 : vector<8x32xf32>
    %cst_53 = arith.constant dense<0.000000e+00> : vector<8x128xf32>
    %178 = tpu.matmul %177, %3, %cst_53 {dimension_numbers = #tpu.dot_dimension_numbers<[1], [0], [0], [1], [0, 0, 1, 1], [], []>} : vector<8x32xf32>, vector<32x128xf32>, vector<8x128xf32> -> vector<8x128xf32>
    %179 = arith.addf %178, %137 : vector<8x128xf32>
    %180 = vector.broadcast %5 : vector<1x128xf32> to vector<8x128xf32>
    %181 = arith.addf %179, %180 : vector<8x128xf32>
    %182 = vector.extract_strided_slice %181 {offsets = [0, 0], sizes = [8, 64], strides = [1, 1]} : vector<8x128xf32> to vector<8x64xf32>
    %183 = arith.negf %182 : vector<8x64xf32>
    %184 = math.exp %183 : vector<8x64xf32>
    %cst_54 = arith.constant 1.000000e+00 : f32
    %185 = vector.broadcast %cst_54 : f32 to vector<8x64xf32>
    %186 = arith.addf %185, %184 : vector<8x64xf32>
    %187 = arith.divf %185, %186 : vector<8x64xf32>
    %188 = vector.extract_strided_slice %187 {offsets = [0, 0], sizes = [8, 32], strides = [1, 1]} : vector<8x64xf32> to vector<8x32xf32>
    %189 = vector.extract_strided_slice %187 {offsets = [0, 32], sizes = [8, 32], strides = [1, 1]} : vector<8x64xf32> to vector<8x32xf32>
    %190 = vector.extract_strided_slice %181 {offsets = [0, 64], sizes = [8, 32], strides = [1, 1]} : vector<8x128xf32> to vector<8x32xf32>
    %191 = math.tanh %190 : vector<8x32xf32>
    %192 = vector.extract_strided_slice %181 {offsets = [0, 96], sizes = [8, 32], strides = [1, 1]} : vector<8x128xf32> to vector<8x32xf32>
    %193 = arith.negf %192 : vector<8x32xf32>
    %194 = math.exp %193 : vector<8x32xf32>
    %cst_55 = arith.constant 1.000000e+00 : f32
    %195 = vector.broadcast %cst_55 : f32 to vector<8x32xf32>
    %196 = arith.addf %195, %194 : vector<8x32xf32>
    %197 = arith.divf %195, %196 : vector<8x32xf32>
    %198 = arith.mulf %189, %128 : vector<8x32xf32>
    %199 = arith.mulf %188, %191 : vector<8x32xf32>
    %200 = arith.addf %198, %199 : vector<8x32xf32>
    %201 = math.tanh %200 : vector<8x32xf32>
    %202 = arith.mulf %197, %201 : vector<8x32xf32>
    %203 = vector.extract_strided_slice %202 {offsets = [4, 0], sizes = [4, 32], strides = [1, 1]} : vector<8x32xf32> to vector<4x32xf32>
    %c4 = arith.constant 4 : index
    %c0_56 = arith.constant 0 : index
    %204 = vector.load %arg15[%c4, %c0_56] : memref<32x32xf32, #tpu.memory_space<vmem>>, vector<4x32xf32>
    tpu.vector_store %arg15[%c4, %c0_56], %203 {strides = array<i32>} : memref<32x32xf32, #tpu.memory_space<vmem>>, vector<4x32xf32>,
    %c2_57 = arith.constant 2 : index
    %c0_58 = arith.constant 0 : index
    %c0_59 = arith.constant 0 : index
    %205 = vector.load %arg0[%c2_57, %c0_58, %c0_59] : memref<8x4x32xf32, #tpu.memory_space<vmem>>, vector<1x4x32xf32>
    %206 = vector.shape_cast %205 : vector<1x4x32xf32> to vector<4x32xf32>
    %207 = vector.extract_strided_slice %202 {offsets = [0, 0], sizes = [4, 32], strides = [1, 1]} : vector<8x32xf32> to vector<4x32xf32>
    %cst_60 = arith.constant dense<0.000000e+00> : vector<8x128xf32>
    %208 = tpu.matmul %177, %1, %cst_60 {dimension_numbers = #tpu.dot_dimension_numbers<[1], [0], [0], [1], [0, 0, 1, 1], [], []>} : vector<8x32xf32>, vector<32x128xf32>, vector<8x128xf32> -> vector<8x128xf32>
    %cst_61 = arith.constant dense<0.000000e+00> : vector<8x128xf32>
    %209 = tpu.matmul %202, %4, %cst_61 {dimension_numbers = #tpu.dot_dimension_numbers<[1], [0], [0], [1], [0, 0, 1, 1], [], []>} : vector<8x32xf32>, vector<32x128xf32>, vector<8x128xf32> -> vector<8x128xf32>
    %210 = arith.mulf %207, %206 : vector<4x32xf32>
    %211 = math.tanh %210 : vector<4x32xf32>
    %212 = math.exp %211 : vector<4x32xf32>
    %cst_62 = arith.constant dense<0.000000e+00> : vector<32xf32>
    %213 = vector.multi_reduction <add>, %212, %cst_62 [0] : vector<4x32xf32> to vector<32xf32>
    %214 = vector.shape_cast %213 : vector<32xf32> to vector<1x32xf32>
    %215 = tpu.reciprocal %214 : vector<1x32xf32> -> vector<1x32xf32>
    %216 = vector.broadcast %215 : vector<1x32xf32> to vector<4x32xf32>
    %217 = arith.mulf %212, %216 : vector<4x32xf32>
    %c2_63 = arith.constant 2 : index
    %c0_64 = arith.constant 0 : index
    %c0_65 = arith.constant 0 : index
    %218 = vector.load %arg13[%c2_63, %c0_64, %c0_65] : memref<8x4x32xf32, #tpu.memory_space<vmem>>, vector<1x4x32xf32>
    %219 = vector.shape_cast %218 : vector<1x4x32xf32> to vector<4x32xf32>
    %220 = vector.shape_cast %217 : vector<4x32xf32> to vector<1x4x32xf32>
    tpu.vector_store %arg13[%c2_63, %c0_64, %c0_65], %220 {strides = array<i32>} : memref<8x4x32xf32, #tpu.memory_space<vmem>>, vector<1x4x32xf32>,
    %221 = arith.mulf %206, %217 : vector<4x32xf32>
    %c3 = arith.constant 3 : index
    %c0_66 = arith.constant 0 : index
    %c0_67 = arith.constant 0 : index
    %222 = vector.load %arg0[%c3, %c0_66, %c0_67] : memref<8x4x32xf32, #tpu.memory_space<vmem>>, vector<1x4x32xf32>
    %223 = vector.shape_cast %222 : vector<1x4x32xf32> to vector<4x32xf32>
    %224 = tpu.concatenate %223, %221 in 0 : vector<4x32xf32>, vector<4x32xf32> -> vector<8x32xf32>
    %cst_68 = arith.constant dense<0.000000e+00> : vector<8x128xf32>
    %225 = tpu.matmul %224, %0, %cst_68 {dimension_numbers = #tpu.dot_dimension_numbers<[1], [0], [0], [1], [0, 0, 1, 1], [], []>} : vector<8x32xf32>, vector<32x128xf32>, vector<8x128xf32> -> vector<8x128xf32>
    %226 = arith.addf %225, %208 : vector<8x128xf32>
    %227 = vector.broadcast %2 : vector<1x128xf32> to vector<8x128xf32>
    %228 = arith.addf %226, %227 : vector<8x128xf32>
    %229 = vector.extract_strided_slice %228 {offsets = [0, 0], sizes = [8, 64], strides = [1, 1]} : vector<8x128xf32> to vector<8x64xf32>
    %230 = arith.negf %229 : vector<8x64xf32>
    %231 = math.exp %230 : vector<8x64xf32>
    %cst_69 = arith.constant 1.000000e+00 : f32
    %232 = vector.broadcast %cst_69 : f32 to vector<8x64xf32>
    %233 = arith.addf %232, %231 : vector<8x64xf32>
    %234 = arith.divf %232, %233 : vector<8x64xf32>
    %235 = vector.extract_strided_slice %234 {offsets = [0, 0], sizes = [8, 32], strides = [1, 1]} : vector<8x64xf32> to vector<8x32xf32>
    %236 = vector.extract_strided_slice %234 {offsets = [0, 32], sizes = [8, 32], strides = [1, 1]} : vector<8x64xf32> to vector<8x32xf32>
    %237 = vector.extract_strided_slice %228 {offsets = [0, 64], sizes = [8, 32], strides = [1, 1]} : vector<8x128xf32> to vector<8x32xf32>
    %238 = math.tanh %237 : vector<8x32xf32>
    %239 = vector.extract_strided_slice %228 {offsets = [0, 96], sizes = [8, 32], strides = [1, 1]} : vector<8x128xf32> to vector<8x32xf32>
    %240 = arith.negf %239 : vector<8x32xf32>
    %241 = math.exp %240 : vector<8x32xf32>
    %cst_70 = arith.constant 1.000000e+00 : f32
    %242 = vector.broadcast %cst_70 : f32 to vector<8x32xf32>
    %243 = arith.addf %242, %241 : vector<8x32xf32>
    %244 = arith.divf %242, %243 : vector<8x32xf32>
    %245 = arith.mulf %236, %175 : vector<8x32xf32>
    %246 = arith.mulf %235, %238 : vector<8x32xf32>
    %247 = arith.addf %245, %246 : vector<8x32xf32>
    %248 = math.tanh %247 : vector<8x32xf32>
    %249 = arith.mulf %244, %248 : vector<8x32xf32>
    %cst_71 = arith.constant dense<0.000000e+00> : vector<8x128xf32>
    %250 = tpu.matmul %249, %3, %cst_71 {dimension_numbers = #tpu.dot_dimension_numbers<[1], [0], [0], [1], [0, 0, 1, 1], [], []>} : vector<8x32xf32>, vector<32x128xf32>, vector<8x128xf32> -> vector<8x128xf32>
    %251 = arith.addf %250, %209 : vector<8x128xf32>
    %252 = vector.broadcast %5 : vector<1x128xf32> to vector<8x128xf32>
    %253 = arith.addf %251, %252 : vector<8x128xf32>
    %254 = vector.extract_strided_slice %253 {offsets = [0, 0], sizes = [8, 64], strides = [1, 1]} : vector<8x128xf32> to vector<8x64xf32>
    %255 = arith.negf %254 : vector<8x64xf32>
    %256 = math.exp %255 : vector<8x64xf32>
    %cst_72 = arith.constant 1.000000e+00 : f32
    %257 = vector.broadcast %cst_72 : f32 to vector<8x64xf32>
    %258 = arith.addf %257, %256 : vector<8x64xf32>
    %259 = arith.divf %257, %258 : vector<8x64xf32>
    %260 = vector.extract_strided_slice %259 {offsets = [0, 0], sizes = [8, 32], strides = [1, 1]} : vector<8x64xf32> to vector<8x32xf32>
    %261 = vector.extract_strided_slice %259 {offsets = [0, 32], sizes = [8, 32], strides = [1, 1]} : vector<8x64xf32> to vector<8x32xf32>
    %262 = vector.extract_strided_slice %253 {offsets = [0, 64], sizes = [8, 32], strides = [1, 1]} : vector<8x128xf32> to vector<8x32xf32>
    %263 = math.tanh %262 : vector<8x32xf32>
    %264 = vector.extract_strided_slice %253 {offsets = [0, 96], sizes = [8, 32], strides = [1, 1]} : vector<8x128xf32> to vector<8x32xf32>
    %265 = arith.negf %264 : vector<8x32xf32>
    %266 = math.exp %265 : vector<8x32xf32>
    %cst_73 = arith.constant 1.000000e+00 : f32
    %267 = vector.broadcast %cst_73 : f32 to vector<8x32xf32>
    %268 = arith.addf %267, %266 : vector<8x32xf32>
    %269 = arith.divf %267, %268 : vector<8x32xf32>
    %270 = arith.mulf %261, %200 : vector<8x32xf32>
    %271 = arith.mulf %260, %263 : vector<8x32xf32>
    %272 = arith.addf %270, %271 : vector<8x32xf32>
    %273 = math.tanh %272 : vector<8x32xf32>
    %274 = arith.mulf %269, %273 : vector<8x32xf32>
    %275 = vector.extract_strided_slice %274 {offsets = [4, 0], sizes = [4, 32], strides = [1, 1]} : vector<8x32xf32> to vector<4x32xf32>
    %c8 = arith.constant 8 : index
    %c0_74 = arith.constant 0 : index
    %276 = vector.load %arg15[%c8, %c0_74] : memref<32x32xf32, #tpu.memory_space<vmem>>, vector<4x32xf32>
    tpu.vector_store %arg15[%c8, %c0_74], %275 {strides = array<i32>} : memref<32x32xf32, #tpu.memory_space<vmem>>, vector<4x32xf32>,
    %c3_75 = arith.constant 3 : index
    %c0_76 = arith.constant 0 : index
    %c0_77 = arith.constant 0 : index
    %277 = vector.load %arg0[%c3_75, %c0_76, %c0_77] : memref<8x4x32xf32, #tpu.memory_space<vmem>>, vector<1x4x32xf32>
    %278 = vector.shape_cast %277 : vector<1x4x32xf32> to vector<4x32xf32>
    %279 = vector.extract_strided_slice %274 {offsets = [0, 0], sizes = [4, 32], strides = [1, 1]} : vector<8x32xf32> to vector<4x32xf32>
    %cst_78 = arith.constant dense<0.000000e+00> : vector<8x128xf32>
    %280 = tpu.matmul %249, %1, %cst_78 {dimension_numbers = #tpu.dot_dimension_numbers<[1], [0], [0], [1], [0, 0, 1, 1], [], []>} : vector<8x32xf32>, vector<32x128xf32>, vector<8x128xf32> -> vector<8x128xf32>
    %cst_79 = arith.constant dense<0.000000e+00> : vector<8x128xf32>
    %281 = tpu.matmul %274, %4, %cst_79 {dimension_numbers = #tpu.dot_dimension_numbers<[1], [0], [0], [1], [0, 0, 1, 1], [], []>} : vector<8x32xf32>, vector<32x128xf32>, vector<8x128xf32> -> vector<8x128xf32>
    %282 = arith.mulf %279, %278 : vector<4x32xf32>
    %283 = math.tanh %282 : vector<4x32xf32>
    %284 = math.exp %283 : vector<4x32xf32>
    %cst_80 = arith.constant dense<0.000000e+00> : vector<32xf32>
    %285 = vector.multi_reduction <add>, %284, %cst_80 [0] : vector<4x32xf32> to vector<32xf32>
    %286 = vector.shape_cast %285 : vector<32xf32> to vector<1x32xf32>
    %287 = tpu.reciprocal %286 : vector<1x32xf32> -> vector<1x32xf32>
    %288 = vector.broadcast %287 : vector<1x32xf32> to vector<4x32xf32>
    %289 = arith.mulf %284, %288 : vector<4x32xf32>
    %c3_81 = arith.constant 3 : index
    %c0_82 = arith.constant 0 : index
    %c0_83 = arith.constant 0 : index
    %290 = vector.load %arg13[%c3_81, %c0_82, %c0_83] : memref<8x4x32xf32, #tpu.memory_space<vmem>>, vector<1x4x32xf32>
    %291 = vector.shape_cast %290 : vector<1x4x32xf32> to vector<4x32xf32>
    %292 = vector.shape_cast %289 : vector<4x32xf32> to vector<1x4x32xf32>
    tpu.vector_store %arg13[%c3_81, %c0_82, %c0_83], %292 {strides = array<i32>} : memref<8x4x32xf32, #tpu.memory_space<vmem>>, vector<1x4x32xf32>,
    %293 = arith.mulf %278, %289 : vector<4x32xf32>
    %c4_84 = arith.constant 4 : index
    %c0_85 = arith.constant 0 : index
    %c0_86 = arith.constant 0 : index
    %294 = vector.load %arg0[%c4_84, %c0_85, %c0_86] : memref<8x4x32xf32, #tpu.memory_space<vmem>>, vector<1x4x32xf32>
    %295 = vector.shape_cast %294 : vector<1x4x32xf32> to vector<4x32xf32>
    %296 = tpu.concatenate %295, %293 in 0 : vector<4x32xf32>, vector<4x32xf32> -> vector<8x32xf32>
    %cst_87 = arith.constant dense<0.000000e+00> : vector<8x128xf32>
    %297 = tpu.matmul %296, %0, %cst_87 {dimension_numbers = #tpu.dot_dimension_numbers<[1], [0], [0], [1], [0, 0, 1, 1], [], []>} : vector<8x32xf32>, vector<32x128xf32>, vector<8x128xf32> -> vector<8x128xf32>
    %298 = arith.addf %297, %280 : vector<8x128xf32>
    %299 = vector.broadcast %2 : vector<1x128xf32> to vector<8x128xf32>
    %300 = arith.addf %298, %299 : vector<8x128xf32>
    %301 = vector.extract_strided_slice %300 {offsets = [0, 0], sizes = [8, 64], strides = [1, 1]} : vector<8x128xf32> to vector<8x64xf32>
    %302 = arith.negf %301 : vector<8x64xf32>
    %303 = math.exp %302 : vector<8x64xf32>
    %cst_88 = arith.constant 1.000000e+00 : f32
    %304 = vector.broadcast %cst_88 : f32 to vector<8x64xf32>
    %305 = arith.addf %304, %303 : vector<8x64xf32>
    %306 = arith.divf %304, %305 : vector<8x64xf32>
    %307 = vector.extract_strided_slice %306 {offsets = [0, 0], sizes = [8, 32], strides = [1, 1]} : vector<8x64xf32> to vector<8x32xf32>
    %308 = vector.extract_strided_slice %306 {offsets = [0, 32], sizes = [8, 32], strides = [1, 1]} : vector<8x64xf32> to vector<8x32xf32>
    %309 = vector.extract_strided_slice %300 {offsets = [0, 64], sizes = [8, 32], strides = [1, 1]} : vector<8x128xf32> to vector<8x32xf32>
    %310 = math.tanh %309 : vector<8x32xf32>
    %311 = vector.extract_strided_slice %300 {offsets = [0, 96], sizes = [8, 32], strides = [1, 1]} : vector<8x128xf32> to vector<8x32xf32>
    %312 = arith.negf %311 : vector<8x32xf32>
    %313 = math.exp %312 : vector<8x32xf32>
    %cst_89 = arith.constant 1.000000e+00 : f32
    %314 = vector.broadcast %cst_89 : f32 to vector<8x32xf32>
    %315 = arith.addf %314, %313 : vector<8x32xf32>
    %316 = arith.divf %314, %315 : vector<8x32xf32>
    %317 = arith.mulf %308, %247 : vector<8x32xf32>
    %318 = arith.mulf %307, %310 : vector<8x32xf32>
    %319 = arith.addf %317, %318 : vector<8x32xf32>
    %320 = math.tanh %319 : vector<8x32xf32>
    %321 = arith.mulf %316, %320 : vector<8x32xf32>
    %cst_90 = arith.constant dense<0.000000e+00> : vector<8x128xf32>
    %322 = tpu.matmul %321, %3, %cst_90 {dimension_numbers = #tpu.dot_dimension_numbers<[1], [0], [0], [1], [0, 0, 1, 1], [], []>} : vector<8x32xf32>, vector<32x128xf32>, vector<8x128xf32> -> vector<8x128xf32>
    %323 = arith.addf %322, %281 : vector<8x128xf32>
    %324 = vector.broadcast %5 : vector<1x128xf32> to vector<8x128xf32>
    %325 = arith.addf %323, %324 : vector<8x128xf32>
    %326 = vector.extract_strided_slice %325 {offsets = [0, 0], sizes = [8, 64], strides = [1, 1]} : vector<8x128xf32> to vector<8x64xf32>
    %327 = arith.negf %326 : vector<8x64xf32>
    %328 = math.exp %327 : vector<8x64xf32>
    %cst_91 = arith.constant 1.000000e+00 : f32
    %329 = vector.broadcast %cst_91 : f32 to vector<8x64xf32>
    %330 = arith.addf %329, %328 : vector<8x64xf32>
    %331 = arith.divf %329, %330 : vector<8x64xf32>
    %332 = vector.extract_strided_slice %331 {offsets = [0, 0], sizes = [8, 32], strides = [1, 1]} : vector<8x64xf32> to vector<8x32xf32>
    %333 = vector.extract_strided_slice %331 {offsets = [0, 32], sizes = [8, 32], strides = [1, 1]} : vector<8x64xf32> to vector<8x32xf32>
    %334 = vector.extract_strided_slice %325 {offsets = [0, 64], sizes = [8, 32], strides = [1, 1]} : vector<8x128xf32> to vector<8x32xf32>
    %335 = math.tanh %334 : vector<8x32xf32>
    %336 = vector.extract_strided_slice %325 {offsets = [0, 96], sizes = [8, 32], strides = [1, 1]} : vector<8x128xf32> to vector<8x32xf32>
    %337 = arith.negf %336 : vector<8x32xf32>
    %338 = math.exp %337 : vector<8x32xf32>
    %cst_92 = arith.constant 1.000000e+00 : f32
    %339 = vector.broadcast %cst_92 : f32 to vector<8x32xf32>
    %340 = arith.addf %339, %338 : vector<8x32xf32>
    %341 = arith.divf %339, %340 : vector<8x32xf32>
    %342 = arith.mulf %333, %272 : vector<8x32xf32>
    %343 = arith.mulf %332, %335 : vector<8x32xf32>
    %344 = arith.addf %342, %343 : vector<8x32xf32>
    %345 = math.tanh %344 : vector<8x32xf32>
    %346 = arith.mulf %341, %345 : vector<8x32xf32>
    %347 = vector.extract_strided_slice %346 {offsets = [4, 0], sizes = [4, 32], strides = [1, 1]} : vector<8x32xf32> to vector<4x32xf32>
    %c12 = arith.constant 12 : index
    %c0_93 = arith.constant 0 : index
    %348 = vector.load %arg15[%c12, %c0_93] : memref<32x32xf32, #tpu.memory_space<vmem>>, vector<4x32xf32>
    tpu.vector_store %arg15[%c12, %c0_93], %347 {strides = array<i32>} : memref<32x32xf32, #tpu.memory_space<vmem>>, vector<4x32xf32>,
    %c4_94 = arith.constant 4 : index
    %c0_95 = arith.constant 0 : index
    %c0_96 = arith.constant 0 : index
    %349 = vector.load %arg0[%c4_94, %c0_95, %c0_96] : memref<8x4x32xf32, #tpu.memory_space<vmem>>, vector<1x4x32xf32>
    %350 = vector.shape_cast %349 : vector<1x4x32xf32> to vector<4x32xf32>
    %351 = vector.extract_strided_slice %346 {offsets = [0, 0], sizes = [4, 32], strides = [1, 1]} : vector<8x32xf32> to vector<4x32xf32>
    %cst_97 = arith.constant dense<0.000000e+00> : vector<8x128xf32>
    %352 = tpu.matmul %321, %1, %cst_97 {dimension_numbers = #tpu.dot_dimension_numbers<[1], [0], [0], [1], [0, 0, 1, 1], [], []>} : vector<8x32xf32>, vector<32x128xf32>, vector<8x128xf32> -> vector<8x128xf32>
    %cst_98 = arith.constant dense<0.000000e+00> : vector<8x128xf32>
    %353 = tpu.matmul %346, %4, %cst_98 {dimension_numbers = #tpu.dot_dimension_numbers<[1], [0], [0], [1], [0, 0, 1, 1], [], []>} : vector<8x32xf32>, vector<32x128xf32>, vector<8x128xf32> -> vector<8x128xf32>
    %354 = arith.mulf %351, %350 : vector<4x32xf32>
    %355 = math.tanh %354 : vector<4x32xf32>
    %356 = math.exp %355 : vector<4x32xf32>
    %cst_99 = arith.constant dense<0.000000e+00> : vector<32xf32>
    %357 = vector.multi_reduction <add>, %356, %cst_99 [0] : vector<4x32xf32> to vector<32xf32>
    %358 = vector.shape_cast %357 : vector<32xf32> to vector<1x32xf32>
    %359 = tpu.reciprocal %358 : vector<1x32xf32> -> vector<1x32xf32>
    %360 = vector.broadcast %359 : vector<1x32xf32> to vector<4x32xf32>
    %361 = arith.mulf %356, %360 : vector<4x32xf32>
    %c4_100 = arith.constant 4 : index
    %c0_101 = arith.constant 0 : index
    %c0_102 = arith.constant 0 : index
    %362 = vector.load %arg13[%c4_100, %c0_101, %c0_102] : memref<8x4x32xf32, #tpu.memory_space<vmem>>, vector<1x4x32xf32>
    %363 = vector.shape_cast %362 : vector<1x4x32xf32> to vector<4x32xf32>
    %364 = vector.shape_cast %361 : vector<4x32xf32> to vector<1x4x32xf32>
    tpu.vector_store %arg13[%c4_100, %c0_101, %c0_102], %364 {strides = array<i32>} : memref<8x4x32xf32, #tpu.memory_space<vmem>>, vector<1x4x32xf32>,
    %365 = arith.mulf %350, %361 : vector<4x32xf32>
    %c5 = arith.constant 5 : index
    %c0_103 = arith.constant 0 : index
    %c0_104 = arith.constant 0 : index
    %366 = vector.load %arg0[%c5, %c0_103, %c0_104] : memref<8x4x32xf32, #tpu.memory_space<vmem>>, vector<1x4x32xf32>
    %367 = vector.shape_cast %366 : vector<1x4x32xf32> to vector<4x32xf32>
    %368 = tpu.concatenate %367, %365 in 0 : vector<4x32xf32>, vector<4x32xf32> -> vector<8x32xf32>
    %cst_105 = arith.constant dense<0.000000e+00> : vector<8x128xf32>
    %369 = tpu.matmul %368, %0, %cst_105 {dimension_numbers = #tpu.dot_dimension_numbers<[1], [0], [0], [1], [0, 0, 1, 1], [], []>} : vector<8x32xf32>, vector<32x128xf32>, vector<8x128xf32> -> vector<8x128xf32>
    %370 = arith.addf %369, %352 : vector<8x128xf32>
    %371 = vector.broadcast %2 : vector<1x128xf32> to vector<8x128xf32>
    %372 = arith.addf %370, %371 : vector<8x128xf32>
    %373 = vector.extract_strided_slice %372 {offsets = [0, 0], sizes = [8, 64], strides = [1, 1]} : vector<8x128xf32> to vector<8x64xf32>
    %374 = arith.negf %373 : vector<8x64xf32>
    %375 = math.exp %374 : vector<8x64xf32>
    %cst_106 = arith.constant 1.000000e+00 : f32
    %376 = vector.broadcast %cst_106 : f32 to vector<8x64xf32>
    %377 = arith.addf %376, %375 : vector<8x64xf32>
    %378 = arith.divf %376, %377 : vector<8x64xf32>
    %379 = vector.extract_strided_slice %378 {offsets = [0, 0], sizes = [8, 32], strides = [1, 1]} : vector<8x64xf32> to vector<8x32xf32>
    %380 = vector.extract_strided_slice %378 {offsets = [0, 32], sizes = [8, 32], strides = [1, 1]} : vector<8x64xf32> to vector<8x32xf32>
    %381 = vector.extract_strided_slice %372 {offsets = [0, 64], sizes = [8, 32], strides = [1, 1]} : vector<8x128xf32> to vector<8x32xf32>
    %382 = math.tanh %381 : vector<8x32xf32>
    %383 = vector.extract_strided_slice %372 {offsets = [0, 96], sizes = [8, 32], strides = [1, 1]} : vector<8x128xf32> to vector<8x32xf32>
    %384 = arith.negf %383 : vector<8x32xf32>
    %385 = math.exp %384 : vector<8x32xf32>
    %cst_107 = arith.constant 1.000000e+00 : f32
    %386 = vector.broadcast %cst_107 : f32 to vector<8x32xf32>
    %387 = arith.addf %386, %385 : vector<8x32xf32>
    %388 = arith.divf %386, %387 : vector<8x32xf32>
    %389 = arith.mulf %380, %319 : vector<8x32xf32>
    %390 = arith.mulf %379, %382 : vector<8x32xf32>
    %391 = arith.addf %389, %390 : vector<8x32xf32>
    %392 = math.tanh %391 : vector<8x32xf32>
    %393 = arith.mulf %388, %392 : vector<8x32xf32>
    %cst_108 = arith.constant dense<0.000000e+00> : vector<8x128xf32>
    %394 = tpu.matmul %393, %3, %cst_108 {dimension_numbers = #tpu.dot_dimension_numbers<[1], [0], [0], [1], [0, 0, 1, 1], [], []>} : vector<8x32xf32>, vector<32x128xf32>, vector<8x128xf32> -> vector<8x128xf32>
    %395 = arith.addf %394, %353 : vector<8x128xf32>
    %396 = vector.broadcast %5 : vector<1x128xf32> to vector<8x128xf32>
    %397 = arith.addf %395, %396 : vector<8x128xf32>
    %398 = vector.extract_strided_slice %397 {offsets = [0, 0], sizes = [8, 64], strides = [1, 1]} : vector<8x128xf32> to vector<8x64xf32>
    %399 = arith.negf %398 : vector<8x64xf32>
    %400 = math.exp %399 : vector<8x64xf32>
    %cst_109 = arith.constant 1.000000e+00 : f32
    %401 = vector.broadcast %cst_109 : f32 to vector<8x64xf32>
    %402 = arith.addf %401, %400 : vector<8x64xf32>
    %403 = arith.divf %401, %402 : vector<8x64xf32>
    %404 = vector.extract_strided_slice %403 {offsets = [0, 0], sizes = [8, 32], strides = [1, 1]} : vector<8x64xf32> to vector<8x32xf32>
    %405 = vector.extract_strided_slice %403 {offsets = [0, 32], sizes = [8, 32], strides = [1, 1]} : vector<8x64xf32> to vector<8x32xf32>
    %406 = vector.extract_strided_slice %397 {offsets = [0, 64], sizes = [8, 32], strides = [1, 1]} : vector<8x128xf32> to vector<8x32xf32>
    %407 = math.tanh %406 : vector<8x32xf32>
    %408 = vector.extract_strided_slice %397 {offsets = [0, 96], sizes = [8, 32], strides = [1, 1]} : vector<8x128xf32> to vector<8x32xf32>
    %409 = arith.negf %408 : vector<8x32xf32>
    %410 = math.exp %409 : vector<8x32xf32>
    %cst_110 = arith.constant 1.000000e+00 : f32
    %411 = vector.broadcast %cst_110 : f32 to vector<8x32xf32>
    %412 = arith.addf %411, %410 : vector<8x32xf32>
    %413 = arith.divf %411, %412 : vector<8x32xf32>
    %414 = arith.mulf %405, %344 : vector<8x32xf32>
    %415 = arith.mulf %404, %407 : vector<8x32xf32>
    %416 = arith.addf %414, %415 : vector<8x32xf32>
    %417 = math.tanh %416 : vector<8x32xf32>
    %418 = arith.mulf %413, %417 : vector<8x32xf32>
    %419 = vector.extract_strided_slice %418 {offsets = [4, 0], sizes = [4, 32], strides = [1, 1]} : vector<8x32xf32> to vector<4x32xf32>
    %c16 = arith.constant 16 : index
    %c0_111 = arith.constant 0 : index
    %420 = vector.load %arg15[%c16, %c0_111] : memref<32x32xf32, #tpu.memory_space<vmem>>, vector<4x32xf32>
    tpu.vector_store %arg15[%c16, %c0_111], %419 {strides = array<i32>} : memref<32x32xf32, #tpu.memory_space<vmem>>, vector<4x32xf32>,
    %c5_112 = arith.constant 5 : index
    %c0_113 = arith.constant 0 : index
    %c0_114 = arith.constant 0 : index
    %421 = vector.load %arg0[%c5_112, %c0_113, %c0_114] : memref<8x4x32xf32, #tpu.memory_space<vmem>>, vector<1x4x32xf32>
    %422 = vector.shape_cast %421 : vector<1x4x32xf32> to vector<4x32xf32>
    %423 = vector.extract_strided_slice %418 {offsets = [0, 0], sizes = [4, 32], strides = [1, 1]} : vector<8x32xf32> to vector<4x32xf32>
    %cst_115 = arith.constant dense<0.000000e+00> : vector<8x128xf32>
    %424 = tpu.matmul %393, %1, %cst_115 {dimension_numbers = #tpu.dot_dimension_numbers<[1], [0], [0], [1], [0, 0, 1, 1], [], []>} : vector<8x32xf32>, vector<32x128xf32>, vector<8x128xf32> -> vector<8x128xf32>
    %cst_116 = arith.constant dense<0.000000e+00> : vector<8x128xf32>
    %425 = tpu.matmul %418, %4, %cst_116 {dimension_numbers = #tpu.dot_dimension_numbers<[1], [0], [0], [1], [0, 0, 1, 1], [], []>} : vector<8x32xf32>, vector<32x128xf32>, vector<8x128xf32> -> vector<8x128xf32>
    %426 = arith.mulf %423, %422 : vector<4x32xf32>
    %427 = math.tanh %426 : vector<4x32xf32>
    %428 = math.exp %427 : vector<4x32xf32>
    %cst_117 = arith.constant dense<0.000000e+00> : vector<32xf32>
    %429 = vector.multi_reduction <add>, %428, %cst_117 [0] : vector<4x32xf32> to vector<32xf32>
    %430 = vector.shape_cast %429 : vector<32xf32> to vector<1x32xf32>
    %431 = tpu.reciprocal %430 : vector<1x32xf32> -> vector<1x32xf32>
    %432 = vector.broadcast %431 : vector<1x32xf32> to vector<4x32xf32>
    %433 = arith.mulf %428, %432 : vector<4x32xf32>
    %c5_118 = arith.constant 5 : index
    %c0_119 = arith.constant 0 : index
    %c0_120 = arith.constant 0 : index
    %434 = vector.load %arg13[%c5_118, %c0_119, %c0_120] : memref<8x4x32xf32, #tpu.memory_space<vmem>>, vector<1x4x32xf32>
    %435 = vector.shape_cast %434 : vector<1x4x32xf32> to vector<4x32xf32>
    %436 = vector.shape_cast %433 : vector<4x32xf32> to vector<1x4x32xf32>
    tpu.vector_store %arg13[%c5_118, %c0_119, %c0_120], %436 {strides = array<i32>} : memref<8x4x32xf32, #tpu.memory_space<vmem>>, vector<1x4x32xf32>,
    %437 = arith.mulf %422, %433 : vector<4x32xf32>
    %c6 = arith.constant 6 : index
    %c0_121 = arith.constant 0 : index
    %c0_122 = arith.constant 0 : index
    %438 = vector.load %arg0[%c6, %c0_121, %c0_122] : memref<8x4x32xf32, #tpu.memory_space<vmem>>, vector<1x4x32xf32>
    %439 = vector.shape_cast %438 : vector<1x4x32xf32> to vector<4x32xf32>
    %440 = tpu.concatenate %439, %437 in 0 : vector<4x32xf32>, vector<4x32xf32> -> vector<8x32xf32>
    %cst_123 = arith.constant dense<0.000000e+00> : vector<8x128xf32>
    %441 = tpu.matmul %440, %0, %cst_123 {dimension_numbers = #tpu.dot_dimension_numbers<[1], [0], [0], [1], [0, 0, 1, 1], [], []>} : vector<8x32xf32>, vector<32x128xf32>, vector<8x128xf32> -> vector<8x128xf32>
    %442 = arith.addf %441, %424 : vector<8x128xf32>
    %443 = vector.broadcast %2 : vector<1x128xf32> to vector<8x128xf32>
    %444 = arith.addf %442, %443 : vector<8x128xf32>
    %445 = vector.extract_strided_slice %444 {offsets = [0, 0], sizes = [8, 64], strides = [1, 1]} : vector<8x128xf32> to vector<8x64xf32>
    %446 = arith.negf %445 : vector<8x64xf32>
    %447 = math.exp %446 : vector<8x64xf32>
    %cst_124 = arith.constant 1.000000e+00 : f32
    %448 = vector.broadcast %cst_124 : f32 to vector<8x64xf32>
    %449 = arith.addf %448, %447 : vector<8x64xf32>
    %450 = arith.divf %448, %449 : vector<8x64xf32>
    %451 = vector.extract_strided_slice %450 {offsets = [0, 0], sizes = [8, 32], strides = [1, 1]} : vector<8x64xf32> to vector<8x32xf32>
    %452 = vector.extract_strided_slice %450 {offsets = [0, 32], sizes = [8, 32], strides = [1, 1]} : vector<8x64xf32> to vector<8x32xf32>
    %453 = vector.extract_strided_slice %444 {offsets = [0, 64], sizes = [8, 32], strides = [1, 1]} : vector<8x128xf32> to vector<8x32xf32>
    %454 = math.tanh %453 : vector<8x32xf32>
    %455 = vector.extract_strided_slice %444 {offsets = [0, 96], sizes = [8, 32], strides = [1, 1]} : vector<8x128xf32> to vector<8x32xf32>
    %456 = arith.negf %455 : vector<8x32xf32>
    %457 = math.exp %456 : vector<8x32xf32>
    %cst_125 = arith.constant 1.000000e+00 : f32
    %458 = vector.broadcast %cst_125 : f32 to vector<8x32xf32>
    %459 = arith.addf %458, %457 : vector<8x32xf32>
    %460 = arith.divf %458, %459 : vector<8x32xf32>
    %461 = arith.mulf %452, %391 : vector<8x32xf32>
    %462 = arith.mulf %451, %454 : vector<8x32xf32>
    %463 = arith.addf %461, %462 : vector<8x32xf32>
    %464 = math.tanh %463 : vector<8x32xf32>
    %465 = arith.mulf %460, %464 : vector<8x32xf32>
    %cst_126 = arith.constant dense<0.000000e+00> : vector<8x128xf32>
    %466 = tpu.matmul %465, %3, %cst_126 {dimension_numbers = #tpu.dot_dimension_numbers<[1], [0], [0], [1], [0, 0, 1, 1], [], []>} : vector<8x32xf32>, vector<32x128xf32>, vector<8x128xf32> -> vector<8x128xf32>
    %467 = arith.addf %466, %425 : vector<8x128xf32>
    %468 = vector.broadcast %5 : vector<1x128xf32> to vector<8x128xf32>
    %469 = arith.addf %467, %468 : vector<8x128xf32>
    %470 = vector.extract_strided_slice %469 {offsets = [0, 0], sizes = [8, 64], strides = [1, 1]} : vector<8x128xf32> to vector<8x64xf32>
    %471 = arith.negf %470 : vector<8x64xf32>
    %472 = math.exp %471 : vector<8x64xf32>
    %cst_127 = arith.constant 1.000000e+00 : f32
    %473 = vector.broadcast %cst_127 : f32 to vector<8x64xf32>
    %474 = arith.addf %473, %472 : vector<8x64xf32>
    %475 = arith.divf %473, %474 : vector<8x64xf32>
    %476 = vector.extract_strided_slice %475 {offsets = [0, 0], sizes = [8, 32], strides = [1, 1]} : vector<8x64xf32> to vector<8x32xf32>
    %477 = vector.extract_strided_slice %475 {offsets = [0, 32], sizes = [8, 32], strides = [1, 1]} : vector<8x64xf32> to vector<8x32xf32>
    %478 = vector.extract_strided_slice %469 {offsets = [0, 64], sizes = [8, 32], strides = [1, 1]} : vector<8x128xf32> to vector<8x32xf32>
    %479 = math.tanh %478 : vector<8x32xf32>
    %480 = vector.extract_strided_slice %469 {offsets = [0, 96], sizes = [8, 32], strides = [1, 1]} : vector<8x128xf32> to vector<8x32xf32>
    %481 = arith.negf %480 : vector<8x32xf32>
    %482 = math.exp %481 : vector<8x32xf32>
    %cst_128 = arith.constant 1.000000e+00 : f32
    %483 = vector.broadcast %cst_128 : f32 to vector<8x32xf32>
    %484 = arith.addf %483, %482 : vector<8x32xf32>
    %485 = arith.divf %483, %484 : vector<8x32xf32>
    %486 = arith.mulf %477, %416 : vector<8x32xf32>
    %487 = arith.mulf %476, %479 : vector<8x32xf32>
    %488 = arith.addf %486, %487 : vector<8x32xf32>
    %489 = math.tanh %488 : vector<8x32xf32>
    %490 = arith.mulf %485, %489 : vector<8x32xf32>
    %491 = vector.extract_strided_slice %490 {offsets = [4, 0], sizes = [4, 32], strides = [1, 1]} : vector<8x32xf32> to vector<4x32xf32>
    %c20 = arith.constant 20 : index
    %c0_129 = arith.constant 0 : index
    %492 = vector.load %arg15[%c20, %c0_129] : memref<32x32xf32, #tpu.memory_space<vmem>>, vector<4x32xf32>
    tpu.vector_store %arg15[%c20, %c0_129], %491 {strides = array<i32>} : memref<32x32xf32, #tpu.memory_space<vmem>>, vector<4x32xf32>,
    %c6_130 = arith.constant 6 : index
    %c0_131 = arith.constant 0 : index
    %c0_132 = arith.constant 0 : index
    %493 = vector.load %arg0[%c6_130, %c0_131, %c0_132] : memref<8x4x32xf32, #tpu.memory_space<vmem>>, vector<1x4x32xf32>
    %494 = vector.shape_cast %493 : vector<1x4x32xf32> to vector<4x32xf32>
    %495 = vector.extract_strided_slice %490 {offsets = [0, 0], sizes = [4, 32], strides = [1, 1]} : vector<8x32xf32> to vector<4x32xf32>
    %cst_133 = arith.constant dense<0.000000e+00> : vector<8x128xf32>
    %496 = tpu.matmul %465, %1, %cst_133 {dimension_numbers = #tpu.dot_dimension_numbers<[1], [0], [0], [1], [0, 0, 1, 1], [], []>} : vector<8x32xf32>, vector<32x128xf32>, vector<8x128xf32> -> vector<8x128xf32>
    %cst_134 = arith.constant dense<0.000000e+00> : vector<8x128xf32>
    %497 = tpu.matmul %490, %4, %cst_134 {dimension_numbers = #tpu.dot_dimension_numbers<[1], [0], [0], [1], [0, 0, 1, 1], [], []>} : vector<8x32xf32>, vector<32x128xf32>, vector<8x128xf32> -> vector<8x128xf32>
    %498 = arith.mulf %495, %494 : vector<4x32xf32>
    %499 = math.tanh %498 : vector<4x32xf32>
    %500 = math.exp %499 : vector<4x32xf32>
    %cst_135 = arith.constant dense<0.000000e+00> : vector<32xf32>
    %501 = vector.multi_reduction <add>, %500, %cst_135 [0] : vector<4x32xf32> to vector<32xf32>
    %502 = vector.shape_cast %501 : vector<32xf32> to vector<1x32xf32>
    %503 = tpu.reciprocal %502 : vector<1x32xf32> -> vector<1x32xf32>
    %504 = vector.broadcast %503 : vector<1x32xf32> to vector<4x32xf32>
    %505 = arith.mulf %500, %504 : vector<4x32xf32>
    %c6_136 = arith.constant 6 : index
    %c0_137 = arith.constant 0 : index
    %c0_138 = arith.constant 0 : index
    %506 = vector.load %arg13[%c6_136, %c0_137, %c0_138] : memref<8x4x32xf32, #tpu.memory_space<vmem>>, vector<1x4x32xf32>
    %507 = vector.shape_cast %506 : vector<1x4x32xf32> to vector<4x32xf32>
    %508 = vector.shape_cast %505 : vector<4x32xf32> to vector<1x4x32xf32>
    tpu.vector_store %arg13[%c6_136, %c0_137, %c0_138], %508 {strides = array<i32>} : memref<8x4x32xf32, #tpu.memory_space<vmem>>, vector<1x4x32xf32>,
    %509 = arith.mulf %494, %505 : vector<4x32xf32>
    %c7 = arith.constant 7 : index
    %c0_139 = arith.constant 0 : index
    %c0_140 = arith.constant 0 : index
    %510 = vector.load %arg0[%c7, %c0_139, %c0_140] : memref<8x4x32xf32, #tpu.memory_space<vmem>>, vector<1x4x32xf32>
    %511 = vector.shape_cast %510 : vector<1x4x32xf32> to vector<4x32xf32>
    %512 = tpu.concatenate %511, %509 in 0 : vector<4x32xf32>, vector<4x32xf32> -> vector<8x32xf32>
    %cst_141 = arith.constant dense<0.000000e+00> : vector<8x128xf32>
    %513 = tpu.matmul %512, %0, %cst_141 {dimension_numbers = #tpu.dot_dimension_numbers<[1], [0], [0], [1], [0, 0, 1, 1], [], []>} : vector<8x32xf32>, vector<32x128xf32>, vector<8x128xf32> -> vector<8x128xf32>
    %514 = arith.addf %513, %496 : vector<8x128xf32>
    %515 = vector.broadcast %2 : vector<1x128xf32> to vector<8x128xf32>
    %516 = arith.addf %514, %515 : vector<8x128xf32>
    %517 = vector.extract_strided_slice %516 {offsets = [0, 0], sizes = [8, 64], strides = [1, 1]} : vector<8x128xf32> to vector<8x64xf32>
    %518 = arith.negf %517 : vector<8x64xf32>
    %519 = math.exp %518 : vector<8x64xf32>
    %cst_142 = arith.constant 1.000000e+00 : f32
    %520 = vector.broadcast %cst_142 : f32 to vector<8x64xf32>
    %521 = arith.addf %520, %519 : vector<8x64xf32>
    %522 = arith.divf %520, %521 : vector<8x64xf32>
    %523 = vector.extract_strided_slice %522 {offsets = [0, 0], sizes = [8, 32], strides = [1, 1]} : vector<8x64xf32> to vector<8x32xf32>
    %524 = vector.extract_strided_slice %522 {offsets = [0, 32], sizes = [8, 32], strides = [1, 1]} : vector<8x64xf32> to vector<8x32xf32>
    %525 = vector.extract_strided_slice %516 {offsets = [0, 64], sizes = [8, 32], strides = [1, 1]} : vector<8x128xf32> to vector<8x32xf32>
    %526 = math.tanh %525 : vector<8x32xf32>
    %527 = vector.extract_strided_slice %516 {offsets = [0, 96], sizes = [8, 32], strides = [1, 1]} : vector<8x128xf32> to vector<8x32xf32>
    %528 = arith.negf %527 : vector<8x32xf32>
    %529 = math.exp %528 : vector<8x32xf32>
    %cst_143 = arith.constant 1.000000e+00 : f32
    %530 = vector.broadcast %cst_143 : f32 to vector<8x32xf32>
    %531 = arith.addf %530, %529 : vector<8x32xf32>
    %532 = arith.divf %530, %531 : vector<8x32xf32>
    %533 = arith.mulf %524, %463 : vector<8x32xf32>
    %534 = arith.mulf %523, %526 : vector<8x32xf32>
    %535 = arith.addf %533, %534 : vector<8x32xf32>
    %536 = math.tanh %535 : vector<8x32xf32>
    %537 = arith.mulf %532, %536 : vector<8x32xf32>
    %cst_144 = arith.constant dense<0.000000e+00> : vector<8x128xf32>
    %538 = tpu.matmul %537, %3, %cst_144 {dimension_numbers = #tpu.dot_dimension_numbers<[1], [0], [0], [1], [0, 0, 1, 1], [], []>} : vector<8x32xf32>, vector<32x128xf32>, vector<8x128xf32> -> vector<8x128xf32>
    %539 = arith.addf %538, %497 : vector<8x128xf32>
    %540 = vector.broadcast %5 : vector<1x128xf32> to vector<8x128xf32>
    %541 = arith.addf %539, %540 : vector<8x128xf32>
    %542 = vector.extract_strided_slice %541 {offsets = [0, 0], sizes = [8, 64], strides = [1, 1]} : vector<8x128xf32> to vector<8x64xf32>
    %543 = arith.negf %542 : vector<8x64xf32>
    %544 = math.exp %543 : vector<8x64xf32>
    %cst_145 = arith.constant 1.000000e+00 : f32
    %545 = vector.broadcast %cst_145 : f32 to vector<8x64xf32>
    %546 = arith.addf %545, %544 : vector<8x64xf32>
    %547 = arith.divf %545, %546 : vector<8x64xf32>
    %548 = vector.extract_strided_slice %547 {offsets = [0, 0], sizes = [8, 32], strides = [1, 1]} : vector<8x64xf32> to vector<8x32xf32>
    %549 = vector.extract_strided_slice %547 {offsets = [0, 32], sizes = [8, 32], strides = [1, 1]} : vector<8x64xf32> to vector<8x32xf32>
    %550 = vector.extract_strided_slice %541 {offsets = [0, 64], sizes = [8, 32], strides = [1, 1]} : vector<8x128xf32> to vector<8x32xf32>
    %551 = math.tanh %550 : vector<8x32xf32>
    %552 = vector.extract_strided_slice %541 {offsets = [0, 96], sizes = [8, 32], strides = [1, 1]} : vector<8x128xf32> to vector<8x32xf32>
    %553 = arith.negf %552 : vector<8x32xf32>
    %554 = math.exp %553 : vector<8x32xf32>
    %cst_146 = arith.constant 1.000000e+00 : f32
    %555 = vector.broadcast %cst_146 : f32 to vector<8x32xf32>
    %556 = arith.addf %555, %554 : vector<8x32xf32>
    %557 = arith.divf %555, %556 : vector<8x32xf32>
    %558 = arith.mulf %549, %488 : vector<8x32xf32>
    %559 = arith.mulf %548, %551 : vector<8x32xf32>
    %560 = arith.addf %558, %559 : vector<8x32xf32>
    %561 = math.tanh %560 : vector<8x32xf32>
    %562 = arith.mulf %557, %561 : vector<8x32xf32>
    %563 = vector.extract_strided_slice %562 {offsets = [4, 0], sizes = [4, 32], strides = [1, 1]} : vector<8x32xf32> to vector<4x32xf32>
    %c24 = arith.constant 24 : index
    %c0_147 = arith.constant 0 : index
    %564 = vector.load %arg15[%c24, %c0_147] : memref<32x32xf32, #tpu.memory_space<vmem>>, vector<4x32xf32>
    tpu.vector_store %arg15[%c24, %c0_147], %563 {strides = array<i32>} : memref<32x32xf32, #tpu.memory_space<vmem>>, vector<4x32xf32>,
    %c7_148 = arith.constant 7 : index
    %c0_149 = arith.constant 0 : index
    %c0_150 = arith.constant 0 : index
    %565 = vector.load %arg0[%c7_148, %c0_149, %c0_150] : memref<8x4x32xf32, #tpu.memory_space<vmem>>, vector<1x4x32xf32>
    %566 = vector.shape_cast %565 : vector<1x4x32xf32> to vector<4x32xf32>
    %567 = vector.extract_strided_slice %562 {offsets = [0, 0], sizes = [4, 32], strides = [1, 1]} : vector<8x32xf32> to vector<4x32xf32>
    %cst_151 = arith.constant dense<0.000000e+00> : vector<8x128xf32>
    %568 = tpu.matmul %537, %1, %cst_151 {dimension_numbers = #tpu.dot_dimension_numbers<[1], [0], [0], [1], [0, 0, 1, 1], [], []>} : vector<8x32xf32>, vector<32x128xf32>, vector<8x128xf32> -> vector<8x128xf32>
    %cst_152 = arith.constant dense<0.000000e+00> : vector<8x128xf32>
    %569 = tpu.matmul %562, %4, %cst_152 {dimension_numbers = #tpu.dot_dimension_numbers<[1], [0], [0], [1], [0, 0, 1, 1], [], []>} : vector<8x32xf32>, vector<32x128xf32>, vector<8x128xf32> -> vector<8x128xf32>
    %570 = arith.mulf %567, %566 : vector<4x32xf32>
    %571 = math.tanh %570 : vector<4x32xf32>
    %572 = math.exp %571 : vector<4x32xf32>
    %cst_153 = arith.constant dense<0.000000e+00> : vector<32xf32>
    %573 = vector.multi_reduction <add>, %572, %cst_153 [0] : vector<4x32xf32> to vector<32xf32>
    %574 = vector.shape_cast %573 : vector<32xf32> to vector<1x32xf32>
    %575 = tpu.reciprocal %574 : vector<1x32xf32> -> vector<1x32xf32>
    %576 = vector.broadcast %575 : vector<1x32xf32> to vector<4x32xf32>
    %577 = arith.mulf %572, %576 : vector<4x32xf32>
    %c7_154 = arith.constant 7 : index
    %c0_155 = arith.constant 0 : index
    %c0_156 = arith.constant 0 : index
    %578 = vector.load %arg13[%c7_154, %c0_155, %c0_156] : memref<8x4x32xf32, #tpu.memory_space<vmem>>, vector<1x4x32xf32>
    %579 = vector.shape_cast %578 : vector<1x4x32xf32> to vector<4x32xf32>
    %580 = vector.shape_cast %577 : vector<4x32xf32> to vector<1x4x32xf32>
    tpu.vector_store %arg13[%c7_154, %c0_155, %c0_156], %580 {strides = array<i32>} : memref<8x4x32xf32, #tpu.memory_space<vmem>>, vector<1x4x32xf32>,
    %581 = arith.mulf %566, %577 : vector<4x32xf32>
    %582 = tpu.concatenate %566, %581 in 0 : vector<4x32xf32>, vector<4x32xf32> -> vector<8x32xf32>
    %cst_157 = arith.constant dense<0.000000e+00> : vector<8x128xf32>
    %583 = tpu.matmul %582, %0, %cst_157 {dimension_numbers = #tpu.dot_dimension_numbers<[1], [0], [0], [1], [0, 0, 1, 1], [], []>} : vector<8x32xf32>, vector<32x128xf32>, vector<8x128xf32> -> vector<8x128xf32>
    %584 = arith.addf %583, %568 : vector<8x128xf32>
    %585 = vector.broadcast %2 : vector<1x128xf32> to vector<8x128xf32>
    %586 = arith.addf %584, %585 : vector<8x128xf32>
    %587 = vector.extract_strided_slice %586 {offsets = [0, 0], sizes = [8, 64], strides = [1, 1]} : vector<8x128xf32> to vector<8x64xf32>
    %588 = arith.negf %587 : vector<8x64xf32>
    %589 = math.exp %588 : vector<8x64xf32>
    %cst_158 = arith.constant 1.000000e+00 : f32
    %590 = vector.broadcast %cst_158 : f32 to vector<8x64xf32>
    %591 = arith.addf %590, %589 : vector<8x64xf32>
    %592 = arith.divf %590, %591 : vector<8x64xf32>
    %593 = vector.extract_strided_slice %592 {offsets = [0, 0], sizes = [8, 32], strides = [1, 1]} : vector<8x64xf32> to vector<8x32xf32>
    %594 = vector.extract_strided_slice %592 {offsets = [0, 32], sizes = [8, 32], strides = [1, 1]} : vector<8x64xf32> to vector<8x32xf32>
    %595 = vector.extract_strided_slice %586 {offsets = [0, 64], sizes = [8, 32], strides = [1, 1]} : vector<8x128xf32> to vector<8x32xf32>
    %596 = math.tanh %595 : vector<8x32xf32>
    %597 = vector.extract_strided_slice %586 {offsets = [0, 96], sizes = [8, 32], strides = [1, 1]} : vector<8x128xf32> to vector<8x32xf32>
    %598 = arith.negf %597 : vector<8x32xf32>
    %599 = math.exp %598 : vector<8x32xf32>
    %cst_159 = arith.constant 1.000000e+00 : f32
    %600 = vector.broadcast %cst_159 : f32 to vector<8x32xf32>
    %601 = arith.addf %600, %599 : vector<8x32xf32>
    %602 = arith.divf %600, %601 : vector<8x32xf32>
    %603 = arith.mulf %594, %535 : vector<8x32xf32>
    %604 = arith.mulf %593, %596 : vector<8x32xf32>
    %605 = arith.addf %603, %604 : vector<8x32xf32>
    %606 = math.tanh %605 : vector<8x32xf32>
    %607 = arith.mulf %602, %606 : vector<8x32xf32>
    %cst_160 = arith.constant dense<0.000000e+00> : vector<8x128xf32>
    %608 = tpu.matmul %607, %3, %cst_160 {dimension_numbers = #tpu.dot_dimension_numbers<[1], [0], [0], [1], [0, 0, 1, 1], [], []>} : vector<8x32xf32>, vector<32x128xf32>, vector<8x128xf32> -> vector<8x128xf32>
    %609 = arith.addf %608, %569 : vector<8x128xf32>
    %610 = vector.broadcast %5 : vector<1x128xf32> to vector<8x128xf32>
    %611 = arith.addf %609, %610 : vector<8x128xf32>
    %612 = vector.extract_strided_slice %611 {offsets = [0, 0], sizes = [8, 64], strides = [1, 1]} : vector<8x128xf32> to vector<8x64xf32>
    %613 = arith.negf %612 : vector<8x64xf32>
    %614 = math.exp %613 : vector<8x64xf32>
    %cst_161 = arith.constant 1.000000e+00 : f32
    %615 = vector.broadcast %cst_161 : f32 to vector<8x64xf32>
    %616 = arith.addf %615, %614 : vector<8x64xf32>
    %617 = arith.divf %615, %616 : vector<8x64xf32>
    %618 = vector.extract_strided_slice %617 {offsets = [0, 0], sizes = [8, 32], strides = [1, 1]} : vector<8x64xf32> to vector<8x32xf32>
    %619 = vector.extract_strided_slice %617 {offsets = [0, 32], sizes = [8, 32], strides = [1, 1]} : vector<8x64xf32> to vector<8x32xf32>
    %620 = vector.extract_strided_slice %611 {offsets = [0, 64], sizes = [8, 32], strides = [1, 1]} : vector<8x128xf32> to vector<8x32xf32>
    %621 = math.tanh %620 : vector<8x32xf32>
    %622 = vector.extract_strided_slice %611 {offsets = [0, 96], sizes = [8, 32], strides = [1, 1]} : vector<8x128xf32> to vector<8x32xf32>
    %623 = arith.negf %622 : vector<8x32xf32>
    %624 = math.exp %623 : vector<8x32xf32>
    %cst_162 = arith.constant 1.000000e+00 : f32
    %625 = vector.broadcast %cst_162 : f32 to vector<8x32xf32>
    %626 = arith.addf %625, %624 : vector<8x32xf32>
    %627 = arith.divf %625, %626 : vector<8x32xf32>
    %628 = arith.mulf %619, %560 : vector<8x32xf32>
    %629 = arith.mulf %618, %621 : vector<8x32xf32>
    %630 = arith.addf %628, %629 : vector<8x32xf32>
    %631 = math.tanh %630 : vector<8x32xf32>
    %632 = arith.mulf %627, %631 : vector<8x32xf32>
    %633 = vector.extract_strided_slice %632 {offsets = [4, 0], sizes = [4, 32], strides = [1, 1]} : vector<8x32xf32> to vector<4x32xf32>
    %c28 = arith.constant 28 : index
    %c0_163 = arith.constant 0 : index
    %634 = vector.load %arg15[%c28, %c0_163] : memref<32x32xf32, #tpu.memory_space<vmem>>, vector<4x32xf32>
    tpu.vector_store %arg15[%c28, %c0_163], %633 {strides = array<i32>} : memref<32x32xf32, #tpu.memory_space<vmem>>, vector<4x32xf32>,
    %c0_164 = arith.constant 0 : index
    %c0_165 = arith.constant 0 : index
    %635 = vector.load %arg15[%c0_164, %c0_165] : memref<32x32xf32, #tpu.memory_space<vmem>>, vector<32x32xf32>
    %cst_166 = arith.constant 0.000000e+00 : f32
    %636 = vector.broadcast %cst_166 : f32 to vector<32x32xf32>
    %637 = arith.cmpf ogt, %635, %636 : vector<32x32xf32>
    %638 = math.exp %635 : vector<32x32xf32>
    %cst_167 = arith.constant 1.000000e+00 : f32
    %639 = vector.broadcast %cst_167 : f32 to vector<32x32xf32>
    %640 = arith.subf %638, %639 : vector<32x32xf32>
    %cst_168 = arith.constant 1.67326319 : f32
    %641 = vector.broadcast %cst_168 : f32 to vector<32x32xf32>
    %642 = arith.mulf %641, %640 : vector<32x32xf32>
    %643 = arith.select %637, %635, %642 : vector<32x32xi1>, vector<32x32xf32>
    %cst_169 = arith.constant 1.05070102 : f32
    %644 = vector.broadcast %cst_169 : f32 to vector<32x32xf32>
    %645 = arith.mulf %644, %643 : vector<32x32xf32>
    %c0_170 = arith.constant 0 : index
    %c0_171 = arith.constant 0 : index
    %646 = vector.load %arg7[%c0_170, %c0_171] : memref<32x64xf32, #tpu.memory_space<vmem>>, vector<32x64xf32>
    %cst_172 = arith.constant dense<0.000000e+00> : vector<32x64xf32>
    %647 = tpu.matmul %645, %646, %cst_172 {dimension_numbers = #tpu.dot_dimension_numbers<[1], [0], [0], [1], [0, 0, 1, 1], [], []>} : vector<32x32xf32>, vector<32x64xf32>, vector<32x64xf32> -> vector<32x64xf32>
    %c0_173 = arith.constant 0 : index
    %c0_174 = arith.constant 0 : index
    %648 = vector.load %arg8[%c0_173, %c0_174] : memref<1x64xf32, #tpu.memory_space<vmem>>, vector<1x64xf32>
    %649 = vector.broadcast %648 : vector<1x64xf32> to vector<32x64xf32>
    %650 = arith.addf %647, %649 : vector<32x64xf32>
    %c0_175 = arith.constant 0 : index
    %c0_176 = arith.constant 0 : index
    %651 = vector.load %arg9[%c0_175, %c0_176] : memref<32x1xf32, #tpu.memory_space<vmem>>, vector<32x1xf32>
    %652 = vector.broadcast %651 : vector<32x1xf32> to vector<32x64xf32>
    %653 = arith.mulf %650, %652 : vector<32x64xf32>
    %c0_177 = arith.constant 0 : index
    %c0_178 = arith.constant 0 : index
    %654 = vector.load %arg10[%c0_177, %c0_178] : memref<32x1xf32, #tpu.memory_space<vmem>>, vector<32x1xf32>
    %655 = vector.broadcast %654 : vector<32x1xf32> to vector<32x64xf32>
    %656 = arith.addf %653, %655 : vector<32x64xf32>
    %cst_179 = arith.constant 0.000000e+00 : f32
    %657 = vector.broadcast %cst_179 : f32 to vector<32x64xf32>
    %658 = arith.cmpf ogt, %656, %657 : vector<32x64xf32>
    %659 = math.exp %656 : vector<32x64xf32>
    %cst_180 = arith.constant 1.000000e+00 : f32
    %660 = vector.broadcast %cst_180 : f32 to vector<32x64xf32>
    %661 = arith.subf %659, %660 : vector<32x64xf32>
    %cst_181 = arith.constant 1.67326319 : f32
    %662 = vector.broadcast %cst_181 : f32 to vector<32x64xf32>
    %663 = arith.mulf %662, %661 : vector<32x64xf32>
    %664 = arith.select %658, %656, %663 : vector<32x64xi1>, vector<32x64xf32>
    %cst_182 = arith.constant 1.05070102 : f32
    %665 = vector.broadcast %cst_182 : f32 to vector<32x64xf32>
    %666 = arith.mulf %665, %664 : vector<32x64xf32>
    %c0_183 = arith.constant 0 : index
    %c0_184 = arith.constant 0 : index
    %667 = vector.load %arg11[%c0_183, %c0_184] : memref<64x128xf32, #tpu.memory_space<vmem>>, vector<64x128xf32>
    %cst_185 = arith.constant dense<0.000000e+00> : vector<32x128xf32>
    %668 = tpu.matmul %666, %667, %cst_185 {dimension_numbers = #tpu.dot_dimension_numbers<[1], [0], [0], [1], [0, 0, 1, 1], [], []>} : vector<32x64xf32>, vector<64x128xf32>, vector<32x128xf32> -> vector<32x128xf32>
    %c0_186 = arith.constant 0 : index
    %c0_187 = arith.constant 0 : index
    %669 = vector.load %arg12[%c0_186, %c0_187] : memref<1x128xf32, #tpu.memory_space<vmem>>, vector<1x128xf32>
    %670 = vector.broadcast %669 : vector<1x128xf32> to vector<32x128xf32>
    %671 = arith.addf %668, %670 : vector<32x128xf32>
    %cst_188 = arith.constant 0.000000e+00 : f32
    %672 = vector.broadcast %cst_188 : f32 to vector<32x128xf32>
    %673 = arith.cmpf ogt, %671, %672 : vector<32x128xf32>
    %674 = math.exp %671 : vector<32x128xf32>
    %cst_189 = arith.constant 1.000000e+00 : f32
    %675 = vector.broadcast %cst_189 : f32 to vector<32x128xf32>
    %676 = arith.subf %674, %675 : vector<32x128xf32>
    %cst_190 = arith.constant 1.67326319 : f32
    %677 = vector.broadcast %cst_190 : f32 to vector<32x128xf32>
    %678 = arith.mulf %677, %676 : vector<32x128xf32>
    %679 = arith.select %673, %671, %678 : vector<32x128xi1>, vector<32x128xf32>
    %cst_191 = arith.constant 1.05070102 : f32
    %680 = vector.broadcast %cst_191 : f32 to vector<32x128xf32>
    %681 = arith.mulf %680, %679 : vector<32x128xf32>
    %c0_192 = arith.constant 0 : index
    %c0_193 = arith.constant 0 : index
    %682 = vector.load %arg14[%c0_192, %c0_193] : memref<32x128xf32, #tpu.memory_space<vmem>>, vector<32x128xf32>
    tpu.vector_store %arg14[%c0_192, %c0_193], %681 {strides = array<i32>} : memref<32x128xf32, #tpu.memory_space<vmem>>, vector<32x128xf32>,
    return
  }
}

</mosaic_0001>

<llo_original>
// kernel: rdecoder_forward.1
$region0: #{rdecoder_forward.1}
  #allocation0 [shape = 'u32[]', space=smem, size = 0x4, offset = 0x4, fixed_abs, tag = 'smem constant byte address 0x4 - core index']
  #allocation1 [shape = 'u32[144,128]{1,0:T(1,128)}', space=vmem, size = 0x12000, scoped, tag = 'internal scratch']
  #allocation2 [shape = 'f32[32,32]{1,0:T(8,128)}', space=vmem, size = 0x4000, scoped, tag = 'scratch operand']
  %s0 = inlined_call_operand.vmem [shape: f32[8,4,32], index: 0, kind: input, shape index: {}]
  %s1 = inlined_call_operand.vmem [shape: f32[32,128], index: 1, kind: input, shape index: {}]
  %s2 = inlined_call_operand.vmem [shape: f32[32,128], index: 2, kind: input, shape index: {}]
  %s3 = inlined_call_operand.hbm [shape: f32[1,128], index: 3, kind: input, shape index: {}]
  %s4 = inlined_call_operand.vmem [shape: f32[32,128], index: 4, kind: input, shape index: {}]
  %s5 = inlined_call_operand.hbm [shape: f32[32,128], index: 5, kind: input, shape index: {}]
  %s6 = inlined_call_operand.hbm [shape: f32[1,128], index: 6, kind: input, shape index: {}]
  %s7 = inlined_call_operand.hbm [shape: f32[32,64], index: 7, kind: input, shape index: {}]
  %s8 = inlined_call_operand.hbm [shape: f32[1,64], index: 8, kind: input, shape index: {}]
  %s9 = inlined_call_operand.vmem [shape: f32[32,1], index: 9, kind: input, shape index: {}]
  %s10 = inlined_call_operand.vmem [shape: f32[32,1], index: 10, kind: input, shape index: {}]
  %s11 = inlined_call_operand.vmem [shape: f32[64,128], index: 11, kind: input, shape index: {}]
  %s12 = inlined_call_operand.hbm [shape: f32[1,128], index: 12, kind: input, shape index: {}]
  %s13 = inlined_call_operand.vmem [shape: f32[8,4,32], index: 13, kind: output, shape index: {0}]
  %s14 = inlined_call_operand.vmem [shape: f32[32,128], index: 14, kind: output, shape index: {1}]
  %15 = xla_tuple %s13, %s14
  %s16 = sld [smem:[#allocation0]]
  $region94: #{rdecoder_forward.1} parent=0
    _
  %s18 = ssub.s32 1, %s16
  %s19 = scalar_select 0, %s18, %s16
  $region1: #{rdecoder_forward.1} parent=0
    #allocation3 [shape = 'u8[512]{0}', space=vmem, size = 0x400, scoped, tag = 'input window, operand 3, single buffered']
    #allocation4 [shape = 's32[1]{0}', space=sflag, size = 0x4, scoped, tag = 'scoped memory for rdecoder_forward.1']
    #allocation5 [shape = 'u8[16384]{0}', space=vmem, size = 0x4000, scoped, tag = 'input window, operand 5, single buffered']
    #allocation6 [shape = 's32[1]{0}', space=sflag, size = 0x4, scoped, tag = 'scoped memory for rdecoder_forward.1']
    #allocation7 [shape = 'u8[512]{0}', space=vmem, size = 0x400, scoped, tag = 'input window, operand 6, single buffered']
    #allocation8 [shape = 'u8[16384]{0}', space=vmem, size = 0x4000, scoped, tag = 'input window, operand 7, single buffered']
    #allocation9 [shape = 's32[1]{0}', space=sflag, size = 0x4, scoped, tag = 'scoped memory for rdecoder_forward.1']
    #allocation10 [shape = 'u8[512]{0}', space=vmem, size = 0x400, scoped, tag = 'input window, operand 8, single buffered']
    #allocation11 [shape = 'u8[512]{0}', space=vmem, size = 0x400, scoped, tag = 'input window, operand 12, single buffered']
    #allocation12 [shape = 's32[1]{0}', space=sflag, size = 0x4, scoped, tag = 'scoped memory for rdecoder_forward.1']
    %20 = vsyncpa [#allocation4], 0
    %21 = vsyncpa [#allocation6], 0
    %22 = vsyncpa [#allocation9], 0
    %23 = vsyncpa [#allocation12], 0
    // Predicated region
    $region2: #{rdecoder_forward.1} parent=1 // pred_check
      _
    $region3: #{rdecoder_forward.1} parent=1 // pred_check_branch
      %25 = sbr.rel (0) target = $region5
    $region4: #{rdecoder_forward.1} parent=1 // pred_region
      _
    $region5: #{rdecoder_forward.1} parent=1 // pred_fallthru
      _
    // Predicated region
    $region6: #{rdecoder_forward.1} parent=1 // pred_check
      _
    $region7: #{rdecoder_forward.1} parent=1 // pred_check_branch
      %27 = sbr.rel (0) target = $region9
    $region8: #{rdecoder_forward.1} parent=1 // pred_region
      _
    $region9: #{rdecoder_forward.1} parent=1 // pred_fallthru
      _
    // Predicated region
    $region10: #{rdecoder_forward.1} parent=1 // pred_check
      _
    $region11: #{rdecoder_forward.1} parent=1 // pred_check_branch
      %29 = sbr.rel (0) target = $region13
    $region12: #{rdecoder_forward.1} parent=1 // pred_region
      _
    $region13: #{rdecoder_forward.1} parent=1 // pred_fallthru
      _
    // Predicated region
    $region14: #{rdecoder_forward.1} parent=1 // pred_check
      _
    $region15: #{rdecoder_forward.1} parent=1 // pred_check_branch
      %31 = sbr.rel (0) target = $region17
    $region16: #{rdecoder_forward.1} parent=1 // pred_region
      %s33 = ssub.s32 16, 16
      %34 = vsyncadd [#allocation4], %s33
      %s36 = sshll.u32 [#allocation3], 4
      %s37 = int_to_ptr.vmem [resolvable:$true] %s36
      %39 = dma.hbm_to_vmem [thread:$0]  %s3, 16, %s37, [#allocation4]
    $region17: #{rdecoder_forward.1} parent=1 // pred_fallthru
      _
    // Predicated region
    $region18: #{rdecoder_forward.1} parent=1 // pred_check
      _
    $region19: #{rdecoder_forward.1} parent=1 // pred_check_branch
      %41 = sbr.rel (0) target = $region21
    $region20: #{rdecoder_forward.1} parent=1 // pred_region
      _
    $region21: #{rdecoder_forward.1} parent=1 // pred_fallthru
      _
    // Predicated region
    $region22: #{rdecoder_forward.1} parent=1 // pred_check
      _
    $region23: #{rdecoder_forward.1} parent=1 // pred_check_branch
      %43 = sbr.rel (0) target = $region25
    $region24: #{rdecoder_forward.1} parent=1 // pred_region
      %s45 = ssub.s32 512, 512
      %46 = vsyncadd [#allocation6], %s45
      %s47 = sshll.u32 [#allocation5], 4
      %s48 = int_to_ptr.vmem [resolvable:$true] %s47
      %53 = dma.hbm_to_vmem [thread:$0]  %s5, 512, %s48, [#allocation6], 128, 128, 8
    $region25: #{rdecoder_forward.1} parent=1 // pred_fallthru
      _
    // Predicated region
    $region26: #{rdecoder_forward.1} parent=1 // pred_check
      _
    $region27: #{rdecoder_forward.1} parent=1 // pred_check_branch
      %55 = sbr.rel (0) target = $region29
    $region28: #{rdecoder_forward.1} parent=1 // pred_region
      %s57 = ssub.s32 16, 16
      %58 = vsyncadd [#allocation6], %s57
      %s60 = sshll.u32 [#allocation7], 4
      %s61 = int_to_ptr.vmem [resolvable:$true] %s60
      %63 = dma.hbm_to_vmem [thread:$0]  %s6, 16, %s61, [#allocation6]
    $region29: #{rdecoder_forward.1} parent=1 // pred_fallthru
      _
    // Predicated region
    $region30: #{rdecoder_forward.1} parent=1 // pred_check
      _
    $region31: #{rdecoder_forward.1} parent=1 // pred_check_branch
      %65 = sbr.rel (0) target = $region33
    $region32: #{rdecoder_forward.1} parent=1 // pred_region
      %s67 = ssub.s32 512, 512
      %68 = vsyncadd [#allocation9], %s67
      %s69 = sshll.u32 [#allocation8], 4
      %s70 = int_to_ptr.vmem [resolvable:$true] %s69
      %75 = dma.hbm_to_vmem [thread:$0]  %s7, 512, %s70, [#allocation9], 128, 128, 8
    $region33: #{rdecoder_forward.1} parent=1 // pred_fallthru
      _
    // Predicated region
    $region34: #{rdecoder_forward.1} parent=1 // pred_check
      _
    $region35: #{rdecoder_forward.1} parent=1 // pred_check_branch
      %77 = sbr.rel (0) target = $region37
    $region36: #{rdecoder_forward.1} parent=1 // pred_region
      %s79 = ssub.s32 16, 16
      %80 = vsyncadd [#allocation9], %s79
      %s82 = sshll.u32 [#allocation10], 4
      %s83 = int_to_ptr.vmem [resolvable:$true] %s82
      %85 = dma.hbm_to_vmem [thread:$0]  %s8, 16, %s83, [#allocation9]
    $region37: #{rdecoder_forward.1} parent=1 // pred_fallthru
      _
    // Predicated region
    $region38: #{rdecoder_forward.1} parent=1 // pred_check
      _
    $region39: #{rdecoder_forward.1} parent=1 // pred_check_branch
      %87 = sbr.rel (0) target = $region41
    $region40: #{rdecoder_forward.1} parent=1 // pred_region
      _
    $region41: #{rdecoder_forward.1} parent=1 // pred_fallthru
      _
    // Predicated region
    $region42: #{rdecoder_forward.1} parent=1 // pred_check
      _
    $region43: #{rdecoder_forward.1} parent=1 // pred_check_branch
      %89 = sbr.rel (0) target = $region45
    $region44: #{rdecoder_forward.1} parent=1 // pred_region
      _
    $region45: #{rdecoder_forward.1} parent=1 // pred_fallthru
      _
    // Predicated region
    $region46: #{rdecoder_forward.1} parent=1 // pred_check
      _
    $region47: #{rdecoder_forward.1} parent=1 // pred_check_branch
      %91 = sbr.rel (0) target = $region49
    $region48: #{rdecoder_forward.1} parent=1 // pred_region
      _
    $region49: #{rdecoder_forward.1} parent=1 // pred_fallthru
      _
    // Predicated region
    $region50: #{rdecoder_forward.1} parent=1 // pred_check
      _
    $region51: #{rdecoder_forward.1} parent=1 // pred_check_branch
      %93 = sbr.rel (0) target = $region53
    $region52: #{rdecoder_forward.1} parent=1 // pred_region
      %s95 = ssub.s32 16, 16
      %96 = vsyncadd [#allocation12], %s95
      %s98 = sshll.u32 [#allocation11], 4
      %s99 = int_to_ptr.vmem [resolvable:$true] %s98
      %101 = dma.hbm_to_vmem [thread:$0]  %s12, 16, %s99, [#allocation12]
    $region53: #{rdecoder_forward.1} parent=1 // pred_fallthru
      _
    // Predicated region
    $region54: #{rdecoder_forward.1} parent=1 // pred_check
      _
    $region55: #{rdecoder_forward.1} parent=1 // pred_check_branch
      %103 = sbr.rel (0) target = $region57
    $region56: #{rdecoder_forward.1} parent=1 // pred_region
      %104 = dma.done [#allocation4], 16
    $region57: #{rdecoder_forward.1} parent=1 // pred_fallthru
      _
    // Predicated region
    $region58: #{rdecoder_forward.1} parent=1 // pred_check
      _
    $region59: #{rdecoder_forward.1} parent=1 // pred_check_branch
      %106 = sbr.rel (0) target = $region61
    $region60: #{rdecoder_forward.1} parent=1 // pred_region
      %107 = dma.done [#allocation6], 512
    $region61: #{rdecoder_forward.1} parent=1 // pred_fallthru
      _
    // Predicated region
    $region62: #{rdecoder_forward.1} parent=1 // pred_check
      _
    $region63: #{rdecoder_forward.1} parent=1 // pred_check_branch
      %109 = sbr.rel (0) target = $region65
    $region64: #{rdecoder_forward.1} parent=1 // pred_region
      %110 = dma.done [#allocation6], 16
    $region65: #{rdecoder_forward.1} parent=1 // pred_fallthru
      _
    // Predicated region
    $region66: #{rdecoder_forward.1} parent=1 // pred_check
      _
    $region67: #{rdecoder_forward.1} parent=1 // pred_check_branch
      %112 = sbr.rel (0) target = $region69
    $region68: #{rdecoder_forward.1} parent=1 // pred_region
      %113 = dma.done [#allocation9], 512
    $region69: #{rdecoder_forward.1} parent=1 // pred_fallthru
      _
    // Predicated region
    $region70: #{rdecoder_forward.1} parent=1 // pred_check
      _
    $region71: #{rdecoder_forward.1} parent=1 // pred_check_branch
      %115 = sbr.rel (0) target = $region73
    $region72: #{rdecoder_forward.1} parent=1 // pred_region
      %116 = dma.done [#allocation9], 16
    $region73: #{rdecoder_forward.1} parent=1 // pred_fallthru
      _
    // Predicated region
    $region74: #{rdecoder_forward.1} parent=1 // pred_check
      _
    $region75: #{rdecoder_forward.1} parent=1 // pred_check_branch
      %118 = sbr.rel (0) target = $region77
    $region76: #{rdecoder_forward.1} parent=1 // pred_region
      %119 = dma.done [#allocation12], 16
    $region77: #{rdecoder_forward.1} parent=1 // pred_fallthru
      _
    %v120 = vld [vmem:[%s1] sm:$0xff]
    %v121 = vld [vmem:[%s1 + $0x8] sm:$0xff]
    %v122 = vld [vmem:[%s1 + $0x10] sm:$0xff]
    %v123 = vld [vmem:[%s1 + $0x18] sm:$0xff]
    %v124 = vld [vmem:[%s2] sm:$0xff]
    %v125 = vld [vmem:[%s2 + $0x8] sm:$0xff]
    %v126 = vld [vmem:[%s2 + $0x10] sm:$0xff]
    %v127 = vld [vmem:[%s2 + $0x18] sm:$0xff]
    %v128 = vld [vmem:[#allocation3] sm:$0x1]
    %v129 = vld [vmem:[%s4] sm:$0xff]
    %v130 = vld [vmem:[%s4 + $0x8] sm:$0xff]
    %v131 = vld [vmem:[%s4 + $0x10] sm:$0xff]
    %v132 = vld [vmem:[%s4 + $0x18] sm:$0xff]
    %v133 = vld [vmem:[#allocation5] sm:$0xff]
    %v134 = vld [vmem:[#allocation5 + $0x8] sm:$0xff]
    %v135 = vld [vmem:[#allocation5 + $0x10] sm:$0xff]
    %v136 = vld [vmem:[#allocation5 + $0x18] sm:$0xff]
    %v137 = vld [vmem:[#allocation7] sm:$0x1]
    %v138 = vld [vmem:[%s0] sm:$0xf]
    %v140 = vlaneseq
    %v141 = vshrl.u32 %v140, 7
    %v142 = vsub.s32 0, %v141
    %v143 = vrot.slane %v128, %v142
    %vm145 = vcmask 261120
    %v147 = vsel %vm145, %v138, 0
    %149 = vmatprep.subr.mxu0 0.0
    %150 = vmatpush1.msra.mxu0 %v120
    %151 = vmatprep.subr.mxu0 0.0
    %152 = vmatpush1.msra.mxu0 %v121
    %153 = vmatprep.subr.mxu0 0.0
    %154 = vmatpush1.msra.mxu0 %v122
    %155 = vmatprep.subr.mxu0 0.0
    %156 = vmatpush1.msra.mxu0 %v123
    %157 = vmatprep.subr.mxu0 0.0
    %158 = vmatpush1.msra.mxu0 0.0
    %159 = vmatprep.subr.mxu0 0.0
    %160 = vmatpush1.msra.mxu0 0.0
    %161 = vmatprep.subr.mxu0 0.0
    %162 = vmatpush1.msra.mxu0 0.0
    %163 = vmatprep.subr.mxu0 0.0
    %164 = vmatpush1.msra.mxu0 0.0
    %165 = vmatprep.subr.mxu0 0.0
    %166 = vmatpush1.msra.mxu0 0.0
    %167 = vmatprep.subr.mxu0 0.0
    %168 = vmatpush1.msra.mxu0 0.0
    %169 = vmatprep.subr.mxu0 0.0
    %170 = vmatpush1.msra.mxu0 0.0
    %171 = vmatprep.subr.mxu0 0.0
    %172 = vmatpush1.msra.mxu0 0.0
    %173 = vmatprep.subr.mxu0 0.0
    %174 = vmatpush1.msra.mxu0 0.0
    %175 = vmatprep.subr.mxu0 0.0
    %176 = vmatpush1.msra.mxu0 0.0
    %177 = vmatprep.subr.mxu0 0.0
    %178 = vmatpush1.msra.mxu0 0.0
    %179 = vmatprep.subr.mxu0 0.0
    %180 = vmatpush1.msra.mxu0 0.0
    %181 = vmatprep.subr.mxu0 0.0
    %182 = vmatpush1.msra.mxu0 0.0
    %183 = vmatprep.subr.mxu0 0.0
    %184 = vmatpush1.msra.mxu0 0.0
    %185 = vmatprep.subr.mxu0 0.0
    %186 = vmatpush1.msra.mxu0 0.0
    %187 = vmatprep.subr.mxu0 0.0
    %188 = vmatpush1.msra.mxu0 0.0
    %189 = vmatprep.subr.mxu0 0.0
    %190 = vmatpush1.msra.mxu0 0.0
    %191 = vmatprep.subr.mxu0 0.0
    %192 = vmatpush1.msra.mxu0 0.0
    %193 = vmatprep.subr.mxu0 0.0
    %194 = vmatpush1.msra.mxu0 0.0
    %195 = vmatprep.subr.mxu0 0.0
    %196 = vmatpush1.msra.mxu0 0.0
    %197 = vmatprep.subr.mxu0 0.0
    %198 = vmatpush1.msra.mxu0 0.0
    %199 = vmatprep.subr.mxu0 0.0
    %200 = vmatpush1.msra.mxu0 0.0
    %201 = vmatprep.subr.mxu0 0.0
    %202 = vmatpush1.msra.mxu0 0.0
    %203 = vmatprep.subr.mxu0 0.0
    %204 = vmatpush1.msra.mxu0 0.0
    %205 = vmatprep.subr.mxu0 0.0
    %206 = vmatpush1.msra.mxu0 0.0
    %207 = vmatprep.subr.mxu0 0.0
    %208 = vmatpush1.msra.mxu0 0.0
    %209 = vmatprep.subr.mxu0 0.0
    %210 = vmatpush1.msra.mxu0 0.0
    %211 = vmatprep.subr.mxu0 0.0
    %212 = vmatpush1.msra.mxu0 0.0
    %213 = vmatprep.mubr.f32.mxu0 0.0
    %214 = vmatmul.mubr.f32.gmra.mrb[0].mxu0 %v147
    %v215 = vpop.f32.mrb[0].mxu0
    %v216 = vadd.f32 %v143, %v215
    %v217 = vpop.f32.mrb[0].mxu0
    %218 = vdwg.mxu0
    %v219 = vxor.u32 %v216, 2147483648
    %v220 = vmul.f32 %v219, 1.442695
    %v221 = vpow.pop %v220
    %v222 = vadd.f32 %v221, 1.0
    %v223 = vrcp.pop %v222
    %v224 = vmul.f32 1.0, %v223
    %v225 = vtanh.pop %v216
    %v226 = vmul.f32 %v224, 0.0
    %228 = vrot.lane.b32.xlu0 %v225, 64
    %v229 = vpop.permute.xlu0 %228
    %v231 = vmul.f32 %v224, %v229
    %233 = vrot.lane.b32.xlu0 %v231, 32
    %v234 = vpop.permute.xlu0 %233
    %v236 = vadd.f32 %v226, %v234
    %v237 = vtanh.pop %v236
    %239 = vrot.lane.b32.xlu0 %v237, 64
    %v240 = vpop.permute.xlu0 %239
    %v242 = vmul.f32 %v224, %v240
    %v244 = vlaneseq
    %v245 = vshrl.u32 %v244, 7
    %v246 = vsub.s32 0, %v245
    %v247 = vrot.slane %v137, %v246
    %250 = vrot.lane.b32.xlu0 %v242, 32
    %v251 = vpop.permute.xlu0 %250
    %v252 = vsel %vm145, %v251, 0
    %254 = vmatprep.subr.mxu0 0.0
    %255 = vmatpush1.msra.mxu0 %v129
    %256 = vmatprep.subr.mxu0 0.0
    %257 = vmatpush1.msra.mxu0 %v130
    %258 = vmatprep.subr.mxu0 0.0
    %259 = vmatpush1.msra.mxu0 %v131
    %260 = vmatprep.subr.mxu0 0.0
    %261 = vmatpush1.msra.mxu0 %v132
    %262 = vmatprep.subr.mxu0 0.0
    %263 = vmatpush1.msra.mxu0 0.0
    %264 = vmatprep.subr.mxu0 0.0
    %265 = vmatpush1.msra.mxu0 0.0
    %266 = vmatprep.subr.mxu0 0.0
    %267 = vmatpush1.msra.mxu0 0.0
    %268 = vmatprep.subr.mxu0 0.0
    %269 = vmatpush1.msra.mxu0 0.0
    %270 = vmatprep.subr.mxu0 0.0
    %271 = vmatpush1.msra.mxu0 0.0
    %272 = vmatprep.subr.mxu0 0.0
    %273 = vmatpush1.msra.mxu0 0.0
    %274 = vmatprep.subr.mxu0 0.0
    %275 = vmatpush1.msra.mxu0 0.0
    %276 = vmatprep.subr.mxu0 0.0
    %277 = vmatpush1.msra.mxu0 0.0
    %278 = vmatprep.subr.mxu0 0.0
    %279 = vmatpush1.msra.mxu0 0.0
    %280 = vmatprep.subr.mxu0 0.0
    %281 = vmatpush1.msra.mxu0 0.0
    %282 = vmatprep.subr.mxu0 0.0
    %283 = vmatpush1.msra.mxu0 0.0
    %284 = vmatprep.subr.mxu0 0.0
    %285 = vmatpush1.msra.mxu0 0.0
    %286 = vmatprep.subr.mxu0 0.0
    %287 = vmatpush1.msra.mxu0 0.0
    %288 = vmatprep.subr.mxu0 0.0
    %289 = vmatpush1.msra.mxu0 0.0
    %290 = vmatprep.subr.mxu0 0.0
    %291 = vmatpush1.msra.mxu0 0.0
    %292 = vmatprep.subr.mxu0 0.0
    %293 = vmatpush1.msra.mxu0 0.0
    %294 = vmatprep.subr.mxu0 0.0
    %295 = vmatpush1.msra.mxu0 0.0
    %296 = vmatprep.subr.mxu0 0.0
    %297 = vmatpush1.msra.mxu0 0.0
    %298 = vmatprep.subr.mxu0 0.0
    %299 = vmatpush1.msra.mxu0 0.0
    %300 = vmatprep.subr.mxu0 0.0
    %301 = vmatpush1.msra.mxu0 0.0
    %302 = vmatprep.subr.mxu0 0.0
    %303 = vmatpush1.msra.mxu0 0.0
    %304 = vmatprep.subr.mxu0 0.0
    %305 = vmatpush1.msra.mxu0 0.0
    %306 = vmatprep.subr.mxu0 0.0
    %307 = vmatpush1.msra.mxu0 0.0
    %308 = vmatprep.subr.mxu0 0.0
    %309 = vmatpush1.msra.mxu0 0.0
    %310 = vmatprep.subr.mxu0 0.0
    %311 = vmatpush1.msra.mxu0 0.0
    %312 = vmatprep.subr.mxu0 0.0
    %313 = vmatpush1.msra.mxu0 0.0
    %314 = vmatprep.subr.mxu0 0.0
    %315 = vmatpush1.msra.mxu0 0.0
    %316 = vmatprep.subr.mxu0 0.0
    %317 = vmatpush1.msra.mxu0 0.0
    %318 = vmatprep.mubr.f32.mxu0 0.0
    %319 = vmatmul.mubr.f32.gmra.mrb[0].mxu0 %v252
    %v320 = vpop.f32.mrb[0].mxu0
    %v321 = vadd.f32 %v247, %v320
    %v322 = vpop.f32.mrb[0].mxu0
    %323 = vdwg.mxu0
    %v324 = vxor.u32 %v321, 2147483648
    %v325 = vmul.f32 %v324, 1.442695
    %v326 = vpow.pop %v325
    %v327 = vadd.f32 %v326, 1.0
    %v328 = vrcp.pop %v327
    %v329 = vmul.f32 1.0, %v328
    %v330 = vtanh.pop %v321
    %v331 = vmul.f32 %v329, 0.0
    %333 = vrot.lane.b32.xlu0 %v330, 64
    %v334 = vpop.permute.xlu0 %333
    %v336 = vmul.f32 %v329, %v334
    %338 = vrot.lane.b32.xlu0 %v336, 32
    %v339 = vpop.permute.xlu0 %338
    %v341 = vadd.f32 %v331, %v339
    %v342 = vtanh.pop %v341
    %344 = vrot.lane.b32.xlu0 %v342, 64
    %v345 = vpop.permute.xlu0 %344
    %v347 = vmul.f32 %v329, %v345
    %vm348 = vcmask 1043456
    %v349 = vsel %vm348, %v242, 0.0
    %v350 = vsel %vm348, %v236, 0.0
    %v351 = vsel %vm348, %v347, 0.0
    %v352 = vsel %vm348, %v341, 0.0
    %354 = vrot.lane.b32.xlu0 %v349, 32
    %v355 = vpop.permute.xlu0 %354
    %v356 = vsel %vm145, %v355, 0
    %358 = vmatprep.subr.mxu0 0.0
    %359 = vmatpush1.msra.mxu0 %v124
    %360 = vmatprep.subr.mxu0 0.0
    %361 = vmatpush1.msra.mxu0 %v125
    %362 = vmatprep.subr.mxu0 0.0
    %363 = vmatpush1.msra.mxu0 %v126
    %364 = vmatprep.subr.mxu0 0.0
    %365 = vmatpush1.msra.mxu0 %v127
    %366 = vmatprep.subr.mxu0 0.0
    %367 = vmatpush1.msra.mxu0 0.0
    %368 = vmatprep.subr.mxu0 0.0
    %369 = vmatpush1.msra.mxu0 0.0
    %370 = vmatprep.subr.mxu0 0.0
    %371 = vmatpush1.msra.mxu0 0.0
    %372 = vmatprep.subr.mxu0 0.0
    %373 = vmatpush1.msra.mxu0 0.0
    %374 = vmatprep.subr.mxu0 0.0
    %375 = vmatpush1.msra.mxu0 0.0
    %376 = vmatprep.subr.mxu0 0.0
    %377 = vmatpush1.msra.mxu0 0.0
    %378 = vmatprep.subr.mxu0 0.0
    %379 = vmatpush1.msra.mxu0 0.0
    %380 = vmatprep.subr.mxu0 0.0
    %381 = vmatpush1.msra.mxu0 0.0
    %382 = vmatprep.subr.mxu0 0.0
    %383 = vmatpush1.msra.mxu0 0.0
    %384 = vmatprep.subr.mxu0 0.0
    %385 = vmatpush1.msra.mxu0 0.0
    %386 = vmatprep.subr.mxu0 0.0
    %387 = vmatpush1.msra.mxu0 0.0
    %388 = vmatprep.subr.mxu0 0.0
    %389 = vmatpush1.msra.mxu0 0.0
    %390 = vmatprep.subr.mxu0 0.0
    %391 = vmatpush1.msra.mxu0 0.0
    %392 = vmatprep.subr.mxu0 0.0
    %393 = vmatpush1.msra.mxu0 0.0
    %394 = vmatprep.subr.mxu0 0.0
    %395 = vmatpush1.msra.mxu0 0.0
    %396 = vmatprep.subr.mxu0 0.0
    %397 = vmatpush1.msra.mxu0 0.0
    %398 = vmatprep.subr.mxu0 0.0
    %399 = vmatpush1.msra.mxu0 0.0
    %400 = vmatprep.subr.mxu0 0.0
    %401 = vmatpush1.msra.mxu0 0.0
    %402 = vmatprep.subr.mxu0 0.0
    %403 = vmatpush1.msra.mxu0 0.0
    %404 = vmatprep.subr.mxu0 0.0
    %405 = vmatpush1.msra.mxu0 0.0
    %406 = vmatprep.subr.mxu0 0.0
    %407 = vmatpush1.msra.mxu0 0.0
    %408 = vmatprep.subr.mxu0 0.0
    %409 = vmatpush1.msra.mxu0 0.0
    %410 = vmatprep.subr.mxu0 0.0
    %411 = vmatpush1.msra.mxu0 0.0
    %412 = vmatprep.subr.mxu0 0.0
    %413 = vmatpush1.msra.mxu0 0.0
    %414 = vmatprep.subr.mxu0 0.0
    %415 = vmatpush1.msra.mxu0 0.0
    %416 = vmatprep.subr.mxu0 0.0
    %417 = vmatpush1.msra.mxu0 0.0
    %418 = vmatprep.subr.mxu0 0.0
    %419 = vmatpush1.msra.mxu0 0.0
    %420 = vmatprep.subr.mxu0 0.0
    %421 = vmatpush1.msra.mxu0 0.0
    %422 = vmatprep.mubr.f32.mxu0 0.0
    %423 = vmatmul.mubr.f32.gmra.mrb[0].mxu0 %v356
    %v424 = vpop.f32.mrb[0].mxu0
    %v425 = vadd.f32 0.0, %v424
    %v426 = vpop.f32.mrb[0].mxu0
    %427 = vdwg.mxu0
    %429 = vrot.lane.b32.xlu0 %v351, 32
    %v430 = vpop.permute.xlu0 %429
    %v431 = vsel %vm145, %v430, 0
    %433 = vmatprep.subr.mxu0 0.0
    %434 = vmatpush1.msra.mxu0 %v133
    %435 = vmatprep.subr.mxu0 0.0
    %436 = vmatpush1.msra.mxu0 %v134
    %437 = vmatprep.subr.mxu0 0.0
    %438 = vmatpush1.msra.mxu0 %v135
    %439 = vmatprep.subr.mxu0 0.0
    %440 = vmatpush1.msra.mxu0 %v136
    %441 = vmatprep.subr.mxu0 0.0
    %442 = vmatpush1.msra.mxu0 0.0
    %443 = vmatprep.subr.mxu0 0.0
    %444 = vmatpush1.msra.mxu0 0.0
    %445 = vmatprep.subr.mxu0 0.0
    %446 = vmatpush1.msra.mxu0 0.0
    %447 = vmatprep.subr.mxu0 0.0
    %448 = vmatpush1.msra.mxu0 0.0
    %449 = vmatprep.subr.mxu0 0.0
    %450 = vmatpush1.msra.mxu0 0.0
    %451 = vmatprep.subr.mxu0 0.0
    %452 = vmatpush1.msra.mxu0 0.0
    %453 = vmatprep.subr.mxu0 0.0
    %454 = vmatpush1.msra.mxu0 0.0
    %455 = vmatprep.subr.mxu0 0.0
    %456 = vmatpush1.msra.mxu0 0.0
    %457 = vmatprep.subr.mxu0 0.0
    %458 = vmatpush1.msra.mxu0 0.0
    %459 = vmatprep.subr.mxu0 0.0
    %460 = vmatpush1.msra.mxu0 0.0
    %461 = vmatprep.subr.mxu0 0.0
    %462 = vmatpush1.msra.mxu0 0.0
    %463 = vmatprep.subr.mxu0 0.0
    %464 = vmatpush1.msra.mxu0 0.0
    %465 = vmatprep.subr.mxu0 0.0
    %466 = vmatpush1.msra.mxu0 0.0
    %467 = vmatprep.subr.mxu0 0.0
    %468 = vmatpush1.msra.mxu0 0.0
    %469 = vmatprep.subr.mxu0 0.0
    %470 = vmatpush1.msra.mxu0 0.0
    %471 = vmatprep.subr.mxu0 0.0
    %472 = vmatpush1.msra.mxu0 0.0
    %473 = vmatprep.subr.mxu0 0.0
    %474 = vmatpush1.msra.mxu0 0.0
    %475 = vmatprep.subr.mxu0 0.0
    %476 = vmatpush1.msra.mxu0 0.0
    %477 = vmatprep.subr.mxu0 0.0
    %478 = vmatpush1.msra.mxu0 0.0
    %479 = vmatprep.subr.mxu0 0.0
    %480 = vmatpush1.msra.mxu0 0.0
    %481 = vmatprep.subr.mxu0 0.0
    %482 = vmatpush1.msra.mxu0 0.0
    %483 = vmatprep.subr.mxu0 0.0
    %484 = vmatpush1.msra.mxu0 0.0
    %485 = vmatprep.subr.mxu0 0.0
    %486 = vmatpush1.msra.mxu0 0.0
    %487 = vmatprep.subr.mxu0 0.0
    %488 = vmatpush1.msra.mxu0 0.0
    %489 = vmatprep.subr.mxu0 0.0
    %490 = vmatpush1.msra.mxu0 0.0
    %491 = vmatprep.subr.mxu0 0.0
    %492 = vmatpush1.msra.mxu0 0.0
    %493 = vmatprep.subr.mxu0 0.0
    %494 = vmatpush1.msra.mxu0 0.0
    %495 = vmatprep.subr.mxu0 0.0
    %496 = vmatpush1.msra.mxu0 0.0
    %497 = vmatprep.mubr.f32.mxu0 0.0
    %498 = vmatmul.mubr.f32.gmra.mrb[0].mxu0 %v431
    %v499 = vpop.f32.mrb[0].mxu0
    %v500 = vadd.f32 0.0, %v499
    %v501 = vpop.f32.mrb[0].mxu0
    %502 = vdwg.mxu0
    %503 = vrot.lane.b32.xlu0 %v138, 96
    %v504 = vpop.permute.xlu0 %503
    %v506 = vmul.f32 %v351, %v504
    %v507 = vtanh.pop %v506
    %v508 = vmul.f32 %v507, 1.442695
    %v509 = vpow.pop %v508
    %vm510 = vcmask 1044224
    %v511 = vsel %vm510, %v509, 0.0
    %v512 = vrot.slane %v511, 4
    %v513 = vadd.f32 %v511, %v512
    %v514 = vrot.slane %v513, 2
    %v515 = vadd.f32 %v513, %v514
    %v516 = vrot.slane %v515, 1
    %v517 = vadd.f32 %v515, %v516
    %v518 = vrcp.pop %v517
    %v519 = vmul.f32 %v509, %v518
    %521 = vrot.lane.b32.xlu0 %v519, 32
    %v522 = vpop.permute.xlu0 %521
    %vm524 = vcmask 257024
    %525 = vst.msk [vmem:[%s13] sm:$0xf] %vm524, %v522
    %v526 = vmul.f32 %v138, %v522
    %s527 = scalar_lea.vmem %s0, 4
    %v528 = vld [vmem:[%s527] sm:$0xf]
    %v530 = vrot.slane %v526, 4
    %v532 = vsel %vm348, %v528, %v530
    %v534 = vsel %vm145, %v532, 0
    %536 = vmatprep.subr.mxu0 0.0
    %537 = vmatpush1.msra.mxu0 %v120
    %538 = vmatprep.subr.mxu0 0.0
    %539 = vmatpush1.msra.mxu0 %v121
    %540 = vmatprep.subr.mxu0 0.0
    %541 = vmatpush1.msra.mxu0 %v122
    %542 = vmatprep.subr.mxu0 0.0
    %543 = vmatpush1.msra.mxu0 %v123
    %544 = vmatprep.subr.mxu0 0.0
    %545 = vmatpush1.msra.mxu0 0.0
    %546 = vmatprep.subr.mxu0 0.0
    %547 = vmatpush1.msra.mxu0 0.0
    %548 = vmatprep.subr.mxu0 0.0
    %549 = vmatpush1.msra.mxu0 0.0
    %550 = vmatprep.subr.mxu0 0.0
    %551 = vmatpush1.msra.mxu0 0.0
    %552 = vmatprep.subr.mxu0 0.0
    %553 = vmatpush1.msra.mxu0 0.0
    %554 = vmatprep.subr.mxu0 0.0
    %555 = vmatpush1.msra.mxu0 0.0
    %556 = vmatprep.subr.mxu0 0.0
    %557 = vmatpush1.msra.mxu0 0.0
    %558 = vmatprep.subr.mxu0 0.0
    %559 = vmatpush1.msra.mxu0 0.0
    %560 = vmatprep.subr.mxu0 0.0
    %561 = vmatpush1.msra.mxu0 0.0
    %562 = vmatprep.subr.mxu0 0.0
    %563 = vmatpush1.msra.mxu0 0.0
    %564 = vmatprep.subr.mxu0 0.0
    %565 = vmatpush1.msra.mxu0 0.0
    %566 = vmatprep.subr.mxu0 0.0
    %567 = vmatpush1.msra.mxu0 0.0
    %568 = vmatprep.subr.mxu0 0.0
    %569 = vmatpush1.msra.mxu0 0.0
    %570 = vmatprep.subr.mxu0 0.0
    %571 = vmatpush1.msra.mxu0 0.0
    %572 = vmatprep.subr.mxu0 0.0
    %573 = vmatpush1.msra.mxu0 0.0
    %574 = vmatprep.subr.mxu0 0.0
    %575 = vmatpush1.msra.mxu0 0.0
    %576 = vmatprep.subr.mxu0 0.0
    %577 = vmatpush1.msra.mxu0 0.0
    %578 = vmatprep.subr.mxu0 0.0
    %579 = vmatpush1.msra.mxu0 0.0
    %580 = vmatprep.subr.mxu0 0.0
    %581 = vmatpush1.msra.mxu0 0.0
    %582 = vmatprep.subr.mxu0 0.0
    %583 = vmatpush1.msra.mxu0 0.0
    %584 = vmatprep.subr.mxu0 0.0
    %585 = vmatpush1.msra.mxu0 0.0
    %586 = vmatprep.subr.mxu0 0.0
    %587 = vmatpush1.msra.mxu0 0.0
    %588 = vmatprep.subr.mxu0 0.0
    %589 = vmatpush1.msra.mxu0 0.0
    %590 = vmatprep.subr.mxu0 0.0
    %591 = vmatpush1.msra.mxu0 0.0
    %592 = vmatprep.subr.mxu0 0.0
    %593 = vmatpush1.msra.mxu0 0.0
    %594 = vmatprep.subr.mxu0 0.0
    %595 = vmatpush1.msra.mxu0 0.0
    %596 = vmatprep.subr.mxu0 0.0
    %597 = vmatpush1.msra.mxu0 0.0
    %598 = vmatprep.subr.mxu0 0.0
    %599 = vmatpush1.msra.mxu0 0.0
    %600 = vmatprep.mubr.f32.mxu0 0.0
    %601 = vmatmul.mubr.f32.gmra.mrb[0].mxu0 %v534
    %v602 = vpop.f32.mrb[0].mxu0
    %v603 = vadd.f32 %v425, %v602
    %v604 = vpop.f32.mrb[0].mxu0
    %605 = vdwg.mxu0
    %v606 = vadd.f32 %v603, %v143
    %v607 = vxor.u32 %v606, 2147483648
    %v608 = vmul.f32 %v607, 1.442695
    %v609 = vpow.pop %v608
    %v610 = vadd.f32 %v609, 1.0
    %v611 = vrcp.pop %v610
    %v612 = vmul.f32 1.0, %v611
    %v613 = vtanh.pop %v606
    %v614 = vmul.f32 %v612, %v350
    %616 = vrot.lane.b32.xlu0 %v613, 64
    %v617 = vpop.permute.xlu0 %616
    %v619 = vmul.f32 %v612, %v617
    %621 = vrot.lane.b32.xlu0 %v619, 32
    %v622 = vpop.permute.xlu0 %621
    %v624 = vadd.f32 %v614, %v622
    %v625 = vtanh.pop %v624
    %627 = vrot.lane.b32.xlu0 %v625, 64
    %v628 = vpop.permute.xlu0 %627
    %v630 = vmul.f32 %v612, %v628
    %632 = vrot.lane.b32.xlu0 %v630, 32
    %v633 = vpop.permute.xlu0 %632
    %v634 = vsel %vm145, %v633, 0
    %636 = vmatprep.subr.mxu0 0.0
    %637 = vmatpush1.msra.mxu0 %v129
    %638 = vmatprep.subr.mxu0 0.0
    %639 = vmatpush1.msra.mxu0 %v130
    %640 = vmatprep.subr.mxu0 0.0
    %641 = vmatpush1.msra.mxu0 %v131
    %642 = vmatprep.subr.mxu0 0.0
    %643 = vmatpush1.msra.mxu0 %v132
    %644 = vmatprep.subr.mxu0 0.0
    %645 = vmatpush1.msra.mxu0 0.0
    %646 = vmatprep.subr.mxu0 0.0
    %647 = vmatpush1.msra.mxu0 0.0
    %648 = vmatprep.subr.mxu0 0.0
    %649 = vmatpush1.msra.mxu0 0.0
    %650 = vmatprep.subr.mxu0 0.0
    %651 = vmatpush1.msra.mxu0 0.0
    %652 = vmatprep.subr.mxu0 0.0
    %653 = vmatpush1.msra.mxu0 0.0
    %654 = vmatprep.subr.mxu0 0.0
    %655 = vmatpush1.msra.mxu0 0.0
    %656 = vmatprep.subr.mxu0 0.0
    %657 = vmatpush1.msra.mxu0 0.0
    %658 = vmatprep.subr.mxu0 0.0
    %659 = vmatpush1.msra.mxu0 0.0
    %660 = vmatprep.subr.mxu0 0.0
    %661 = vmatpush1.msra.mxu0 0.0
    %662 = vmatprep.subr.mxu0 0.0
    %663 = vmatpush1.msra.mxu0 0.0
    %664 = vmatprep.subr.mxu0 0.0
    %665 = vmatpush1.msra.mxu0 0.0
    %666 = vmatprep.subr.mxu0 0.0
    %667 = vmatpush1.msra.mxu0 0.0
    %668 = vmatprep.subr.mxu0 0.0
    %669 = vmatpush1.msra.mxu0 0.0
    %670 = vmatprep.subr.mxu0 0.0
    %671 = vmatpush1.msra.mxu0 0.0
    %672 = vmatprep.subr.mxu0 0.0
    %673 = vmatpush1.msra.mxu0 0.0
    %674 = vmatprep.subr.mxu0 0.0
    %675 = vmatpush1.msra.mxu0 0.0
    %676 = vmatprep.subr.mxu0 0.0
    %677 = vmatpush1.msra.mxu0 0.0
    %678 = vmatprep.subr.mxu0 0.0
    %679 = vmatpush1.msra.mxu0 0.0
    %680 = vmatprep.subr.mxu0 0.0
    %681 = vmatpush1.msra.mxu0 0.0
    %682 = vmatprep.subr.mxu0 0.0
    %683 = vmatpush1.msra.mxu0 0.0
    %684 = vmatprep.subr.mxu0 0.0
    %685 = vmatpush1.msra.mxu0 0.0
    %686 = vmatprep.subr.mxu0 0.0
    %687 = vmatpush1.msra.mxu0 0.0
    %688 = vmatprep.subr.mxu0 0.0
    %689 = vmatpush1.msra.mxu0 0.0
    %690 = vmatprep.subr.mxu0 0.0
    %691 = vmatpush1.msra.mxu0 0.0
    %692 = vmatprep.subr.mxu0 0.0
    %693 = vmatpush1.msra.mxu0 0.0
    %694 = vmatprep.subr.mxu0 0.0
    %695 = vmatpush1.msra.mxu0 0.0
    %696 = vmatprep.subr.mxu0 0.0
    %697 = vmatpush1.msra.mxu0 0.0
    %698 = vmatprep.subr.mxu0 0.0
    %699 = vmatpush1.msra.mxu0 0.0
    %700 = vmatprep.mubr.f32.mxu0 0.0
    %701 = vmatmul.mubr.f32.gmra.mrb[0].mxu0 %v634
    %v702 = vpop.f32.mrb[0].mxu0
    %v703 = vadd.f32 %v500, %v702
    %v704 = vpop.f32.mrb[0].mxu0
    %705 = vdwg.mxu0
    %v706 = vadd.f32 %v703, %v247
    %v707 = vxor.u32 %v706, 2147483648
    %v708 = vmul.f32 %v707, 1.442695
    %v709 = vpow.pop %v708
    %v710 = vadd.f32 %v709, 1.0
    %v711 = vrcp.pop %v710
    %v712 = vmul.f32 1.0, %v711
    %v713 = vtanh.pop %v706
    %v714 = vmul.f32 %v712, %v352
    %716 = vrot.lane.b32.xlu0 %v713, 64
    %v717 = vpop.permute.xlu0 %716
    %v719 = vmul.f32 %v712, %v717
    %721 = vrot.lane.b32.xlu0 %v719, 32
    %v722 = vpop.permute.xlu0 %721
    %v724 = vadd.f32 %v714, %v722
    %v725 = vtanh.pop %v724
    %727 = vrot.lane.b32.xlu0 %v725, 64
    %v728 = vpop.permute.xlu0 %727
    %v730 = vmul.f32 %v712, %v728
    %732 = vrot.lane.b32.xlu0 %v730, 32
    %v733 = vpop.permute.xlu0 %732
    %vm735 = vcmask 261124
    %736 = vst.msk [vmem:[#allocation2 - $0x4] sm:$0xf0] %vm735, %v733
    %v737 = vld [vmem:[%s527] sm:$0xf]
    %738 = vmatprep.subr.mxu0 0.0
    %739 = vmatpush1.msra.mxu0 %v124
    %740 = vmatprep.subr.mxu0 0.0
    %741 = vmatpush1.msra.mxu0 %v125
    %742 = vmatprep.subr.mxu0 0.0
    %743 = vmatpush1.msra.mxu0 %v126
    %744 = vmatprep.subr.mxu0 0.0
    %745 = vmatpush1.msra.mxu0 %v127
    %746 = vmatprep.subr.mxu0 0.0
    %747 = vmatpush1.msra.mxu0 0.0
    %748 = vmatprep.subr.mxu0 0.0
    %749 = vmatpush1.msra.mxu0 0.0
    %750 = vmatprep.subr.mxu0 0.0
    %751 = vmatpush1.msra.mxu0 0.0
    %752 = vmatprep.subr.mxu0 0.0
    %753 = vmatpush1.msra.mxu0 0.0
    %754 = vmatprep.subr.mxu0 0.0
    %755 = vmatpush1.msra.mxu0 0.0
    %756 = vmatprep.subr.mxu0 0.0
    %757 = vmatpush1.msra.mxu0 0.0
    %758 = vmatprep.subr.mxu0 0.0
    %759 = vmatpush1.msra.mxu0 0.0
    %760 = vmatprep.subr.mxu0 0.0
    %761 = vmatpush1.msra.mxu0 0.0
    %762 = vmatprep.subr.mxu0 0.0
    %763 = vmatpush1.msra.mxu0 0.0
    %764 = vmatprep.subr.mxu0 0.0
    %765 = vmatpush1.msra.mxu0 0.0
    %766 = vmatprep.subr.mxu0 0.0
    %767 = vmatpush1.msra.mxu0 0.0
    %768 = vmatprep.subr.mxu0 0.0
    %769 = vmatpush1.msra.mxu0 0.0
    %770 = vmatprep.subr.mxu0 0.0
    %771 = vmatpush1.msra.mxu0 0.0
    %772 = vmatprep.subr.mxu0 0.0
    %773 = vmatpush1.msra.mxu0 0.0
    %774 = vmatprep.subr.mxu0 0.0
    %775 = vmatpush1.msra.mxu0 0.0
    %776 = vmatprep.subr.mxu0 0.0
    %777 = vmatpush1.msra.mxu0 0.0
    %778 = vmatprep.subr.mxu0 0.0
    %779 = vmatpush1.msra.mxu0 0.0
    %780 = vmatprep.subr.mxu0 0.0
    %781 = vmatpush1.msra.mxu0 0.0
    %782 = vmatprep.subr.mxu0 0.0
    %783 = vmatpush1.msra.mxu0 0.0
    %784 = vmatprep.subr.mxu0 0.0
    %785 = vmatpush1.msra.mxu0 0.0
    %786 = vmatprep.subr.mxu0 0.0
    %787 = vmatpush1.msra.mxu0 0.0
    %788 = vmatprep.subr.mxu0 0.0
    %789 = vmatpush1.msra.mxu0 0.0
    %790 = vmatprep.subr.mxu0 0.0
    %791 = vmatpush1.msra.mxu0 0.0
    %792 = vmatprep.subr.mxu0 0.0
    %793 = vmatpush1.msra.mxu0 0.0
    %794 = vmatprep.subr.mxu0 0.0
    %795 = vmatpush1.msra.mxu0 0.0
    %796 = vmatprep.subr.mxu0 0.0
    %797 = vmatpush1.msra.mxu0 0.0
    %798 = vmatprep.subr.mxu0 0.0
    %799 = vmatpush1.msra.mxu0 0.0
    %800 = vmatprep.subr.mxu0 0.0
    %801 = vmatpush1.msra.mxu0 0.0
    %802 = vmatprep.mubr.f32.mxu0 0.0
    %803 = vmatmul.mubr.f32.gmra.mrb[0].mxu0 %v634
    %v804 = vpop.f32.mrb[0].mxu0
    %v805 = vadd.f32 0.0, %v804
    %v806 = vpop.f32.mrb[0].mxu0
    %807 = vdwg.mxu0
    %v808 = vsel %vm145, %v733, 0
    %810 = vmatprep.subr.mxu0 0.0
    %811 = vmatpush1.msra.mxu0 %v133
    %812 = vmatprep.subr.mxu0 0.0
    %813 = vmatpush1.msra.mxu0 %v134
    %814 = vmatprep.subr.mxu0 0.0
    %815 = vmatpush1.msra.mxu0 %v135
    %816 = vmatprep.subr.mxu0 0.0
    %817 = vmatpush1.msra.mxu0 %v136
    %818 = vmatprep.subr.mxu0 0.0
    %819 = vmatpush1.msra.mxu0 0.0
    %820 = vmatprep.subr.mxu0 0.0
    %821 = vmatpush1.msra.mxu0 0.0
    %822 = vmatprep.subr.mxu0 0.0
    %823 = vmatpush1.msra.mxu0 0.0
    %824 = vmatprep.subr.mxu0 0.0
    %825 = vmatpush1.msra.mxu0 0.0
    %826 = vmatprep.subr.mxu0 0.0
    %827 = vmatpush1.msra.mxu0 0.0
    %828 = vmatprep.subr.mxu0 0.0
    %829 = vmatpush1.msra.mxu0 0.0
    %830 = vmatprep.subr.mxu0 0.0
    %831 = vmatpush1.msra.mxu0 0.0
    %832 = vmatprep.subr.mxu0 0.0
    %833 = vmatpush1.msra.mxu0 0.0
    %834 = vmatprep.subr.mxu0 0.0
    %835 = vmatpush1.msra.mxu0 0.0
    %836 = vmatprep.subr.mxu0 0.0
    %837 = vmatpush1.msra.mxu0 0.0
    %838 = vmatprep.subr.mxu0 0.0
    %839 = vmatpush1.msra.mxu0 0.0
    %840 = vmatprep.subr.mxu0 0.0
    %841 = vmatpush1.msra.mxu0 0.0
    %842 = vmatprep.subr.mxu0 0.0
    %843 = vmatpush1.msra.mxu0 0.0
    %844 = vmatprep.subr.mxu0 0.0
    %845 = vmatpush1.msra.mxu0 0.0
    %846 = vmatprep.subr.mxu0 0.0
    %847 = vmatpush1.msra.mxu0 0.0
    %848 = vmatprep.subr.mxu0 0.0
    %849 = vmatpush1.msra.mxu0 0.0
    %850 = vmatprep.subr.mxu0 0.0
    %851 = vmatpush1.msra.mxu0 0.0
    %852 = vmatprep.subr.mxu0 0.0
    %853 = vmatpush1.msra.mxu0 0.0
    %854 = vmatprep.subr.mxu0 0.0
    %855 = vmatpush1.msra.mxu0 0.0
    %856 = vmatprep.subr.mxu0 0.0
    %857 = vmatpush1.msra.mxu0 0.0
    %858 = vmatprep.subr.mxu0 0.0
    %859 = vmatpush1.msra.mxu0 0.0
    %860 = vmatprep.subr.mxu0 0.0
    %861 = vmatpush1.msra.mxu0 0.0
    %862 = vmatprep.subr.mxu0 0.0
    %863 = vmatpush1.msra.mxu0 0.0
    %864 = vmatprep.subr.mxu0 0.0
    %865 = vmatpush1.msra.mxu0 0.0
    %866 = vmatprep.subr.mxu0 0.0
    %867 = vmatpush1.msra.mxu0 0.0
    %868 = vmatprep.subr.mxu0 0.0
    %869 = vmatpush1.msra.mxu0 0.0
    %870 = vmatprep.subr.mxu0 0.0
    %871 = vmatpush1.msra.mxu0 0.0
    %872 = vmatprep.subr.mxu0 0.0
    %873 = vmatpush1.msra.mxu0 0.0
    %874 = vmatprep.mubr.f32.mxu0 0.0
    %875 = vmatmul.mubr.f32.gmra.mrb[0].mxu0 %v808
    %v876 = vpop.f32.mrb[0].mxu0
    %v877 = vadd.f32 0.0, %v876
    %v878 = vpop.f32.mrb[0].mxu0
    %879 = vdwg.mxu0
    %881 = vrot.lane.b32.xlu0 %v737, 96
    %v882 = vpop.permute.xlu0 %881
    %v884 = vmul.f32 %v730, %v882
    %v885 = vtanh.pop %v884
    %v886 = vmul.f32 %v885, 1.442695
    %v887 = vpow.pop %v886
    %v888 = vsel %vm510, %v887, 0.0
    %v889 = vrot.slane %v888, 4
    %v890 = vadd.f32 %v888, %v889
    %v891 = vrot.slane %v890, 2
    %v892 = vadd.f32 %v890, %v891
    %v893 = vrot.slane %v892, 1
    %v894 = vadd.f32 %v892, %v893
    %v895 = vrcp.pop %v894
    %v896 = vmul.f32 %v887, %v895
    %898 = vrot.lane.b32.xlu0 %v896, 32
    %v899 = vpop.permute.xlu0 %898
    %s901 = scalar_lea.vmem %s13, 4
    %902 = vst.msk [vmem:[%s901] sm:$0xf] %vm524, %v899
    %v903 = vmul.f32 %v737, %v899
    %s904 = scalar_lea.vmem %s0, 8
    %v905 = vld [vmem:[%s904] sm:$0xf]
    %v907 = vrot.slane %v903, 4
    %v909 = vsel %vm348, %v905, %v907
    %v911 = vsel %vm145, %v909, 0
    %913 = vmatprep.subr.mxu0 0.0
    %914 = vmatpush1.msra.mxu0 %v120
    %915 = vmatprep.subr.mxu0 0.0
    %916 = vmatpush1.msra.mxu0 %v121
    %917 = vmatprep.subr.mxu0 0.0
    %918 = vmatpush1.msra.mxu0 %v122
    %919 = vmatprep.subr.mxu0 0.0
    %920 = vmatpush1.msra.mxu0 %v123
    %921 = vmatprep.subr.mxu0 0.0
    %922 = vmatpush1.msra.mxu0 0.0
    %923 = vmatprep.subr.mxu0 0.0
    %924 = vmatpush1.msra.mxu0 0.0
    %925 = vmatprep.subr.mxu0 0.0
    %926 = vmatpush1.msra.mxu0 0.0
    %927 = vmatprep.subr.mxu0 0.0
    %928 = vmatpush1.msra.mxu0 0.0
    %929 = vmatprep.subr.mxu0 0.0
    %930 = vmatpush1.msra.mxu0 0.0
    %931 = vmatprep.subr.mxu0 0.0
    %932 = vmatpush1.msra.mxu0 0.0
    %933 = vmatprep.subr.mxu0 0.0
    %934 = vmatpush1.msra.mxu0 0.0
    %935 = vmatprep.subr.mxu0 0.0
    %936 = vmatpush1.msra.mxu0 0.0
    %937 = vmatprep.subr.mxu0 0.0
    %938 = vmatpush1.msra.mxu0 0.0
    %939 = vmatprep.subr.mxu0 0.0
    %940 = vmatpush1.msra.mxu0 0.0
    %941 = vmatprep.subr.mxu0 0.0
    %942 = vmatpush1.msra.mxu0 0.0
    %943 = vmatprep.subr.mxu0 0.0
    %944 = vmatpush1.msra.mxu0 0.0
    %945 = vmatprep.subr.mxu0 0.0
    %946 = vmatpush1.msra.mxu0 0.0
    %947 = vmatprep.subr.mxu0 0.0
    %948 = vmatpush1.msra.mxu0 0.0
    %949 = vmatprep.subr.mxu0 0.0
    %950 = vmatpush1.msra.mxu0 0.0
    %951 = vmatprep.subr.mxu0 0.0
    %952 = vmatpush1.msra.mxu0 0.0
    %953 = vmatprep.subr.mxu0 0.0
    %954 = vmatpush1.msra.mxu0 0.0
    %955 = vmatprep.subr.mxu0 0.0
    %956 = vmatpush1.msra.mxu0 0.0
    %957 = vmatprep.subr.mxu0 0.0
    %958 = vmatpush1.msra.mxu0 0.0
    %959 = vmatprep.subr.mxu0 0.0
    %960 = vmatpush1.msra.mxu0 0.0
    %961 = vmatprep.subr.mxu0 0.0
    %962 = vmatpush1.msra.mxu0 0.0
    %963 = vmatprep.subr.mxu0 0.0
    %964 = vmatpush1.msra.mxu0 0.0
    %965 = vmatprep.subr.mxu0 0.0
    %966 = vmatpush1.msra.mxu0 0.0
    %967 = vmatprep.subr.mxu0 0.0
    %968 = vmatpush1.msra.mxu0 0.0
    %969 = vmatprep.subr.mxu0 0.0
    %970 = vmatpush1.msra.mxu0 0.0
    %971 = vmatprep.subr.mxu0 0.0
    %972 = vmatpush1.msra.mxu0 0.0
    %973 = vmatprep.subr.mxu0 0.0
    %974 = vmatpush1.msra.mxu0 0.0
    %975 = vmatprep.subr.mxu0 0.0
    %976 = vmatpush1.msra.mxu0 0.0
    %977 = vmatprep.mubr.f32.mxu0 0.0
    %978 = vmatmul.mubr.f32.gmra.mrb[0].mxu0 %v911
    %v979 = vpop.f32.mrb[0].mxu0
    %v980 = vadd.f32 %v805, %v979
    %v981 = vpop.f32.mrb[0].mxu0
    %982 = vdwg.mxu0
    %v983 = vadd.f32 %v980, %v143
    %v984 = vxor.u32 %v983, 2147483648
    %v985 = vmul.f32 %v984, 1.442695
    %v986 = vpow.pop %v985
    %v987 = vadd.f32 %v986, 1.0
    %v988 = vrcp.pop %v987
    %v989 = vmul.f32 1.0, %v988
    %v990 = vtanh.pop %v983
    %v991 = vmul.f32 %v989, %v624
    %993 = vrot.lane.b32.xlu0 %v990, 64
    %v994 = vpop.permute.xlu0 %993
    %v996 = vmul.f32 %v989, %v994
    %998 = vrot.lane.b32.xlu0 %v996, 32
    %v999 = vpop.permute.xlu0 %998
    %v1001 = vadd.f32 %v991, %v999
    %v1002 = vtanh.pop %v1001
    %1004 = vrot.lane.b32.xlu0 %v1002, 64
    %v1005 = vpop.permute.xlu0 %1004
    %v1007 = vmul.f32 %v989, %v1005
    %1009 = vrot.lane.b32.xlu0 %v1007, 32
    %v1010 = vpop.permute.xlu0 %1009
    %v1011 = vsel %vm145, %v1010, 0
    %1013 = vmatprep.subr.mxu0 0.0
    %1014 = vmatpush1.msra.mxu0 %v129
    %1015 = vmatprep.subr.mxu0 0.0
    %1016 = vmatpush1.msra.mxu0 %v130
    %1017 = vmatprep.subr.mxu0 0.0
    %1018 = vmatpush1.msra.mxu0 %v131
    %1019 = vmatprep.subr.mxu0 0.0
    %1020 = vmatpush1.msra.mxu0 %v132
    %1021 = vmatprep.subr.mxu0 0.0
    %1022 = vmatpush1.msra.mxu0 0.0
    %1023 = vmatprep.subr.mxu0 0.0
    %1024 = vmatpush1.msra.mxu0 0.0
    %1025 = vmatprep.subr.mxu0 0.0
    %1026 = vmatpush1.msra.mxu0 0.0
    %1027 = vmatprep.subr.mxu0 0.0
    %1028 = vmatpush1.msra.mxu0 0.0
    %1029 = vmatprep.subr.mxu0 0.0
    %1030 = vmatpush1.msra.mxu0 0.0
    %1031 = vmatprep.subr.mxu0 0.0
    %1032 = vmatpush1.msra.mxu0 0.0
    %1033 = vmatprep.subr.mxu0 0.0
    %1034 = vmatpush1.msra.mxu0 0.0
    %1035 = vmatprep.subr.mxu0 0.0
    %1036 = vmatpush1.msra.mxu0 0.0
    %1037 = vmatprep.subr.mxu0 0.0
    %1038 = vmatpush1.msra.mxu0 0.0
    %1039 = vmatprep.subr.mxu0 0.0
    %1040 = vmatpush1.msra.mxu0 0.0
    %1041 = vmatprep.subr.mxu0 0.0
    %1042 = vmatpush1.msra.mxu0 0.0
    %1043 = vmatprep.subr.mxu0 0.0
    %1044 = vmatpush1.msra.mxu0 0.0
    %1045 = vmatprep.subr.mxu0 0.0
    %1046 = vmatpush1.msra.mxu0 0.0
    %1047 = vmatprep.subr.mxu0 0.0
    %1048 = vmatpush1.msra.mxu0 0.0
    %1049 = vmatprep.subr.mxu0 0.0
    %1050 = vmatpush1.msra.mxu0 0.0
    %1051 = vmatprep.subr.mxu0 0.0
    %1052 = vmatpush1.msra.mxu0 0.0
    %1053 = vmatprep.subr.mxu0 0.0
    %1054 = vmatpush1.msra.mxu0 0.0
    %1055 = vmatprep.subr.mxu0 0.0
    %1056 = vmatpush1.msra.mxu0 0.0
    %1057 = vmatprep.subr.mxu0 0.0
    %1058 = vmatpush1.msra.mxu0 0.0
    %1059 = vmatprep.subr.mxu0 0.0
    %1060 = vmatpush1.msra.mxu0 0.0
    %1061 = vmatprep.subr.mxu0 0.0
    %1062 = vmatpush1.msra.mxu0 0.0
    %1063 = vmatprep.subr.mxu0 0.0
    %1064 = vmatpush1.msra.mxu0 0.0
    %1065 = vmatprep.subr.mxu0 0.0
    %1066 = vmatpush1.msra.mxu0 0.0
    %1067 = vmatprep.subr.mxu0 0.0
    %1068 = vmatpush1.msra.mxu0 0.0
    %1069 = vmatprep.subr.mxu0 0.0
    %1070 = vmatpush1.msra.mxu0 0.0
    %1071 = vmatprep.subr.mxu0 0.0
    %1072 = vmatpush1.msra.mxu0 0.0
    %1073 = vmatprep.subr.mxu0 0.0
    %1074 = vmatpush1.msra.mxu0 0.0
    %1075 = vmatprep.subr.mxu0 0.0
    %1076 = vmatpush1.msra.mxu0 0.0
    %1077 = vmatprep.mubr.f32.mxu0 0.0
    %1078 = vmatmul.mubr.f32.gmra.mrb[0].mxu0 %v1011
    %v1079 = vpop.f32.mrb[0].mxu0
    %v1080 = vadd.f32 %v877, %v1079
    %v1081 = vpop.f32.mrb[0].mxu0
    %1082 = vdwg.mxu0
    %v1083 = vadd.f32 %v1080, %v247
    %v1084 = vxor.u32 %v1083, 2147483648
    %v1085 = vmul.f32 %v1084, 1.442695
    %v1086 = vpow.pop %v1085
    %v1087 = vadd.f32 %v1086, 1.0
    %v1088 = vrcp.pop %v1087
    %v1089 = vmul.f32 1.0, %v1088
    %v1090 = vtanh.pop %v1083
    %v1091 = vmul.f32 %v1089, %v724
    %1093 = vrot.lane.b32.xlu0 %v1090, 64
    %v1094 = vpop.permute.xlu0 %1093
    %v1096 = vmul.f32 %v1089, %v1094
    %1098 = vrot.lane.b32.xlu0 %v1096, 32
    %v1099 = vpop.permute.xlu0 %1098
    %v1101 = vadd.f32 %v1091, %v1099
    %v1102 = vtanh.pop %v1101
    %1104 = vrot.lane.b32.xlu0 %v1102, 64
    %v1105 = vpop.permute.xlu0 %1104
    %v1107 = vmul.f32 %v1089, %v1105
    %1109 = vrot.lane.b32.xlu0 %v1107, 32
    %v1110 = vpop.permute.xlu0 %1109
    %1112 = vst.msk [vmem:[#allocation2] sm:$0xf0] %vm735, %v1110
    %v1113 = vld [vmem:[%s904] sm:$0xf]
    %1114 = vmatprep.subr.mxu0 0.0
    %1115 = vmatpush1.msra.mxu0 %v124
    %1116 = vmatprep.subr.mxu0 0.0
    %1117 = vmatpush1.msra.mxu0 %v125
    %1118 = vmatprep.subr.mxu0 0.0
    %1119 = vmatpush1.msra.mxu0 %v126
    %1120 = vmatprep.subr.mxu0 0.0
    %1121 = vmatpush1.msra.mxu0 %v127
    %1122 = vmatprep.subr.mxu0 0.0
    %1123 = vmatpush1.msra.mxu0 0.0
    %1124 = vmatprep.subr.mxu0 0.0
    %1125 = vmatpush1.msra.mxu0 0.0
    %1126 = vmatprep.subr.mxu0 0.0
    %1127 = vmatpush1.msra.mxu0 0.0
    %1128 = vmatprep.subr.mxu0 0.0
    %1129 = vmatpush1.msra.mxu0 0.0
    %1130 = vmatprep.subr.mxu0 0.0
    %1131 = vmatpush1.msra.mxu0 0.0
    %1132 = vmatprep.subr.mxu0 0.0
    %1133 = vmatpush1.msra.mxu0 0.0
    %1134 = vmatprep.subr.mxu0 0.0
    %1135 = vmatpush1.msra.mxu0 0.0
    %1136 = vmatprep.subr.mxu0 0.0
    %1137 = vmatpush1.msra.mxu0 0.0
    %1138 = vmatprep.subr.mxu0 0.0
    %1139 = vmatpush1.msra.mxu0 0.0
    %1140 = vmatprep.subr.mxu0 0.0
    %1141 = vmatpush1.msra.mxu0 0.0
    %1142 = vmatprep.subr.mxu0 0.0
    %1143 = vmatpush1.msra.mxu0 0.0
    %1144 = vmatprep.subr.mxu0 0.0
    %1145 = vmatpush1.msra.mxu0 0.0
    %1146 = vmatprep.subr.mxu0 0.0
    %1147 = vmatpush1.msra.mxu0 0.0
    %1148 = vmatprep.subr.mxu0 0.0
    %1149 = vmatpush1.msra.mxu0 0.0
    %1150 = vmatprep.subr.mxu0 0.0
    %1151 = vmatpush1.msra.mxu0 0.0
    %1152 = vmatprep.subr.mxu0 0.0
    %1153 = vmatpush1.msra.mxu0 0.0
    %1154 = vmatprep.subr.mxu0 0.0
    %1155 = vmatpush1.msra.mxu0 0.0
    %1156 = vmatprep.subr.mxu0 0.0
    %1157 = vmatpush1.msra.mxu0 0.0
    %1158 = vmatprep.subr.mxu0 0.0
    %1159 = vmatpush1.msra.mxu0 0.0
    %1160 = vmatprep.subr.mxu0 0.0
    %1161 = vmatpush1.msra.mxu0 0.0
    %1162 = vmatprep.subr.mxu0 0.0
    %1163 = vmatpush1.msra.mxu0 0.0
    %1164 = vmatprep.subr.mxu0 0.0
    %1165 = vmatpush1.msra.mxu0 0.0
    %1166 = vmatprep.subr.mxu0 0.0
    %1167 = vmatpush1.msra.mxu0 0.0
    %1168 = vmatprep.subr.mxu0 0.0
    %1169 = vmatpush1.msra.mxu0 0.0
    %1170 = vmatprep.subr.mxu0 0.0
    %1171 = vmatpush1.msra.mxu0 0.0
    %1172 = vmatprep.subr.mxu0 0.0
    %1173 = vmatpush1.msra.mxu0 0.0
    %1174 = vmatprep.subr.mxu0 0.0
    %1175 = vmatpush1.msra.mxu0 0.0
    %1176 = vmatprep.subr.mxu0 0.0
    %1177 = vmatpush1.msra.mxu0 0.0
    %1178 = vmatprep.mubr.f32.mxu0 0.0
    %1179 = vmatmul.mubr.f32.gmra.mrb[0].mxu0 %v1011
    %v1180 = vpop.f32.mrb[0].mxu0
    %v1181 = vadd.f32 0.0, %v1180
    %v1182 = vpop.f32.mrb[0].mxu0
    %1183 = vdwg.mxu0
    %v1184 = vsel %vm145, %v1110, 0
    %1186 = vmatprep.subr.mxu0 0.0
    %1187 = vmatpush1.msra.mxu0 %v133
    %1188 = vmatprep.subr.mxu0 0.0
    %1189 = vmatpush1.msra.mxu0 %v134
    %1190 = vmatprep.subr.mxu0 0.0
    %1191 = vmatpush1.msra.mxu0 %v135
    %1192 = vmatprep.subr.mxu0 0.0
    %1193 = vmatpush1.msra.mxu0 %v136
    %1194 = vmatprep.subr.mxu0 0.0
    %1195 = vmatpush1.msra.mxu0 0.0
    %1196 = vmatprep.subr.mxu0 0.0
    %1197 = vmatpush1.msra.mxu0 0.0
    %1198 = vmatprep.subr.mxu0 0.0
    %1199 = vmatpush1.msra.mxu0 0.0
    %1200 = vmatprep.subr.mxu0 0.0
    %1201 = vmatpush1.msra.mxu0 0.0
    %1202 = vmatprep.subr.mxu0 0.0
    %1203 = vmatpush1.msra.mxu0 0.0
    %1204 = vmatprep.subr.mxu0 0.0
    %1205 = vmatpush1.msra.mxu0 0.0
    %1206 = vmatprep.subr.mxu0 0.0
    %1207 = vmatpush1.msra.mxu0 0.0
    %1208 = vmatprep.subr.mxu0 0.0
    %1209 = vmatpush1.msra.mxu0 0.0
    %1210 = vmatprep.subr.mxu0 0.0
    %1211 = vmatpush1.msra.mxu0 0.0
    %1212 = vmatprep.subr.mxu0 0.0
    %1213 = vmatpush1.msra.mxu0 0.0
    %1214 = vmatprep.subr.mxu0 0.0
    %1215 = vmatpush1.msra.mxu0 0.0
    %1216 = vmatprep.subr.mxu0 0.0
    %1217 = vmatpush1.msra.mxu0 0.0
    %1218 = vmatprep.subr.mxu0 0.0
    %1219 = vmatpush1.msra.mxu0 0.0
    %1220 = vmatprep.subr.mxu0 0.0
    %1221 = vmatpush1.msra.mxu0 0.0
    %1222 = vmatprep.subr.mxu0 0.0
    %1223 = vmatpush1.msra.mxu0 0.0
    %1224 = vmatprep.subr.mxu0 0.0
    %1225 = vmatpush1.msra.mxu0 0.0
    %1226 = vmatprep.subr.mxu0 0.0
    %1227 = vmatpush1.msra.mxu0 0.0
    %1228 = vmatprep.subr.mxu0 0.0
    %1229 = vmatpush1.msra.mxu0 0.0
    %1230 = vmatprep.subr.mxu0 0.0
    %1231 = vmatpush1.msra.mxu0 0.0
    %1232 = vmatprep.subr.mxu0 0.0
    %1233 = vmatpush1.msra.mxu0 0.0
    %1234 = vmatprep.subr.mxu0 0.0
    %1235 = vmatpush1.msra.mxu0 0.0
    %1236 = vmatprep.subr.mxu0 0.0
    %1237 = vmatpush1.msra.mxu0 0.0
    %1238 = vmatprep.subr.mxu0 0.0
    %1239 = vmatpush1.msra.mxu0 0.0
    %1240 = vmatprep.subr.mxu0 0.0
    %1241 = vmatpush1.msra.mxu0 0.0
    %1242 = vmatprep.subr.mxu0 0.0
    %1243 = vmatpush1.msra.mxu0 0.0
    %1244 = vmatprep.subr.mxu0 0.0
    %1245 = vmatpush1.msra.mxu0 0.0
    %1246 = vmatprep.subr.mxu0 0.0
    %1247 = vmatpush1.msra.mxu0 0.0
    %1248 = vmatprep.subr.mxu0 0.0
    %1249 = vmatpush1.msra.mxu0 0.0
    %1250 = vmatprep.mubr.f32.mxu0 0.0
    %1251 = vmatmul.mubr.f32.gmra.mrb[0].mxu0 %v1184
    %v1252 = vpop.f32.mrb[0].mxu0
    %v1253 = vadd.f32 0.0, %v1252
    %v1254 = vpop.f32.mrb[0].mxu0
    %1255 = vdwg.mxu0
    %1257 = vrot.lane.b32.xlu0 %v1113, 96
    %v1258 = vpop.permute.xlu0 %1257
    %v1260 = vmul.f32 %v1107, %v1258
    %v1261 = vtanh.pop %v1260
    %v1262 = vmul.f32 %v1261, 1.442695
    %v1263 = vpow.pop %v1262
    %v1264 = vsel %vm510, %v1263, 0.0
    %v1265 = vrot.slane %v1264, 4
    %v1266 = vadd.f32 %v1264, %v1265
    %v1267 = vrot.slane %v1266, 2
    %v1268 = vadd.f32 %v1266, %v1267
    %v1269 = vrot.slane %v1268, 1
    %v1270 = vadd.f32 %v1268, %v1269
    %v1271 = vrcp.pop %v1270
    %v1272 = vmul.f32 %v1263, %v1271
    %1274 = vrot.lane.b32.xlu0 %v1272, 32
    %v1275 = vpop.permute.xlu0 %1274
    %s1277 = scalar_lea.vmem %s13, 8
    %1278 = vst.msk [vmem:[%s1277] sm:$0xf] %vm524, %v1275
    %v1279 = vmul.f32 %v1113, %v1275
    %s1280 = scalar_lea.vmem %s0, 12
    %v1281 = vld [vmem:[%s1280] sm:$0xf]
    %v1283 = vrot.slane %v1279, 4
    %v1285 = vsel %vm348, %v1281, %v1283
    %v1287 = vsel %vm145, %v1285, 0
    %1289 = vmatprep.subr.mxu0 0.0
    %1290 = vmatpush1.msra.mxu0 %v120
    %1291 = vmatprep.subr.mxu0 0.0
    %1292 = vmatpush1.msra.mxu0 %v121
    %1293 = vmatprep.subr.mxu0 0.0
    %1294 = vmatpush1.msra.mxu0 %v122
    %1295 = vmatprep.subr.mxu0 0.0
    %1296 = vmatpush1.msra.mxu0 %v123
    %1297 = vmatprep.subr.mxu0 0.0
    %1298 = vmatpush1.msra.mxu0 0.0
    %1299 = vmatprep.subr.mxu0 0.0
    %1300 = vmatpush1.msra.mxu0 0.0
    %1301 = vmatprep.subr.mxu0 0.0
    %1302 = vmatpush1.msra.mxu0 0.0
    %1303 = vmatprep.subr.mxu0 0.0
    %1304 = vmatpush1.msra.mxu0 0.0
    %1305 = vmatprep.subr.mxu0 0.0
    %1306 = vmatpush1.msra.mxu0 0.0
    %1307 = vmatprep.subr.mxu0 0.0
    %1308 = vmatpush1.msra.mxu0 0.0
    %1309 = vmatprep.subr.mxu0 0.0
    %1310 = vmatpush1.msra.mxu0 0.0
    %1311 = vmatprep.subr.mxu0 0.0
    %1312 = vmatpush1.msra.mxu0 0.0
    %1313 = vmatprep.subr.mxu0 0.0
    %1314 = vmatpush1.msra.mxu0 0.0
    %1315 = vmatprep.subr.mxu0 0.0
    %1316 = vmatpush1.msra.mxu0 0.0
    %1317 = vmatprep.subr.mxu0 0.0
    %1318 = vmatpush1.msra.mxu0 0.0
    %1319 = vmatprep.subr.mxu0 0.0
    %1320 = vmatpush1.msra.mxu0 0.0
    %1321 = vmatprep.subr.mxu0 0.0
    %1322 = vmatpush1.msra.mxu0 0.0
    %1323 = vmatprep.subr.mxu0 0.0
    %1324 = vmatpush1.msra.mxu0 0.0
    %1325 = vmatprep.subr.mxu0 0.0
    %1326 = vmatpush1.msra.mxu0 0.0
    %1327 = vmatprep.subr.mxu0 0.0
    %1328 = vmatpush1.msra.mxu0 0.0
    %1329 = vmatprep.subr.mxu0 0.0
    %1330 = vmatpush1.msra.mxu0 0.0
    %1331 = vmatprep.subr.mxu0 0.0
    %1332 = vmatpush1.msra.mxu0 0.0
    %1333 = vmatprep.subr.mxu0 0.0
    %1334 = vmatpush1.msra.mxu0 0.0
    %1335 = vmatprep.subr.mxu0 0.0
    %1336 = vmatpush1.msra.mxu0 0.0
    %1337 = vmatprep.subr.mxu0 0.0
    %1338 = vmatpush1.msra.mxu0 0.0
    %1339 = vmatprep.subr.mxu0 0.0
    %1340 = vmatpush1.msra.mxu0 0.0
    %1341 = vmatprep.subr.mxu0 0.0
    %1342 = vmatpush1.msra.mxu0 0.0
    %1343 = vmatprep.subr.mxu0 0.0
    %1344 = vmatpush1.msra.mxu0 0.0
    %1345 = vmatprep.subr.mxu0 0.0
    %1346 = vmatpush1.msra.mxu0 0.0
    %1347 = vmatprep.subr.mxu0 0.0
    %1348 = vmatpush1.msra.mxu0 0.0
    %1349 = vmatprep.subr.mxu0 0.0
    %1350 = vmatpush1.msra.mxu0 0.0
    %1351 = vmatprep.subr.mxu0 0.0
    %1352 = vmatpush1.msra.mxu0 0.0
    %1353 = vmatprep.mubr.f32.mxu0 0.0
    %1354 = vmatmul.mubr.f32.gmra.mrb[0].mxu0 %v1287
    %v1355 = vpop.f32.mrb[0].mxu0
    %v1356 = vadd.f32 %v1181, %v1355
    %v1357 = vpop.f32.mrb[0].mxu0
    %1358 = vdwg.mxu0
    %v1359 = vadd.f32 %v1356, %v143
    %v1360 = vxor.u32 %v1359, 2147483648
    %v1361 = vmul.f32 %v1360, 1.442695
    %v1362 = vpow.pop %v1361
    %v1363 = vadd.f32 %v1362, 1.0
    %v1364 = vrcp.pop %v1363
    %v1365 = vmul.f32 1.0, %v1364
    %v1366 = vtanh.pop %v1359
    %v1367 = vmul.f32 %v1365, %v1001
    %1369 = vrot.lane.b32.xlu0 %v1366, 64
    %v1370 = vpop.permute.xlu0 %1369
    %v1372 = vmul.f32 %v1365, %v1370
    %1374 = vrot.lane.b32.xlu0 %v1372, 32
    %v1375 = vpop.permute.xlu0 %1374
    %v1377 = vadd.f32 %v1367, %v1375
    %v1378 = vtanh.pop %v1377
    %1380 = vrot.lane.b32.xlu0 %v1378, 64
    %v1381 = vpop.permute.xlu0 %1380
    %v1383 = vmul.f32 %v1365, %v1381
    %1385 = vrot.lane.b32.xlu0 %v1383, 32
    %v1386 = vpop.permute.xlu0 %1385
    %v1387 = vsel %vm145, %v1386, 0
    %1389 = vmatprep.subr.mxu0 0.0
    %1390 = vmatpush1.msra.mxu0 %v129
    %1391 = vmatprep.subr.mxu0 0.0
    %1392 = vmatpush1.msra.mxu0 %v130
    %1393 = vmatprep.subr.mxu0 0.0
    %1394 = vmatpush1.msra.mxu0 %v131
    %1395 = vmatprep.subr.mxu0 0.0
    %1396 = vmatpush1.msra.mxu0 %v132
    %1397 = vmatprep.subr.mxu0 0.0
    %1398 = vmatpush1.msra.mxu0 0.0
    %1399 = vmatprep.subr.mxu0 0.0
    %1400 = vmatpush1.msra.mxu0 0.0
    %1401 = vmatprep.subr.mxu0 0.0
    %1402 = vmatpush1.msra.mxu0 0.0
    %1403 = vmatprep.subr.mxu0 0.0
    %1404 = vmatpush1.msra.mxu0 0.0
    %1405 = vmatprep.subr.mxu0 0.0
    %1406 = vmatpush1.msra.mxu0 0.0
    %1407 = vmatprep.subr.mxu0 0.0
    %1408 = vmatpush1.msra.mxu0 0.0
    %1409 = vmatprep.subr.mxu0 0.0
    %1410 = vmatpush1.msra.mxu0 0.0
    %1411 = vmatprep.subr.mxu0 0.0
    %1412 = vmatpush1.msra.mxu0 0.0
    %1413 = vmatprep.subr.mxu0 0.0
    %1414 = vmatpush1.msra.mxu0 0.0
    %1415 = vmatprep.subr.mxu0 0.0
    %1416 = vmatpush1.msra.mxu0 0.0
    %1417 = vmatprep.subr.mxu0 0.0
    %1418 = vmatpush1.msra.mxu0 0.0
    %1419 = vmatprep.subr.mxu0 0.0
    %1420 = vmatpush1.msra.mxu0 0.0
    %1421 = vmatprep.subr.mxu0 0.0
    %1422 = vmatpush1.msra.mxu0 0.0
    %1423 = vmatprep.subr.mxu0 0.0
    %1424 = vmatpush1.msra.mxu0 0.0
    %1425 = vmatprep.subr.mxu0 0.0
    %1426 = vmatpush1.msra.mxu0 0.0
    %1427 = vmatprep.subr.mxu0 0.0
    %1428 = vmatpush1.msra.mxu0 0.0
    %1429 = vmatprep.subr.mxu0 0.0
    %1430 = vmatpush1.msra.mxu0 0.0
    %1431 = vmatprep.subr.mxu0 0.0
    %1432 = vmatpush1.msra.mxu0 0.0
    %1433 = vmatprep.subr.mxu0 0.0
    %1434 = vmatpush1.msra.mxu0 0.0
    %1435 = vmatprep.subr.mxu0 0.0
    %1436 = vmatpush1.msra.mxu0 0.0
    %1437 = vmatprep.subr.mxu0 0.0
    %1438 = vmatpush1.msra.mxu0 0.0
    %1439 = vmatprep.subr.mxu0 0.0
    %1440 = vmatpush1.msra.mxu0 0.0
    %1441 = vmatprep.subr.mxu0 0.0
    %1442 = vmatpush1.msra.mxu0 0.0
    %1443 = vmatprep.subr.mxu0 0.0
    %1444 = vmatpush1.msra.mxu0 0.0
    %1445 = vmatprep.subr.mxu0 0.0
    %1446 = vmatpush1.msra.mxu0 0.0
    %1447 = vmatprep.subr.mxu0 0.0
    %1448 = vmatpush1.msra.mxu0 0.0
    %1449 = vmatprep.subr.mxu0 0.0
    %1450 = vmatpush1.msra.mxu0 0.0
    %1451 = vmatprep.subr.mxu0 0.0
    %1452 = vmatpush1.msra.mxu0 0.0
    %1453 = vmatprep.mubr.f32.mxu0 0.0
    %1454 = vmatmul.mubr.f32.gmra.mrb[0].mxu0 %v1387
    %v1455 = vpop.f32.mrb[0].mxu0
    %v1456 = vadd.f32 %v1253, %v1455
    %v1457 = vpop.f32.mrb[0].mxu0
    %1458 = vdwg.mxu0
    %v1459 = vadd.f32 %v1456, %v247
    %v1460 = vxor.u32 %v1459, 2147483648
    %v1461 = vmul.f32 %v1460, 1.442695
    %v1462 = vpow.pop %v1461
    %v1463 = vadd.f32 %v1462, 1.0
    %v1464 = vrcp.pop %v1463
    %v1465 = vmul.f32 1.0, %v1464
    %v1466 = vtanh.pop %v1459
    %v1467 = vmul.f32 %v1465, %v1101
    %1469 = vrot.lane.b32.xlu0 %v1466, 64
    %v1470 = vpop.permute.xlu0 %1469
    %v1472 = vmul.f32 %v1465, %v1470
    %1474 = vrot.lane.b32.xlu0 %v1472, 32
    %v1475 = vpop.permute.xlu0 %1474
    %v1477 = vadd.f32 %v1467, %v1475
    %v1478 = vtanh.pop %v1477
    %1480 = vrot.lane.b32.xlu0 %v1478, 64
    %v1481 = vpop.permute.xlu0 %1480
    %v1483 = vmul.f32 %v1465, %v1481
    %1485 = vrot.lane.b32.xlu0 %v1483, 32
    %v1486 = vpop.permute.xlu0 %1485
    %1488 = vst.msk [vmem:[#allocation2 + $0x4] sm:$0xf0] %vm735, %v1486
    %v1489 = vld [vmem:[%s1280] sm:$0xf]
    %1490 = vmatprep.subr.mxu0 0.0
    %1491 = vmatpush1.msra.mxu0 %v124
    %1492 = vmatprep.subr.mxu0 0.0
    %1493 = vmatpush1.msra.mxu0 %v125
    %1494 = vmatprep.subr.mxu0 0.0
    %1495 = vmatpush1.msra.mxu0 %v126
    %1496 = vmatprep.subr.mxu0 0.0
    %1497 = vmatpush1.msra.mxu0 %v127
    %1498 = vmatprep.subr.mxu0 0.0
    %1499 = vmatpush1.msra.mxu0 0.0
    %1500 = vmatprep.subr.mxu0 0.0
    %1501 = vmatpush1.msra.mxu0 0.0
    %1502 = vmatprep.subr.mxu0 0.0
    %1503 = vmatpush1.msra.mxu0 0.0
    %1504 = vmatprep.subr.mxu0 0.0
    %1505 = vmatpush1.msra.mxu0 0.0
    %1506 = vmatprep.subr.mxu0 0.0
    %1507 = vmatpush1.msra.mxu0 0.0
    %1508 = vmatprep.subr.mxu0 0.0
    %1509 = vmatpush1.msra.mxu0 0.0
    %1510 = vmatprep.subr.mxu0 0.0
    %1511 = vmatpush1.msra.mxu0 0.0
    %1512 = vmatprep.subr.mxu0 0.0
    %1513 = vmatpush1.msra.mxu0 0.0
    %1514 = vmatprep.subr.mxu0 0.0
    %1515 = vmatpush1.msra.mxu0 0.0
    %1516 = vmatprep.subr.mxu0 0.0
    %1517 = vmatpush1.msra.mxu0 0.0
    %1518 = vmatprep.subr.mxu0 0.0
    %1519 = vmatpush1.msra.mxu0 0.0
    %1520 = vmatprep.subr.mxu0 0.0
    %1521 = vmatpush1.msra.mxu0 0.0
    %1522 = vmatprep.subr.mxu0 0.0
    %1523 = vmatpush1.msra.mxu0 0.0
    %1524 = vmatprep.subr.mxu0 0.0
    %1525 = vmatpush1.msra.mxu0 0.0
    %1526 = vmatprep.subr.mxu0 0.0
    %1527 = vmatpush1.msra.mxu0 0.0
    %1528 = vmatprep.subr.mxu0 0.0
    %1529 = vmatpush1.msra.mxu0 0.0
    %1530 = vmatprep.subr.mxu0 0.0
    %1531 = vmatpush1.msra.mxu0 0.0
    %1532 = vmatprep.subr.mxu0 0.0
    %1533 = vmatpush1.msra.mxu0 0.0
    %1534 = vmatprep.subr.mxu0 0.0
    %1535 = vmatpush1.msra.mxu0 0.0
    %1536 = vmatprep.subr.mxu0 0.0
    %1537 = vmatpush1.msra.mxu0 0.0
    %1538 = vmatprep.subr.mxu0 0.0
    %1539 = vmatpush1.msra.mxu0 0.0
    %1540 = vmatprep.subr.mxu0 0.0
    %1541 = vmatpush1.msra.mxu0 0.0
    %1542 = vmatprep.subr.mxu0 0.0
    %1543 = vmatpush1.msra.mxu0 0.0
    %1544 = vmatprep.subr.mxu0 0.0
    %1545 = vmatpush1.msra.mxu0 0.0
    %1546 = vmatprep.subr.mxu0 0.0
    %1547 = vmatpush1.msra.mxu0 0.0
    %1548 = vmatprep.subr.mxu0 0.0
    %1549 = vmatpush1.msra.mxu0 0.0
    %1550 = vmatprep.subr.mxu0 0.0
    %1551 = vmatpush1.msra.mxu0 0.0
    %1552 = vmatprep.subr.mxu0 0.0
    %1553 = vmatpush1.msra.mxu0 0.0
    %1554 = vmatprep.mubr.f32.mxu0 0.0
    %1555 = vmatmul.mubr.f32.gmra.mrb[0].mxu0 %v1387
    %v1556 = vpop.f32.mrb[0].mxu0
    %v1557 = vadd.f32 0.0, %v1556
    %v1558 = vpop.f32.mrb[0].mxu0
    %1559 = vdwg.mxu0
    %v1560 = vsel %vm145, %v1486, 0
    %1562 = vmatprep.subr.mxu0 0.0
    %1563 = vmatpush1.msra.mxu0 %v133
    %1564 = vmatprep.subr.mxu0 0.0
    %1565 = vmatpush1.msra.mxu0 %v134
    %1566 = vmatprep.subr.mxu0 0.0
    %1567 = vmatpush1.msra.mxu0 %v135
    %1568 = vmatprep.subr.mxu0 0.0
    %1569 = vmatpush1.msra.mxu0 %v136
    %1570 = vmatprep.subr.mxu0 0.0
    %1571 = vmatpush1.msra.mxu0 0.0
    %1572 = vmatprep.subr.mxu0 0.0
    %1573 = vmatpush1.msra.mxu0 0.0
    %1574 = vmatprep.subr.mxu0 0.0
    %1575 = vmatpush1.msra.mxu0 0.0
    %1576 = vmatprep.subr.mxu0 0.0
    %1577 = vmatpush1.msra.mxu0 0.0
    %1578 = vmatprep.subr.mxu0 0.0
    %1579 = vmatpush1.msra.mxu0 0.0
    %1580 = vmatprep.subr.mxu0 0.0
    %1581 = vmatpush1.msra.mxu0 0.0
    %1582 = vmatprep.subr.mxu0 0.0
    %1583 = vmatpush1.msra.mxu0 0.0
    %1584 = vmatprep.subr.mxu0 0.0
    %1585 = vmatpush1.msra.mxu0 0.0
    %1586 = vmatprep.subr.mxu0 0.0
    %1587 = vmatpush1.msra.mxu0 0.0
    %1588 = vmatprep.subr.mxu0 0.0
    %1589 = vmatpush1.msra.mxu0 0.0
    %1590 = vmatprep.subr.mxu0 0.0
    %1591 = vmatpush1.msra.mxu0 0.0
    %1592 = vmatprep.subr.mxu0 0.0
    %1593 = vmatpush1.msra.mxu0 0.0
    %1594 = vmatprep.subr.mxu0 0.0
    %1595 = vmatpush1.msra.mxu0 0.0
    %1596 = vmatprep.subr.mxu0 0.0
    %1597 = vmatpush1.msra.mxu0 0.0
    %1598 = vmatprep.subr.mxu0 0.0
    %1599 = vmatpush1.msra.mxu0 0.0
    %1600 = vmatprep.subr.mxu0 0.0
    %1601 = vmatpush1.msra.mxu0 0.0
    %1602 = vmatprep.subr.mxu0 0.0
    %1603 = vmatpush1.msra.mxu0 0.0
    %1604 = vmatprep.subr.mxu0 0.0
    %1605 = vmatpush1.msra.mxu0 0.0
    %1606 = vmatprep.subr.mxu0 0.0
    %1607 = vmatpush1.msra.mxu0 0.0
    %1608 = vmatprep.subr.mxu0 0.0
    %1609 = vmatpush1.msra.mxu0 0.0
    %1610 = vmatprep.subr.mxu0 0.0
    %1611 = vmatpush1.msra.mxu0 0.0
    %1612 = vmatprep.subr.mxu0 0.0
    %1613 = vmatpush1.msra.mxu0 0.0
    %1614 = vmatprep.subr.mxu0 0.0
    %1615 = vmatpush1.msra.mxu0 0.0
    %1616 = vmatprep.subr.mxu0 0.0
    %1617 = vmatpush1.msra.mxu0 0.0
    %1618 = vmatprep.subr.mxu0 0.0
    %1619 = vmatpush1.msra.mxu0 0.0
    %1620 = vmatprep.subr.mxu0 0.0
    %1621 = vmatpush1.msra.mxu0 0.0
    %1622 = vmatprep.subr.mxu0 0.0
    %1623 = vmatpush1.msra.mxu0 0.0
    %1624 = vmatprep.subr.mxu0 0.0
    %1625 = vmatpush1.msra.mxu0 0.0
    %1626 = vmatprep.mubr.f32.mxu0 0.0
    %1627 = vmatmul.mubr.f32.gmra.mrb[0].mxu0 %v1560
    %v1628 = vpop.f32.mrb[0].mxu0
    %v1629 = vadd.f32 0.0, %v1628
    %v1630 = vpop.f32.mrb[0].mxu0
    %1631 = vdwg.mxu0
    %1633 = vrot.lane.b32.xlu0 %v1489, 96
    %v1634 = vpop.permute.xlu0 %1633
    %v1636 = vmul.f32 %v1483, %v1634
    %v1637 = vtanh.pop %v1636
    %v1638 = vmul.f32 %v1637, 1.442695
    %v1639 = vpow.pop %v1638
    %v1640 = vsel %vm510, %v1639, 0.0
    %v1641 = vrot.slane %v1640, 4
    %v1642 = vadd.f32 %v1640, %v1641
    %v1643 = vrot.slane %v1642, 2
    %v1644 = vadd.f32 %v1642, %v1643
    %v1645 = vrot.slane %v1644, 1
    %v1646 = vadd.f32 %v1644, %v1645
    %v1647 = vrcp.pop %v1646
    %v1648 = vmul.f32 %v1639, %v1647
    %1650 = vrot.lane.b32.xlu0 %v1648, 32
    %v1651 = vpop.permute.xlu0 %1650
    %s1653 = scalar_lea.vmem %s13, 12
    %1654 = vst.msk [vmem:[%s1653] sm:$0xf] %vm524, %v1651
    %v1655 = vmul.f32 %v1489, %v1651
    %s1656 = scalar_lea.vmem %s0, 16
    %v1657 = vld [vmem:[%s1656] sm:$0xf]
    %v1659 = vrot.slane %v1655, 4
    %v1661 = vsel %vm348, %v1657, %v1659
    %v1663 = vsel %vm145, %v1661, 0
    %1665 = vmatprep.subr.mxu0 0.0
    %1666 = vmatpush1.msra.mxu0 %v120
    %1667 = vmatprep.subr.mxu0 0.0
    %1668 = vmatpush1.msra.mxu0 %v121
    %1669 = vmatprep.subr.mxu0 0.0
    %1670 = vmatpush1.msra.mxu0 %v122
    %1671 = vmatprep.subr.mxu0 0.0
    %1672 = vmatpush1.msra.mxu0 %v123
    %1673 = vmatprep.subr.mxu0 0.0
    %1674 = vmatpush1.msra.mxu0 0.0
    %1675 = vmatprep.subr.mxu0 0.0
    %1676 = vmatpush1.msra.mxu0 0.0
    %1677 = vmatprep.subr.mxu0 0.0
    %1678 = vmatpush1.msra.mxu0 0.0
    %1679 = vmatprep.subr.mxu0 0.0
    %1680 = vmatpush1.msra.mxu0 0.0
    %1681 = vmatprep.subr.mxu0 0.0
    %1682 = vmatpush1.msra.mxu0 0.0
    %1683 = vmatprep.subr.mxu0 0.0
    %1684 = vmatpush1.msra.mxu0 0.0
    %1685 = vmatprep.subr.mxu0 0.0
    %1686 = vmatpush1.msra.mxu0 0.0
    %1687 = vmatprep.subr.mxu0 0.0
    %1688 = vmatpush1.msra.mxu0 0.0
    %1689 = vmatprep.subr.mxu0 0.0
    %1690 = vmatpush1.msra.mxu0 0.0
    %1691 = vmatprep.subr.mxu0 0.0
    %1692 = vmatpush1.msra.mxu0 0.0
    %1693 = vmatprep.subr.mxu0 0.0
    %1694 = vmatpush1.msra.mxu0 0.0
    %1695 = vmatprep.subr.mxu0 0.0
    %1696 = vmatpush1.msra.mxu0 0.0
    %1697 = vmatprep.subr.mxu0 0.0
    %1698 = vmatpush1.msra.mxu0 0.0
    %1699 = vmatprep.subr.mxu0 0.0
    %1700 = vmatpush1.msra.mxu0 0.0
    %1701 = vmatprep.subr.mxu0 0.0
    %1702 = vmatpush1.msra.mxu0 0.0
    %1703 = vmatprep.subr.mxu0 0.0
    %1704 = vmatpush1.msra.mxu0 0.0
    %1705 = vmatprep.subr.mxu0 0.0
    %1706 = vmatpush1.msra.mxu0 0.0
    %1707 = vmatprep.subr.mxu0 0.0
    %1708 = vmatpush1.msra.mxu0 0.0
    %1709 = vmatprep.subr.mxu0 0.0
    %1710 = vmatpush1.msra.mxu0 0.0
    %1711 = vmatprep.subr.mxu0 0.0
    %1712 = vmatpush1.msra.mxu0 0.0
    %1713 = vmatprep.subr.mxu0 0.0
    %1714 = vmatpush1.msra.mxu0 0.0
    %1715 = vmatprep.subr.mxu0 0.0
    %1716 = vmatpush1.msra.mxu0 0.0
    %1717 = vmatprep.subr.mxu0 0.0
    %1718 = vmatpush1.msra.mxu0 0.0
    %1719 = vmatprep.subr.mxu0 0.0
    %1720 = vmatpush1.msra.mxu0 0.0
    %1721 = vmatprep.subr.mxu0 0.0
    %1722 = vmatpush1.msra.mxu0 0.0
    %1723 = vmatprep.subr.mxu0 0.0
    %1724 = vmatpush1.msra.mxu0 0.0
    %1725 = vmatprep.subr.mxu0 0.0
    %1726 = vmatpush1.msra.mxu0 0.0
    %1727 = vmatprep.subr.mxu0 0.0
    %1728 = vmatpush1.msra.mxu0 0.0
    %1729 = vmatprep.mubr.f32.mxu0 0.0
    %1730 = vmatmul.mubr.f32.gmra.mrb[0].mxu0 %v1663
    %v1731 = vpop.f32.mrb[0].mxu0
    %v1732 = vadd.f32 %v1557, %v1731
    %v1733 = vpop.f32.mrb[0].mxu0
    %1734 = vdwg.mxu0
    %v1735 = vadd.f32 %v1732, %v143
    %v1736 = vxor.u32 %v1735, 2147483648
    %v1737 = vmul.f32 %v1736, 1.442695
    %v1738 = vpow.pop %v1737
    %v1739 = vadd.f32 %v1738, 1.0
    %v1740 = vrcp.pop %v1739
    %v1741 = vmul.f32 1.0, %v1740
    %v1742 = vtanh.pop %v1735
    %v1743 = vmul.f32 %v1741, %v1377
    %1745 = vrot.lane.b32.xlu0 %v1742, 64
    %v1746 = vpop.permute.xlu0 %1745
    %v1748 = vmul.f32 %v1741, %v1746
    %1750 = vrot.lane.b32.xlu0 %v1748, 32
    %v1751 = vpop.permute.xlu0 %1750
    %v1753 = vadd.f32 %v1743, %v1751
    %v1754 = vtanh.pop %v1753
    %1756 = vrot.lane.b32.xlu0 %v1754, 64
    %v1757 = vpop.permute.xlu0 %1756
    %v1759 = vmul.f32 %v1741, %v1757
    %1761 = vrot.lane.b32.xlu0 %v1759, 32
    %v1762 = vpop.permute.xlu0 %1761
    %v1763 = vsel %vm145, %v1762, 0
    %1765 = vmatprep.subr.mxu0 0.0
    %1766 = vmatpush1.msra.mxu0 %v129
    %1767 = vmatprep.subr.mxu0 0.0
    %1768 = vmatpush1.msra.mxu0 %v130
    %1769 = vmatprep.subr.mxu0 0.0
    %1770 = vmatpush1.msra.mxu0 %v131
    %1771 = vmatprep.subr.mxu0 0.0
    %1772 = vmatpush1.msra.mxu0 %v132
    %1773 = vmatprep.subr.mxu0 0.0
    %1774 = vmatpush1.msra.mxu0 0.0
    %1775 = vmatprep.subr.mxu0 0.0
    %1776 = vmatpush1.msra.mxu0 0.0
    %1777 = vmatprep.subr.mxu0 0.0
    %1778 = vmatpush1.msra.mxu0 0.0
    %1779 = vmatprep.subr.mxu0 0.0
    %1780 = vmatpush1.msra.mxu0 0.0
    %1781 = vmatprep.subr.mxu0 0.0
    %1782 = vmatpush1.msra.mxu0 0.0
    %1783 = vmatprep.subr.mxu0 0.0
    %1784 = vmatpush1.msra.mxu0 0.0
    %1785 = vmatprep.subr.mxu0 0.0
    %1786 = vmatpush1.msra.mxu0 0.0
    %1787 = vmatprep.subr.mxu0 0.0
    %1788 = vmatpush1.msra.mxu0 0.0
    %1789 = vmatprep.subr.mxu0 0.0
    %1790 = vmatpush1.msra.mxu0 0.0
    %1791 = vmatprep.subr.mxu0 0.0
    %1792 = vmatpush1.msra.mxu0 0.0
    %1793 = vmatprep.subr.mxu0 0.0
    %1794 = vmatpush1.msra.mxu0 0.0
    %1795 = vmatprep.subr.mxu0 0.0
    %1796 = vmatpush1.msra.mxu0 0.0
    %1797 = vmatprep.subr.mxu0 0.0
    %1798 = vmatpush1.msra.mxu0 0.0
    %1799 = vmatprep.subr.mxu0 0.0
    %1800 = vmatpush1.msra.mxu0 0.0
    %1801 = vmatprep.subr.mxu0 0.0
    %1802 = vmatpush1.msra.mxu0 0.0
    %1803 = vmatprep.subr.mxu0 0.0
    %1804 = vmatpush1.msra.mxu0 0.0
    %1805 = vmatprep.subr.mxu0 0.0
    %1806 = vmatpush1.msra.mxu0 0.0
    %1807 = vmatprep.subr.mxu0 0.0
    %1808 = vmatpush1.msra.mxu0 0.0
    %1809 = vmatprep.subr.mxu0 0.0
    %1810 = vmatpush1.msra.mxu0 0.0
    %1811 = vmatprep.subr.mxu0 0.0
    %1812 = vmatpush1.msra.mxu0 0.0
    %1813 = vmatprep.subr.mxu0 0.0
    %1814 = vmatpush1.msra.mxu0 0.0
    %1815 = vmatprep.subr.mxu0 0.0
    %1816 = vmatpush1.msra.mxu0 0.0
    %1817 = vmatprep.subr.mxu0 0.0
    %1818 = vmatpush1.msra.mxu0 0.0
    %1819 = vmatprep.subr.mxu0 0.0
    %1820 = vmatpush1.msra.mxu0 0.0
    %1821 = vmatprep.subr.mxu0 0.0
    %1822 = vmatpush1.msra.mxu0 0.0
    %1823 = vmatprep.subr.mxu0 0.0
    %1824 = vmatpush1.msra.mxu0 0.0
    %1825 = vmatprep.subr.mxu0 0.0
    %1826 = vmatpush1.msra.mxu0 0.0
    %1827 = vmatprep.subr.mxu0 0.0
    %1828 = vmatpush1.msra.mxu0 0.0
    %1829 = vmatprep.mubr.f32.mxu0 0.0
    %1830 = vmatmul.mubr.f32.gmra.mrb[0].mxu0 %v1763
    %v1831 = vpop.f32.mrb[0].mxu0
    %v1832 = vadd.f32 %v1629, %v1831
    %v1833 = vpop.f32.mrb[0].mxu0
    %1834 = vdwg.mxu0
    %v1835 = vadd.f32 %v1832, %v247
    %v1836 = vxor.u32 %v1835, 2147483648
    %v1837 = vmul.f32 %v1836, 1.442695
    %v1838 = vpow.pop %v1837
    %v1839 = vadd.f32 %v1838, 1.0
    %v1840 = vrcp.pop %v1839
    %v1841 = vmul.f32 1.0, %v1840
    %v1842 = vtanh.pop %v1835
    %v1843 = vmul.f32 %v1841, %v1477
    %1845 = vrot.lane.b32.xlu0 %v1842, 64
    %v1846 = vpop.permute.xlu0 %1845
    %v1848 = vmul.f32 %v1841, %v1846
    %1850 = vrot.lane.b32.xlu0 %v1848, 32
    %v1851 = vpop.permute.xlu0 %1850
    %v1853 = vadd.f32 %v1843, %v1851
    %v1854 = vtanh.pop %v1853
    %1856 = vrot.lane.b32.xlu0 %v1854, 64
    %v1857 = vpop.permute.xlu0 %1856
    %v1859 = vmul.f32 %v1841, %v1857
    %1861 = vrot.lane.b32.xlu0 %v1859, 32
    %v1862 = vpop.permute.xlu0 %1861
    %1864 = vst.msk [vmem:[#allocation2 + $0x8] sm:$0xf0] %vm735, %v1862
    %v1865 = vld [vmem:[%s1656] sm:$0xf]
    %1866 = vmatprep.subr.mxu0 0.0
    %1867 = vmatpush1.msra.mxu0 %v124
    %1868 = vmatprep.subr.mxu0 0.0
    %1869 = vmatpush1.msra.mxu0 %v125
    %1870 = vmatprep.subr.mxu0 0.0
    %1871 = vmatpush1.msra.mxu0 %v126
    %1872 = vmatprep.subr.mxu0 0.0
    %1873 = vmatpush1.msra.mxu0 %v127
    %1874 = vmatprep.subr.mxu0 0.0
    %1875 = vmatpush1.msra.mxu0 0.0
    %1876 = vmatprep.subr.mxu0 0.0
    %1877 = vmatpush1.msra.mxu0 0.0
    %1878 = vmatprep.subr.mxu0 0.0
    %1879 = vmatpush1.msra.mxu0 0.0
    %1880 = vmatprep.subr.mxu0 0.0
    %1881 = vmatpush1.msra.mxu0 0.0
    %1882 = vmatprep.subr.mxu0 0.0
    %1883 = vmatpush1.msra.mxu0 0.0
    %1884 = vmatprep.subr.mxu0 0.0
    %1885 = vmatpush1.msra.mxu0 0.0
    %1886 = vmatprep.subr.mxu0 0.0
    %1887 = vmatpush1.msra.mxu0 0.0
    %1888 = vmatprep.subr.mxu0 0.0
    %1889 = vmatpush1.msra.mxu0 0.0
    %1890 = vmatprep.subr.mxu0 0.0
    %1891 = vmatpush1.msra.mxu0 0.0
    %1892 = vmatprep.subr.mxu0 0.0
    %1893 = vmatpush1.msra.mxu0 0.0
    %1894 = vmatprep.subr.mxu0 0.0
    %1895 = vmatpush1.msra.mxu0 0.0
    %1896 = vmatprep.subr.mxu0 0.0
    %1897 = vmatpush1.msra.mxu0 0.0
    %1898 = vmatprep.subr.mxu0 0.0
    %1899 = vmatpush1.msra.mxu0 0.0
    %1900 = vmatprep.subr.mxu0 0.0
    %1901 = vmatpush1.msra.mxu0 0.0
    %1902 = vmatprep.subr.mxu0 0.0
    %1903 = vmatpush1.msra.mxu0 0.0
    %1904 = vmatprep.subr.mxu0 0.0
    %1905 = vmatpush1.msra.mxu0 0.0
    %1906 = vmatprep.subr.mxu0 0.0
    %1907 = vmatpush1.msra.mxu0 0.0
    %1908 = vmatprep.subr.mxu0 0.0
    %1909 = vmatpush1.msra.mxu0 0.0
    %1910 = vmatprep.subr.mxu0 0.0
    %1911 = vmatpush1.msra.mxu0 0.0
    %1912 = vmatprep.subr.mxu0 0.0
    %1913 = vmatpush1.msra.mxu0 0.0
    %1914 = vmatprep.subr.mxu0 0.0
    %1915 = vmatpush1.msra.mxu0 0.0
    %1916 = vmatprep.subr.mxu0 0.0
    %1917 = vmatpush1.msra.mxu0 0.0
    %1918 = vmatprep.subr.mxu0 0.0
    %1919 = vmatpush1.msra.mxu0 0.0
    %1920 = vmatprep.subr.mxu0 0.0
    %1921 = vmatpush1.msra.mxu0 0.0
    %1922 = vmatprep.subr.mxu0 0.0
    %1923 = vmatpush1.msra.mxu0 0.0
    %1924 = vmatprep.subr.mxu0 0.0
    %1925 = vmatpush1.msra.mxu0 0.0
    %1926 = vmatprep.subr.mxu0 0.0
    %1927 = vmatpush1.msra.mxu0 0.0
    %1928 = vmatprep.subr.mxu0 0.0
    %1929 = vmatpush1.msra.mxu0 0.0
    %1930 = vmatprep.mubr.f32.mxu0 0.0
    %1931 = vmatmul.mubr.f32.gmra.mrb[0].mxu0 %v1763
    %v1932 = vpop.f32.mrb[0].mxu0
    %v1933 = vadd.f32 0.0, %v1932
    %v1934 = vpop.f32.mrb[0].mxu0
    %1935 = vdwg.mxu0
    %v1936 = vsel %vm145, %v1862, 0
    %1938 = vmatprep.subr.mxu0 0.0
    %1939 = vmatpush1.msra.mxu0 %v133
    %1940 = vmatprep.subr.mxu0 0.0
    %1941 = vmatpush1.msra.mxu0 %v134
    %1942 = vmatprep.subr.mxu0 0.0
    %1943 = vmatpush1.msra.mxu0 %v135
    %1944 = vmatprep.subr.mxu0 0.0
    %1945 = vmatpush1.msra.mxu0 %v136
    %1946 = vmatprep.subr.mxu0 0.0
    %1947 = vmatpush1.msra.mxu0 0.0
    %1948 = vmatprep.subr.mxu0 0.0
    %1949 = vmatpush1.msra.mxu0 0.0
    %1950 = vmatprep.subr.mxu0 0.0
    %1951 = vmatpush1.msra.mxu0 0.0
    %1952 = vmatprep.subr.mxu0 0.0
    %1953 = vmatpush1.msra.mxu0 0.0
    %1954 = vmatprep.subr.mxu0 0.0
    %1955 = vmatpush1.msra.mxu0 0.0
    %1956 = vmatprep.subr.mxu0 0.0
    %1957 = vmatpush1.msra.mxu0 0.0
    %1958 = vmatprep.subr.mxu0 0.0
    %1959 = vmatpush1.msra.mxu0 0.0
    %1960 = vmatprep.subr.mxu0 0.0
    %1961 = vmatpush1.msra.mxu0 0.0
    %1962 = vmatprep.subr.mxu0 0.0
    %1963 = vmatpush1.msra.mxu0 0.0
    %1964 = vmatprep.subr.mxu0 0.0
    %1965 = vmatpush1.msra.mxu0 0.0
    %1966 = vmatprep.subr.mxu0 0.0
    %1967 = vmatpush1.msra.mxu0 0.0
    %1968 = vmatprep.subr.mxu0 0.0
    %1969 = vmatpush1.msra.mxu0 0.0
    %1970 = vmatprep.subr.mxu0 0.0
    %1971 = vmatpush1.msra.mxu0 0.0
    %1972 = vmatprep.subr.mxu0 0.0
    %1973 = vmatpush1.msra.mxu0 0.0
    %1974 = vmatprep.subr.mxu0 0.0
    %1975 = vmatpush1.msra.mxu0 0.0
    %1976 = vmatprep.subr.mxu0 0.0
    %1977 = vmatpush1.msra.mxu0 0.0
    %1978 = vmatprep.subr.mxu0 0.0
    %1979 = vmatpush1.msra.mxu0 0.0
    %1980 = vmatprep.subr.mxu0 0.0
    %1981 = vmatpush1.msra.mxu0 0.0
    %1982 = vmatprep.subr.mxu0 0.0
    %1983 = vmatpush1.msra.mxu0 0.0
    %1984 = vmatprep.subr.mxu0 0.0
    %1985 = vmatpush1.msra.mxu0 0.0
    %1986 = vmatprep.subr.mxu0 0.0
    %1987 = vmatpush1.msra.mxu0 0.0
    %1988 = vmatprep.subr.mxu0 0.0
    %1989 = vmatpush1.msra.mxu0 0.0
    %1990 = vmatprep.subr.mxu0 0.0
    %1991 = vmatpush1.msra.mxu0 0.0
    %1992 = vmatprep.subr.mxu0 0.0
    %1993 = vmatpush1.msra.mxu0 0.0
    %1994 = vmatprep.subr.mxu0 0.0
    %1995 = vmatpush1.msra.mxu0 0.0
    %1996 = vmatprep.subr.mxu0 0.0
    %1997 = vmatpush1.msra.mxu0 0.0
    %1998 = vmatprep.subr.mxu0 0.0
    %1999 = vmatpush1.msra.mxu0 0.0
    %2000 = vmatprep.subr.mxu0 0.0
    %2001 = vmatpush1.msra.mxu0 0.0
    %2002 = vmatprep.mubr.f32.mxu0 0.0
    %2003 = vmatmul.mubr.f32.gmra.mrb[0].mxu0 %v1936
    %v2004 = vpop.f32.mrb[0].mxu0
    %v2005 = vadd.f32 0.0, %v2004
    %v2006 = vpop.f32.mrb[0].mxu0
    %2007 = vdwg.mxu0
    %2009 = vrot.lane.b32.xlu0 %v1865, 96
    %v2010 = vpop.permute.xlu0 %2009
    %v2012 = vmul.f32 %v1859, %v2010
    %v2013 = vtanh.pop %v2012
    %v2014 = vmul.f32 %v2013, 1.442695
    %v2015 = vpow.pop %v2014
    %v2016 = vsel %vm510, %v2015, 0.0
    %v2017 = vrot.slane %v2016, 4
    %v2018 = vadd.f32 %v2016, %v2017
    %v2019 = vrot.slane %v2018, 2
    %v2020 = vadd.f32 %v2018, %v2019
    %v2021 = vrot.slane %v2020, 1
    %v2022 = vadd.f32 %v2020, %v2021
    %v2023 = vrcp.pop %v2022
    %v2024 = vmul.f32 %v2015, %v2023
    %2026 = vrot.lane.b32.xlu0 %v2024, 32
    %v2027 = vpop.permute.xlu0 %2026
    %s2029 = scalar_lea.vmem %s13, 16
    %2030 = vst.msk [vmem:[%s2029] sm:$0xf] %vm524, %v2027
    %v2031 = vmul.f32 %v1865, %v2027
    %s2032 = scalar_lea.vmem %s0, 20
    %v2033 = vld [vmem:[%s2032] sm:$0xf]
    %v2035 = vrot.slane %v2031, 4
    %v2037 = vsel %vm348, %v2033, %v2035
    %v2039 = vsel %vm145, %v2037, 0
    %2041 = vmatprep.subr.mxu0 0.0
    %2042 = vmatpush1.msra.mxu0 %v120
    %2043 = vmatprep.subr.mxu0 0.0
    %2044 = vmatpush1.msra.mxu0 %v121
    %2045 = vmatprep.subr.mxu0 0.0
    %2046 = vmatpush1.msra.mxu0 %v122
    %2047 = vmatprep.subr.mxu0 0.0
    %2048 = vmatpush1.msra.mxu0 %v123
    %2049 = vmatprep.subr.mxu0 0.0
    %2050 = vmatpush1.msra.mxu0 0.0
    %2051 = vmatprep.subr.mxu0 0.0
    %2052 = vmatpush1.msra.mxu0 0.0
    %2053 = vmatprep.subr.mxu0 0.0
    %2054 = vmatpush1.msra.mxu0 0.0
    %2055 = vmatprep.subr.mxu0 0.0
    %2056 = vmatpush1.msra.mxu0 0.0
    %2057 = vmatprep.subr.mxu0 0.0
    %2058 = vmatpush1.msra.mxu0 0.0
    %2059 = vmatprep.subr.mxu0 0.0
    %2060 = vmatpush1.msra.mxu0 0.0
    %2061 = vmatprep.subr.mxu0 0.0
    %2062 = vmatpush1.msra.mxu0 0.0
    %2063 = vmatprep.subr.mxu0 0.0
    %2064 = vmatpush1.msra.mxu0 0.0
    %2065 = vmatprep.subr.mxu0 0.0
    %2066 = vmatpush1.msra.mxu0 0.0
    %2067 = vmatprep.subr.mxu0 0.0
    %2068 = vmatpush1.msra.mxu0 0.0
    %2069 = vmatprep.subr.mxu0 0.0
    %2070 = vmatpush1.msra.mxu0 0.0
    %2071 = vmatprep.subr.mxu0 0.0
    %2072 = vmatpush1.msra.mxu0 0.0
    %2073 = vmatprep.subr.mxu0 0.0
    %2074 = vmatpush1.msra.mxu0 0.0
    %2075 = vmatprep.subr.mxu0 0.0
    %2076 = vmatpush1.msra.mxu0 0.0
    %2077 = vmatprep.subr.mxu0 0.0
    %2078 = vmatpush1.msra.mxu0 0.0
    %2079 = vmatprep.subr.mxu0 0.0
    %2080 = vmatpush1.msra.mxu0 0.0
    %2081 = vmatprep.subr.mxu0 0.0
    %2082 = vmatpush1.msra.mxu0 0.0
    %2083 = vmatprep.subr.mxu0 0.0
    %2084 = vmatpush1.msra.mxu0 0.0
    %2085 = vmatprep.subr.mxu0 0.0
    %2086 = vmatpush1.msra.mxu0 0.0
    %2087 = vmatprep.subr.mxu0 0.0
    %2088 = vmatpush1.msra.mxu0 0.0
    %2089 = vmatprep.subr.mxu0 0.0
    %2090 = vmatpush1.msra.mxu0 0.0
    %2091 = vmatprep.subr.mxu0 0.0
    %2092 = vmatpush1.msra.mxu0 0.0
    %2093 = vmatprep.subr.mxu0 0.0
    %2094 = vmatpush1.msra.mxu0 0.0
    %2095 = vmatprep.subr.mxu0 0.0
    %2096 = vmatpush1.msra.mxu0 0.0
    %2097 = vmatprep.subr.mxu0 0.0
    %2098 = vmatpush1.msra.mxu0 0.0
    %2099 = vmatprep.subr.mxu0 0.0
    %2100 = vmatpush1.msra.mxu0 0.0
    %2101 = vmatprep.subr.mxu0 0.0
    %2102 = vmatpush1.msra.mxu0 0.0
    %2103 = vmatprep.subr.mxu0 0.0
    %2104 = vmatpush1.msra.mxu0 0.0
    %2105 = vmatprep.mubr.f32.mxu0 0.0
    %2106 = vmatmul.mubr.f32.gmra.mrb[0].mxu0 %v2039
    %v2107 = vpop.f32.mrb[0].mxu0
    %v2108 = vadd.f32 %v1933, %v2107
    %v2109 = vpop.f32.mrb[0].mxu0
    %2110 = vdwg.mxu0
    %v2111 = vadd.f32 %v2108, %v143
    %v2112 = vxor.u32 %v2111, 2147483648
    %v2113 = vmul.f32 %v2112, 1.442695
    %v2114 = vpow.pop %v2113
    %v2115 = vadd.f32 %v2114, 1.0
    %v2116 = vrcp.pop %v2115
    %v2117 = vmul.f32 1.0, %v2116
    %v2118 = vtanh.pop %v2111
    %v2119 = vmul.f32 %v2117, %v1753
    %2121 = vrot.lane.b32.xlu0 %v2118, 64
    %v2122 = vpop.permute.xlu0 %2121
    %v2124 = vmul.f32 %v2117, %v2122
    %2126 = vrot.lane.b32.xlu0 %v2124, 32
    %v2127 = vpop.permute.xlu0 %2126
    %v2129 = vadd.f32 %v2119, %v2127
    %v2130 = vtanh.pop %v2129
    %2132 = vrot.lane.b32.xlu0 %v2130, 64
    %v2133 = vpop.permute.xlu0 %2132
    %v2135 = vmul.f32 %v2117, %v2133
    %2137 = vrot.lane.b32.xlu0 %v2135, 32
    %v2138 = vpop.permute.xlu0 %2137
    %v2139 = vsel %vm145, %v2138, 0
    %2141 = vmatprep.subr.mxu0 0.0
    %2142 = vmatpush1.msra.mxu0 %v129
    %2143 = vmatprep.subr.mxu0 0.0
    %2144 = vmatpush1.msra.mxu0 %v130
    %2145 = vmatprep.subr.mxu0 0.0
    %2146 = vmatpush1.msra.mxu0 %v131
    %2147 = vmatprep.subr.mxu0 0.0
    %2148 = vmatpush1.msra.mxu0 %v132
    %2149 = vmatprep.subr.mxu0 0.0
    %2150 = vmatpush1.msra.mxu0 0.0
    %2151 = vmatprep.subr.mxu0 0.0
    %2152 = vmatpush1.msra.mxu0 0.0
    %2153 = vmatprep.subr.mxu0 0.0
    %2154 = vmatpush1.msra.mxu0 0.0
    %2155 = vmatprep.subr.mxu0 0.0
    %2156 = vmatpush1.msra.mxu0 0.0
    %2157 = vmatprep.subr.mxu0 0.0
    %2158 = vmatpush1.msra.mxu0 0.0
    %2159 = vmatprep.subr.mxu0 0.0
    %2160 = vmatpush1.msra.mxu0 0.0
    %2161 = vmatprep.subr.mxu0 0.0
    %2162 = vmatpush1.msra.mxu0 0.0
    %2163 = vmatprep.subr.mxu0 0.0
    %2164 = vmatpush1.msra.mxu0 0.0
    %2165 = vmatprep.subr.mxu0 0.0
    %2166 = vmatpush1.msra.mxu0 0.0
    %2167 = vmatprep.subr.mxu0 0.0
    %2168 = vmatpush1.msra.mxu0 0.0
    %2169 = vmatprep.subr.mxu0 0.0
    %2170 = vmatpush1.msra.mxu0 0.0
    %2171 = vmatprep.subr.mxu0 0.0
    %2172 = vmatpush1.msra.mxu0 0.0
    %2173 = vmatprep.subr.mxu0 0.0
    %2174 = vmatpush1.msra.mxu0 0.0
    %2175 = vmatprep.subr.mxu0 0.0
    %2176 = vmatpush1.msra.mxu0 0.0
    %2177 = vmatprep.subr.mxu0 0.0
    %2178 = vmatpush1.msra.mxu0 0.0
    %2179 = vmatprep.subr.mxu0 0.0
    %2180 = vmatpush1.msra.mxu0 0.0
    %2181 = vmatprep.subr.mxu0 0.0
    %2182 = vmatpush1.msra.mxu0 0.0
    %2183 = vmatprep.subr.mxu0 0.0
    %2184 = vmatpush1.msra.mxu0 0.0
    %2185 = vmatprep.subr.mxu0 0.0
    %2186 = vmatpush1.msra.mxu0 0.0
    %2187 = vmatprep.subr.mxu0 0.0
    %2188 = vmatpush1.msra.mxu0 0.0
    %2189 = vmatprep.subr.mxu0 0.0
    %2190 = vmatpush1.msra.mxu0 0.0
    %2191 = vmatprep.subr.mxu0 0.0
    %2192 = vmatpush1.msra.mxu0 0.0
    %2193 = vmatprep.subr.mxu0 0.0
    %2194 = vmatpush1.msra.mxu0 0.0
    %2195 = vmatprep.subr.mxu0 0.0
    %2196 = vmatpush1.msra.mxu0 0.0
    %2197 = vmatprep.subr.mxu0 0.0
    %2198 = vmatpush1.msra.mxu0 0.0
    %2199 = vmatprep.subr.mxu0 0.0
    %2200 = vmatpush1.msra.mxu0 0.0
    %2201 = vmatprep.subr.mxu0 0.0
    %2202 = vmatpush1.msra.mxu0 0.0
    %2203 = vmatprep.subr.mxu0 0.0
    %2204 = vmatpush1.msra.mxu0 0.0
    %2205 = vmatprep.mubr.f32.mxu0 0.0
    %2206 = vmatmul.mubr.f32.gmra.mrb[0].mxu0 %v2139
    %v2207 = vpop.f32.mrb[0].mxu0
    %v2208 = vadd.f32 %v2005, %v2207
    %v2209 = vpop.f32.mrb[0].mxu0
    %2210 = vdwg.mxu0
    %v2211 = vadd.f32 %v2208, %v247
    %v2212 = vxor.u32 %v2211, 2147483648
    %v2213 = vmul.f32 %v2212, 1.442695
    %v2214 = vpow.pop %v2213
    %v2215 = vadd.f32 %v2214, 1.0
    %v2216 = vrcp.pop %v2215
    %v2217 = vmul.f32 1.0, %v2216
    %v2218 = vtanh.pop %v2211
    %v2219 = vmul.f32 %v2217, %v1853
    %2221 = vrot.lane.b32.xlu0 %v2218, 64
    %v2222 = vpop.permute.xlu0 %2221
    %v2224 = vmul.f32 %v2217, %v2222
    %2226 = vrot.lane.b32.xlu0 %v2224, 32
    %v2227 = vpop.permute.xlu0 %2226
    %v2229 = vadd.f32 %v2219, %v2227
    %v2230 = vtanh.pop %v2229
    %2232 = vrot.lane.b32.xlu0 %v2230, 64
    %v2233 = vpop.permute.xlu0 %2232
    %v2235 = vmul.f32 %v2217, %v2233
    %2237 = vrot.lane.b32.xlu0 %v2235, 32
    %v2238 = vpop.permute.xlu0 %2237
    %2240 = vst.msk [vmem:[#allocation2 + $0xc] sm:$0xf0] %vm735, %v2238
    %v2241 = vld [vmem:[%s2032] sm:$0xf]
    %2242 = vmatprep.subr.mxu0 0.0
    %2243 = vmatpush1.msra.mxu0 %v124
    %2244 = vmatprep.subr.mxu0 0.0
    %2245 = vmatpush1.msra.mxu0 %v125
    %2246 = vmatprep.subr.mxu0 0.0
    %2247 = vmatpush1.msra.mxu0 %v126
    %2248 = vmatprep.subr.mxu0 0.0
    %2249 = vmatpush1.msra.mxu0 %v127
    %2250 = vmatprep.subr.mxu0 0.0
    %2251 = vmatpush1.msra.mxu0 0.0
    %2252 = vmatprep.subr.mxu0 0.0
    %2253 = vmatpush1.msra.mxu0 0.0
    %2254 = vmatprep.subr.mxu0 0.0
    %2255 = vmatpush1.msra.mxu0 0.0
    %2256 = vmatprep.subr.mxu0 0.0
    %2257 = vmatpush1.msra.mxu0 0.0
    %2258 = vmatprep.subr.mxu0 0.0
    %2259 = vmatpush1.msra.mxu0 0.0
    %2260 = vmatprep.subr.mxu0 0.0
    %2261 = vmatpush1.msra.mxu0 0.0
    %2262 = vmatprep.subr.mxu0 0.0
    %2263 = vmatpush1.msra.mxu0 0.0
    %2264 = vmatprep.subr.mxu0 0.0
    %2265 = vmatpush1.msra.mxu0 0.0
    %2266 = vmatprep.subr.mxu0 0.0
    %2267 = vmatpush1.msra.mxu0 0.0
    %2268 = vmatprep.subr.mxu0 0.0
    %2269 = vmatpush1.msra.mxu0 0.0
    %2270 = vmatprep.subr.mxu0 0.0
    %2271 = vmatpush1.msra.mxu0 0.0
    %2272 = vmatprep.subr.mxu0 0.0
    %2273 = vmatpush1.msra.mxu0 0.0
    %2274 = vmatprep.subr.mxu0 0.0
    %2275 = vmatpush1.msra.mxu0 0.0
    %2276 = vmatprep.subr.mxu0 0.0
    %2277 = vmatpush1.msra.mxu0 0.0
    %2278 = vmatprep.subr.mxu0 0.0
    %2279 = vmatpush1.msra.mxu0 0.0
    %2280 = vmatprep.subr.mxu0 0.0
    %2281 = vmatpush1.msra.mxu0 0.0
    %2282 = vmatprep.subr.mxu0 0.0
    %2283 = vmatpush1.msra.mxu0 0.0
    %2284 = vmatprep.subr.mxu0 0.0
    %2285 = vmatpush1.msra.mxu0 0.0
    %2286 = vmatprep.subr.mxu0 0.0
    %2287 = vmatpush1.msra.mxu0 0.0
    %2288 = vmatprep.subr.mxu0 0.0
    %2289 = vmatpush1.msra.mxu0 0.0
    %2290 = vmatprep.subr.mxu0 0.0
    %2291 = vmatpush1.msra.mxu0 0.0
    %2292 = vmatprep.subr.mxu0 0.0
    %2293 = vmatpush1.msra.mxu0 0.0
    %2294 = vmatprep.subr.mxu0 0.0
    %2295 = vmatpush1.msra.mxu0 0.0
    %2296 = vmatprep.subr.mxu0 0.0
    %2297 = vmatpush1.msra.mxu0 0.0
    %2298 = vmatprep.subr.mxu0 0.0
    %2299 = vmatpush1.msra.mxu0 0.0
    %2300 = vmatprep.subr.mxu0 0.0
    %2301 = vmatpush1.msra.mxu0 0.0
    %2302 = vmatprep.subr.mxu0 0.0
    %2303 = vmatpush1.msra.mxu0 0.0
    %2304 = vmatprep.subr.mxu0 0.0
    %2305 = vmatpush1.msra.mxu0 0.0
    %2306 = vmatprep.mubr.f32.mxu0 0.0
    %2307 = vmatmul.mubr.f32.gmra.mrb[0].mxu0 %v2139
    %v2308 = vpop.f32.mrb[0].mxu0
    %v2309 = vadd.f32 0.0, %v2308
    %v2310 = vpop.f32.mrb[0].mxu0
    %2311 = vdwg.mxu0
    %v2312 = vsel %vm145, %v2238, 0
    %2314 = vmatprep.subr.mxu0 0.0
    %2315 = vmatpush1.msra.mxu0 %v133
    %2316 = vmatprep.subr.mxu0 0.0
    %2317 = vmatpush1.msra.mxu0 %v134
    %2318 = vmatprep.subr.mxu0 0.0
    %2319 = vmatpush1.msra.mxu0 %v135
    %2320 = vmatprep.subr.mxu0 0.0
    %2321 = vmatpush1.msra.mxu0 %v136
    %2322 = vmatprep.subr.mxu0 0.0
    %2323 = vmatpush1.msra.mxu0 0.0
    %2324 = vmatprep.subr.mxu0 0.0
    %2325 = vmatpush1.msra.mxu0 0.0
    %2326 = vmatprep.subr.mxu0 0.0
    %2327 = vmatpush1.msra.mxu0 0.0
    %2328 = vmatprep.subr.mxu0 0.0
    %2329 = vmatpush1.msra.mxu0 0.0
    %2330 = vmatprep.subr.mxu0 0.0
    %2331 = vmatpush1.msra.mxu0 0.0
    %2332 = vmatprep.subr.mxu0 0.0
    %2333 = vmatpush1.msra.mxu0 0.0
    %2334 = vmatprep.subr.mxu0 0.0
    %2335 = vmatpush1.msra.mxu0 0.0
    %2336 = vmatprep.subr.mxu0 0.0
    %2337 = vmatpush1.msra.mxu0 0.0
    %2338 = vmatprep.subr.mxu0 0.0
    %2339 = vmatpush1.msra.mxu0 0.0
    %2340 = vmatprep.subr.mxu0 0.0
    %2341 = vmatpush1.msra.mxu0 0.0
    %2342 = vmatprep.subr.mxu0 0.0
    %2343 = vmatpush1.msra.mxu0 0.0
    %2344 = vmatprep.subr.mxu0 0.0
    %2345 = vmatpush1.msra.mxu0 0.0
    %2346 = vmatprep.subr.mxu0 0.0
    %2347 = vmatpush1.msra.mxu0 0.0
    %2348 = vmatprep.subr.mxu0 0.0
    %2349 = vmatpush1.msra.mxu0 0.0
    %2350 = vmatprep.subr.mxu0 0.0
    %2351 = vmatpush1.msra.mxu0 0.0
    %2352 = vmatprep.subr.mxu0 0.0
    %2353 = vmatpush1.msra.mxu0 0.0
    %2354 = vmatprep.subr.mxu0 0.0
    %2355 = vmatpush1.msra.mxu0 0.0
    %2356 = vmatprep.subr.mxu0 0.0
    %2357 = vmatpush1.msra.mxu0 0.0
    %2358 = vmatprep.subr.mxu0 0.0
    %2359 = vmatpush1.msra.mxu0 0.0
    %2360 = vmatprep.subr.mxu0 0.0
    %2361 = vmatpush1.msra.mxu0 0.0
    %2362 = vmatprep.subr.mxu0 0.0
    %2363 = vmatpush1.msra.mxu0 0.0
    %2364 = vmatprep.subr.mxu0 0.0
    %2365 = vmatpush1.msra.mxu0 0.0
    %2366 = vmatprep.subr.mxu0 0.0
    %2367 = vmatpush1.msra.mxu0 0.0
    %2368 = vmatprep.subr.mxu0 0.0
    %2369 = vmatpush1.msra.mxu0 0.0
    %2370 = vmatprep.subr.mxu0 0.0
    %2371 = vmatpush1.msra.mxu0 0.0
    %2372 = vmatprep.subr.mxu0 0.0
    %2373 = vmatpush1.msra.mxu0 0.0
    %2374 = vmatprep.subr.mxu0 0.0
    %2375 = vmatpush1.msra.mxu0 0.0
    %2376 = vmatprep.subr.mxu0 0.0
    %2377 = vmatpush1.msra.mxu0 0.0
    %2378 = vmatprep.mubr.f32.mxu0 0.0
    %2379 = vmatmul.mubr.f32.gmra.mrb[0].mxu0 %v2312
    %v2380 = vpop.f32.mrb[0].mxu0
    %v2381 = vadd.f32 0.0, %v2380
    %v2382 = vpop.f32.mrb[0].mxu0
    %2383 = vdwg.mxu0
    %2385 = vrot.lane.b32.xlu0 %v2241, 96
    %v2386 = vpop.permute.xlu0 %2385
    %v2388 = vmul.f32 %v2235, %v2386
    %v2389 = vtanh.pop %v2388
    %v2390 = vmul.f32 %v2389, 1.442695
    %v2391 = vpow.pop %v2390
    %v2392 = vsel %vm510, %v2391, 0.0
    %v2393 = vrot.slane %v2392, 4
    %v2394 = vadd.f32 %v2392, %v2393
    %v2395 = vrot.slane %v2394, 2
    %v2396 = vadd.f32 %v2394, %v2395
    %v2397 = vrot.slane %v2396, 1
    %v2398 = vadd.f32 %v2396, %v2397
    %v2399 = vrcp.pop %v2398
    %v2400 = vmul.f32 %v2391, %v2399
    %2402 = vrot.lane.b32.xlu0 %v2400, 32
    %v2403 = vpop.permute.xlu0 %2402
    %s2405 = scalar_lea.vmem %s13, 20
    %2406 = vst.msk [vmem:[%s2405] sm:$0xf] %vm524, %v2403
    %v2407 = vmul.f32 %v2241, %v2403
    %s2408 = scalar_lea.vmem %s0, 24
    %v2409 = vld [vmem:[%s2408] sm:$0xf]
    %v2411 = vrot.slane %v2407, 4
    %v2413 = vsel %vm348, %v2409, %v2411
    %v2415 = vsel %vm145, %v2413, 0
    %2417 = vmatprep.subr.mxu0 0.0
    %2418 = vmatpush1.msra.mxu0 %v120
    %2419 = vmatprep.subr.mxu0 0.0
    %2420 = vmatpush1.msra.mxu0 %v121
    %2421 = vmatprep.subr.mxu0 0.0
    %2422 = vmatpush1.msra.mxu0 %v122
    %2423 = vmatprep.subr.mxu0 0.0
    %2424 = vmatpush1.msra.mxu0 %v123
    %2425 = vmatprep.subr.mxu0 0.0
    %2426 = vmatpush1.msra.mxu0 0.0
    %2427 = vmatprep.subr.mxu0 0.0
    %2428 = vmatpush1.msra.mxu0 0.0
    %2429 = vmatprep.subr.mxu0 0.0
    %2430 = vmatpush1.msra.mxu0 0.0
    %2431 = vmatprep.subr.mxu0 0.0
    %2432 = vmatpush1.msra.mxu0 0.0
    %2433 = vmatprep.subr.mxu0 0.0
    %2434 = vmatpush1.msra.mxu0 0.0
    %2435 = vmatprep.subr.mxu0 0.0
    %2436 = vmatpush1.msra.mxu0 0.0
    %2437 = vmatprep.subr.mxu0 0.0
    %2438 = vmatpush1.msra.mxu0 0.0
    %2439 = vmatprep.subr.mxu0 0.0
    %2440 = vmatpush1.msra.mxu0 0.0
    %2441 = vmatprep.subr.mxu0 0.0
    %2442 = vmatpush1.msra.mxu0 0.0
    %2443 = vmatprep.subr.mxu0 0.0
    %2444 = vmatpush1.msra.mxu0 0.0
    %2445 = vmatprep.subr.mxu0 0.0
    %2446 = vmatpush1.msra.mxu0 0.0
    %2447 = vmatprep.subr.mxu0 0.0
    %2448 = vmatpush1.msra.mxu0 0.0
    %2449 = vmatprep.subr.mxu0 0.0
    %2450 = vmatpush1.msra.mxu0 0.0
    %2451 = vmatprep.subr.mxu0 0.0
    %2452 = vmatpush1.msra.mxu0 0.0
    %2453 = vmatprep.subr.mxu0 0.0
    %2454 = vmatpush1.msra.mxu0 0.0
    %2455 = vmatprep.subr.mxu0 0.0
    %2456 = vmatpush1.msra.mxu0 0.0
    %2457 = vmatprep.subr.mxu0 0.0
    %2458 = vmatpush1.msra.mxu0 0.0
    %2459 = vmatprep.subr.mxu0 0.0
    %2460 = vmatpush1.msra.mxu0 0.0
    %2461 = vmatprep.subr.mxu0 0.0
    %2462 = vmatpush1.msra.mxu0 0.0
    %2463 = vmatprep.subr.mxu0 0.0
    %2464 = vmatpush1.msra.mxu0 0.0
    %2465 = vmatprep.subr.mxu0 0.0
    %2466 = vmatpush1.msra.mxu0 0.0
    %2467 = vmatprep.subr.mxu0 0.0
    %2468 = vmatpush1.msra.mxu0 0.0
    %2469 = vmatprep.subr.mxu0 0.0
    %2470 = vmatpush1.msra.mxu0 0.0
    %2471 = vmatprep.subr.mxu0 0.0
    %2472 = vmatpush1.msra.mxu0 0.0
    %2473 = vmatprep.subr.mxu0 0.0
    %2474 = vmatpush1.msra.mxu0 0.0
    %2475 = vmatprep.subr.mxu0 0.0
    %2476 = vmatpush1.msra.mxu0 0.0
    %2477 = vmatprep.subr.mxu0 0.0
    %2478 = vmatpush1.msra.mxu0 0.0
    %2479 = vmatprep.subr.mxu0 0.0
    %2480 = vmatpush1.msra.mxu0 0.0
    %2481 = vmatprep.mubr.f32.mxu0 0.0
    %2482 = vmatmul.mubr.f32.gmra.mrb[0].mxu0 %v2415
    %v2483 = vpop.f32.mrb[0].mxu0
    %v2484 = vadd.f32 %v2309, %v2483
    %v2485 = vpop.f32.mrb[0].mxu0
    %2486 = vdwg.mxu0
    %v2487 = vadd.f32 %v2484, %v143
    %v2488 = vxor.u32 %v2487, 2147483648
    %v2489 = vmul.f32 %v2488, 1.442695
    %v2490 = vpow.pop %v2489
    %v2491 = vadd.f32 %v2490, 1.0
    %v2492 = vrcp.pop %v2491
    %v2493 = vmul.f32 1.0, %v2492
    %v2494 = vtanh.pop %v2487
    %v2495 = vmul.f32 %v2493, %v2129
    %2497 = vrot.lane.b32.xlu0 %v2494, 64
    %v2498 = vpop.permute.xlu0 %2497
    %v2500 = vmul.f32 %v2493, %v2498
    %2502 = vrot.lane.b32.xlu0 %v2500, 32
    %v2503 = vpop.permute.xlu0 %2502
    %v2505 = vadd.f32 %v2495, %v2503
    %v2506 = vtanh.pop %v2505
    %2508 = vrot.lane.b32.xlu0 %v2506, 64
    %v2509 = vpop.permute.xlu0 %2508
    %v2511 = vmul.f32 %v2493, %v2509
    %2513 = vrot.lane.b32.xlu0 %v2511, 32
    %v2514 = vpop.permute.xlu0 %2513
    %v2515 = vsel %vm145, %v2514, 0
    %2517 = vmatprep.subr.mxu0 0.0
    %2518 = vmatpush1.msra.mxu0 %v129
    %2519 = vmatprep.subr.mxu0 0.0
    %2520 = vmatpush1.msra.mxu0 %v130
    %2521 = vmatprep.subr.mxu0 0.0
    %2522 = vmatpush1.msra.mxu0 %v131
    %2523 = vmatprep.subr.mxu0 0.0
    %2524 = vmatpush1.msra.mxu0 %v132
    %2525 = vmatprep.subr.mxu0 0.0
    %2526 = vmatpush1.msra.mxu0 0.0
    %2527 = vmatprep.subr.mxu0 0.0
    %2528 = vmatpush1.msra.mxu0 0.0
    %2529 = vmatprep.subr.mxu0 0.0
    %2530 = vmatpush1.msra.mxu0 0.0
    %2531 = vmatprep.subr.mxu0 0.0
    %2532 = vmatpush1.msra.mxu0 0.0
    %2533 = vmatprep.subr.mxu0 0.0
    %2534 = vmatpush1.msra.mxu0 0.0
    %2535 = vmatprep.subr.mxu0 0.0
    %2536 = vmatpush1.msra.mxu0 0.0
    %2537 = vmatprep.subr.mxu0 0.0
    %2538 = vmatpush1.msra.mxu0 0.0
    %2539 = vmatprep.subr.mxu0 0.0
    %2540 = vmatpush1.msra.mxu0 0.0
    %2541 = vmatprep.subr.mxu0 0.0
    %2542 = vmatpush1.msra.mxu0 0.0
    %2543 = vmatprep.subr.mxu0 0.0
    %2544 = vmatpush1.msra.mxu0 0.0
    %2545 = vmatprep.subr.mxu0 0.0
    %2546 = vmatpush1.msra.mxu0 0.0
    %2547 = vmatprep.subr.mxu0 0.0
    %2548 = vmatpush1.msra.mxu0 0.0
    %2549 = vmatprep.subr.mxu0 0.0
    %2550 = vmatpush1.msra.mxu0 0.0
    %2551 = vmatprep.subr.mxu0 0.0
    %2552 = vmatpush1.msra.mxu0 0.0
    %2553 = vmatprep.subr.mxu0 0.0
    %2554 = vmatpush1.msra.mxu0 0.0
    %2555 = vmatprep.subr.mxu0 0.0
    %2556 = vmatpush1.msra.mxu0 0.0
    %2557 = vmatprep.subr.mxu0 0.0
    %2558 = vmatpush1.msra.mxu0 0.0
    %2559 = vmatprep.subr.mxu0 0.0
    %2560 = vmatpush1.msra.mxu0 0.0
    %2561 = vmatprep.subr.mxu0 0.0
    %2562 = vmatpush1.msra.mxu0 0.0
    %2563 = vmatprep.subr.mxu0 0.0
    %2564 = vmatpush1.msra.mxu0 0.0
    %2565 = vmatprep.subr.mxu0 0.0
    %2566 = vmatpush1.msra.mxu0 0.0
    %2567 = vmatprep.subr.mxu0 0.0
    %2568 = vmatpush1.msra.mxu0 0.0
    %2569 = vmatprep.subr.mxu0 0.0
    %2570 = vmatpush1.msra.mxu0 0.0
    %2571 = vmatprep.subr.mxu0 0.0
    %2572 = vmatpush1.msra.mxu0 0.0
    %2573 = vmatprep.subr.mxu0 0.0
    %2574 = vmatpush1.msra.mxu0 0.0
    %2575 = vmatprep.subr.mxu0 0.0
    %2576 = vmatpush1.msra.mxu0 0.0
    %2577 = vmatprep.subr.mxu0 0.0
    %2578 = vmatpush1.msra.mxu0 0.0
    %2579 = vmatprep.subr.mxu0 0.0
    %2580 = vmatpush1.msra.mxu0 0.0
    %2581 = vmatprep.mubr.f32.mxu0 0.0
    %2582 = vmatmul.mubr.f32.gmra.mrb[0].mxu0 %v2515
    %v2583 = vpop.f32.mrb[0].mxu0
    %v2584 = vadd.f32 %v2381, %v2583
    %v2585 = vpop.f32.mrb[0].mxu0
    %2586 = vdwg.mxu0
    %v2587 = vadd.f32 %v2584, %v247
    %v2588 = vxor.u32 %v2587, 2147483648
    %v2589 = vmul.f32 %v2588, 1.442695
    %v2590 = vpow.pop %v2589
    %v2591 = vadd.f32 %v2590, 1.0
    %v2592 = vrcp.pop %v2591
    %v2593 = vmul.f32 1.0, %v2592
    %v2594 = vtanh.pop %v2587
    %v2595 = vmul.f32 %v2593, %v2229
    %2597 = vrot.lane.b32.xlu0 %v2594, 64
    %v2598 = vpop.permute.xlu0 %2597
    %v2600 = vmul.f32 %v2593, %v2598
    %2602 = vrot.lane.b32.xlu0 %v2600, 32
    %v2603 = vpop.permute.xlu0 %2602
    %v2605 = vadd.f32 %v2595, %v2603
    %v2606 = vtanh.pop %v2605
    %2608 = vrot.lane.b32.xlu0 %v2606, 64
    %v2609 = vpop.permute.xlu0 %2608
    %v2611 = vmul.f32 %v2593, %v2609
    %2613 = vrot.lane.b32.xlu0 %v2611, 32
    %v2614 = vpop.permute.xlu0 %2613
    %2616 = vst.msk [vmem:[#allocation2 + $0x10] sm:$0xf0] %vm735, %v2614
    %v2617 = vld [vmem:[%s2408] sm:$0xf]
    %2618 = vmatprep.subr.mxu0 0.0
    %2619 = vmatpush1.msra.mxu0 %v124
    %2620 = vmatprep.subr.mxu0 0.0
    %2621 = vmatpush1.msra.mxu0 %v125
    %2622 = vmatprep.subr.mxu0 0.0
    %2623 = vmatpush1.msra.mxu0 %v126
    %2624 = vmatprep.subr.mxu0 0.0
    %2625 = vmatpush1.msra.mxu0 %v127
    %2626 = vmatprep.subr.mxu0 0.0
    %2627 = vmatpush1.msra.mxu0 0.0
    %2628 = vmatprep.subr.mxu0 0.0
    %2629 = vmatpush1.msra.mxu0 0.0
    %2630 = vmatprep.subr.mxu0 0.0
    %2631 = vmatpush1.msra.mxu0 0.0
    %2632 = vmatprep.subr.mxu0 0.0
    %2633 = vmatpush1.msra.mxu0 0.0
    %2634 = vmatprep.subr.mxu0 0.0
    %2635 = vmatpush1.msra.mxu0 0.0
    %2636 = vmatprep.subr.mxu0 0.0
    %2637 = vmatpush1.msra.mxu0 0.0
    %2638 = vmatprep.subr.mxu0 0.0
    %2639 = vmatpush1.msra.mxu0 0.0
    %2640 = vmatprep.subr.mxu0 0.0
    %2641 = vmatpush1.msra.mxu0 0.0
    %2642 = vmatprep.subr.mxu0 0.0
    %2643 = vmatpush1.msra.mxu0 0.0
    %2644 = vmatprep.subr.mxu0 0.0
    %2645 = vmatpush1.msra.mxu0 0.0
    %2646 = vmatprep.subr.mxu0 0.0
    %2647 = vmatpush1.msra.mxu0 0.0
    %2648 = vmatprep.subr.mxu0 0.0
    %2649 = vmatpush1.msra.mxu0 0.0
    %2650 = vmatprep.subr.mxu0 0.0
    %2651 = vmatpush1.msra.mxu0 0.0
    %2652 = vmatprep.subr.mxu0 0.0
    %2653 = vmatpush1.msra.mxu0 0.0
    %2654 = vmatprep.subr.mxu0 0.0
    %2655 = vmatpush1.msra.mxu0 0.0
    %2656 = vmatprep.subr.mxu0 0.0
    %2657 = vmatpush1.msra.mxu0 0.0
    %2658 = vmatprep.subr.mxu0 0.0
    %2659 = vmatpush1.msra.mxu0 0.0
    %2660 = vmatprep.subr.mxu0 0.0
    %2661 = vmatpush1.msra.mxu0 0.0
    %2662 = vmatprep.subr.mxu0 0.0
    %2663 = vmatpush1.msra.mxu0 0.0
    %2664 = vmatprep.subr.mxu0 0.0
    %2665 = vmatpush1.msra.mxu0 0.0
    %2666 = vmatprep.subr.mxu0 0.0
    %2667 = vmatpush1.msra.mxu0 0.0
    %2668 = vmatprep.subr.mxu0 0.0
    %2669 = vmatpush1.msra.mxu0 0.0
    %2670 = vmatprep.subr.mxu0 0.0
    %2671 = vmatpush1.msra.mxu0 0.0
    %2672 = vmatprep.subr.mxu0 0.0
    %2673 = vmatpush1.msra.mxu0 0.0
    %2674 = vmatprep.subr.mxu0 0.0
    %2675 = vmatpush1.msra.mxu0 0.0
    %2676 = vmatprep.subr.mxu0 0.0
    %2677 = vmatpush1.msra.mxu0 0.0
    %2678 = vmatprep.subr.mxu0 0.0
    %2679 = vmatpush1.msra.mxu0 0.0
    %2680 = vmatprep.subr.mxu0 0.0
    %2681 = vmatpush1.msra.mxu0 0.0
    %2682 = vmatprep.mubr.f32.mxu0 0.0
    %2683 = vmatmul.mubr.f32.gmra.mrb[0].mxu0 %v2515
    %v2684 = vpop.f32.mrb[0].mxu0
    %v2685 = vadd.f32 0.0, %v2684
    %v2686 = vpop.f32.mrb[0].mxu0
    %2687 = vdwg.mxu0
    %v2688 = vsel %vm145, %v2614, 0
    %2690 = vmatprep.subr.mxu0 0.0
    %2691 = vmatpush1.msra.mxu0 %v133
    %2692 = vmatprep.subr.mxu0 0.0
    %2693 = vmatpush1.msra.mxu0 %v134
    %2694 = vmatprep.subr.mxu0 0.0
    %2695 = vmatpush1.msra.mxu0 %v135
    %2696 = vmatprep.subr.mxu0 0.0
    %2697 = vmatpush1.msra.mxu0 %v136
    %2698 = vmatprep.subr.mxu0 0.0
    %2699 = vmatpush1.msra.mxu0 0.0
    %2700 = vmatprep.subr.mxu0 0.0
    %2701 = vmatpush1.msra.mxu0 0.0
    %2702 = vmatprep.subr.mxu0 0.0
    %2703 = vmatpush1.msra.mxu0 0.0
    %2704 = vmatprep.subr.mxu0 0.0
    %2705 = vmatpush1.msra.mxu0 0.0
    %2706 = vmatprep.subr.mxu0 0.0
    %2707 = vmatpush1.msra.mxu0 0.0
    %2708 = vmatprep.subr.mxu0 0.0
    %2709 = vmatpush1.msra.mxu0 0.0
    %2710 = vmatprep.subr.mxu0 0.0
    %2711 = vmatpush1.msra.mxu0 0.0
    %2712 = vmatprep.subr.mxu0 0.0
    %2713 = vmatpush1.msra.mxu0 0.0
    %2714 = vmatprep.subr.mxu0 0.0
    %2715 = vmatpush1.msra.mxu0 0.0
    %2716 = vmatprep.subr.mxu0 0.0
    %2717 = vmatpush1.msra.mxu0 0.0
    %2718 = vmatprep.subr.mxu0 0.0
    %2719 = vmatpush1.msra.mxu0 0.0
    %2720 = vmatprep.subr.mxu0 0.0
    %2721 = vmatpush1.msra.mxu0 0.0
    %2722 = vmatprep.subr.mxu0 0.0
    %2723 = vmatpush1.msra.mxu0 0.0
    %2724 = vmatprep.subr.mxu0 0.0
    %2725 = vmatpush1.msra.mxu0 0.0
    %2726 = vmatprep.subr.mxu0 0.0
    %2727 = vmatpush1.msra.mxu0 0.0
    %2728 = vmatprep.subr.mxu0 0.0
    %2729 = vmatpush1.msra.mxu0 0.0
    %2730 = vmatprep.subr.mxu0 0.0
    %2731 = vmatpush1.msra.mxu0 0.0
    %2732 = vmatprep.subr.mxu0 0.0
    %2733 = vmatpush1.msra.mxu0 0.0
    %2734 = vmatprep.subr.mxu0 0.0
    %2735 = vmatpush1.msra.mxu0 0.0
    %2736 = vmatprep.subr.mxu0 0.0
    %2737 = vmatpush1.msra.mxu0 0.0
    %2738 = vmatprep.subr.mxu0 0.0
    %2739 = vmatpush1.msra.mxu0 0.0
    %2740 = vmatprep.subr.mxu0 0.0
    %2741 = vmatpush1.msra.mxu0 0.0
    %2742 = vmatprep.subr.mxu0 0.0
    %2743 = vmatpush1.msra.mxu0 0.0
    %2744 = vmatprep.subr.mxu0 0.0
    %2745 = vmatpush1.msra.mxu0 0.0
    %2746 = vmatprep.subr.mxu0 0.0
    %2747 = vmatpush1.msra.mxu0 0.0
    %2748 = vmatprep.subr.mxu0 0.0
    %2749 = vmatpush1.msra.mxu0 0.0
    %2750 = vmatprep.subr.mxu0 0.0
    %2751 = vmatpush1.msra.mxu0 0.0
    %2752 = vmatprep.subr.mxu0 0.0
    %2753 = vmatpush1.msra.mxu0 0.0
    %2754 = vmatprep.mubr.f32.mxu0 0.0
    %2755 = vmatmul.mubr.f32.gmra.mrb[0].mxu0 %v2688
    %v2756 = vpop.f32.mrb[0].mxu0
    %v2757 = vadd.f32 0.0, %v2756
    %v2758 = vpop.f32.mrb[0].mxu0
    %2759 = vdwg.mxu0
    %2761 = vrot.lane.b32.xlu0 %v2617, 96
    %v2762 = vpop.permute.xlu0 %2761
    %v2764 = vmul.f32 %v2611, %v2762
    %v2765 = vtanh.pop %v2764
    %v2766 = vmul.f32 %v2765, 1.442695
    %v2767 = vpow.pop %v2766
    %v2768 = vsel %vm510, %v2767, 0.0
    %v2769 = vrot.slane %v2768, 4
    %v2770 = vadd.f32 %v2768, %v2769
    %v2771 = vrot.slane %v2770, 2
    %v2772 = vadd.f32 %v2770, %v2771
    %v2773 = vrot.slane %v2772, 1
    %v2774 = vadd.f32 %v2772, %v2773
    %v2775 = vrcp.pop %v2774
    %v2776 = vmul.f32 %v2767, %v2775
    %2778 = vrot.lane.b32.xlu0 %v2776, 32
    %v2779 = vpop.permute.xlu0 %2778
    %s2781 = scalar_lea.vmem %s13, 24
    %2782 = vst.msk [vmem:[%s2781] sm:$0xf] %vm524, %v2779
    %v2783 = vmul.f32 %v2617, %v2779
    %s2784 = scalar_lea.vmem %s0, 28
    %v2785 = vld [vmem:[%s2784] sm:$0xf]
    %v2787 = vrot.slane %v2783, 4
    %v2789 = vsel %vm348, %v2785, %v2787
    %v2791 = vsel %vm145, %v2789, 0
    %2793 = vmatprep.subr.mxu0 0.0
    %2794 = vmatpush1.msra.mxu0 %v120
    %2795 = vmatprep.subr.mxu0 0.0
    %2796 = vmatpush1.msra.mxu0 %v121
    %2797 = vmatprep.subr.mxu0 0.0
    %2798 = vmatpush1.msra.mxu0 %v122
    %2799 = vmatprep.subr.mxu0 0.0
    %2800 = vmatpush1.msra.mxu0 %v123
    %2801 = vmatprep.subr.mxu0 0.0
    %2802 = vmatpush1.msra.mxu0 0.0
    %2803 = vmatprep.subr.mxu0 0.0
    %2804 = vmatpush1.msra.mxu0 0.0
    %2805 = vmatprep.subr.mxu0 0.0
    %2806 = vmatpush1.msra.mxu0 0.0
    %2807 = vmatprep.subr.mxu0 0.0
    %2808 = vmatpush1.msra.mxu0 0.0
    %2809 = vmatprep.subr.mxu0 0.0
    %2810 = vmatpush1.msra.mxu0 0.0
    %2811 = vmatprep.subr.mxu0 0.0
    %2812 = vmatpush1.msra.mxu0 0.0
    %2813 = vmatprep.subr.mxu0 0.0
    %2814 = vmatpush1.msra.mxu0 0.0
    %2815 = vmatprep.subr.mxu0 0.0
    %2816 = vmatpush1.msra.mxu0 0.0
    %2817 = vmatprep.subr.mxu0 0.0
    %2818 = vmatpush1.msra.mxu0 0.0
    %2819 = vmatprep.subr.mxu0 0.0
    %2820 = vmatpush1.msra.mxu0 0.0
    %2821 = vmatprep.subr.mxu0 0.0
    %2822 = vmatpush1.msra.mxu0 0.0
    %2823 = vmatprep.subr.mxu0 0.0
    %2824 = vmatpush1.msra.mxu0 0.0
    %2825 = vmatprep.subr.mxu0 0.0
    %2826 = vmatpush1.msra.mxu0 0.0
    %2827 = vmatprep.subr.mxu0 0.0
    %2828 = vmatpush1.msra.mxu0 0.0
    %2829 = vmatprep.subr.mxu0 0.0
    %2830 = vmatpush1.msra.mxu0 0.0
    %2831 = vmatprep.subr.mxu0 0.0
    %2832 = vmatpush1.msra.mxu0 0.0
    %2833 = vmatprep.subr.mxu0 0.0
    %2834 = vmatpush1.msra.mxu0 0.0
    %2835 = vmatprep.subr.mxu0 0.0
    %2836 = vmatpush1.msra.mxu0 0.0
    %2837 = vmatprep.subr.mxu0 0.0
    %2838 = vmatpush1.msra.mxu0 0.0
    %2839 = vmatprep.subr.mxu0 0.0
    %2840 = vmatpush1.msra.mxu0 0.0
    %2841 = vmatprep.subr.mxu0 0.0
    %2842 = vmatpush1.msra.mxu0 0.0
    %2843 = vmatprep.subr.mxu0 0.0
    %2844 = vmatpush1.msra.mxu0 0.0
    %2845 = vmatprep.subr.mxu0 0.0
    %2846 = vmatpush1.msra.mxu0 0.0
    %2847 = vmatprep.subr.mxu0 0.0
    %2848 = vmatpush1.msra.mxu0 0.0
    %2849 = vmatprep.subr.mxu0 0.0
    %2850 = vmatpush1.msra.mxu0 0.0
    %2851 = vmatprep.subr.mxu0 0.0
    %2852 = vmatpush1.msra.mxu0 0.0
    %2853 = vmatprep.subr.mxu0 0.0
    %2854 = vmatpush1.msra.mxu0 0.0
    %2855 = vmatprep.subr.mxu0 0.0
    %2856 = vmatpush1.msra.mxu0 0.0
    %2857 = vmatprep.mubr.f32.mxu0 0.0
    %2858 = vmatmul.mubr.f32.gmra.mrb[0].mxu0 %v2791
    %v2859 = vpop.f32.mrb[0].mxu0
    %v2860 = vadd.f32 %v2685, %v2859
    %v2861 = vpop.f32.mrb[0].mxu0
    %2862 = vdwg.mxu0
    %v2863 = vadd.f32 %v2860, %v143
    %v2864 = vxor.u32 %v2863, 2147483648
    %v2865 = vmul.f32 %v2864, 1.442695
    %v2866 = vpow.pop %v2865
    %v2867 = vadd.f32 %v2866, 1.0
    %v2868 = vrcp.pop %v2867
    %v2869 = vmul.f32 1.0, %v2868
    %v2870 = vtanh.pop %v2863
    %v2871 = vmul.f32 %v2869, %v2505
    %2873 = vrot.lane.b32.xlu0 %v2870, 64
    %v2874 = vpop.permute.xlu0 %2873
    %v2876 = vmul.f32 %v2869, %v2874
    %2878 = vrot.lane.b32.xlu0 %v2876, 32
    %v2879 = vpop.permute.xlu0 %2878
    %v2881 = vadd.f32 %v2871, %v2879
    %v2882 = vtanh.pop %v2881
    %2884 = vrot.lane.b32.xlu0 %v2882, 64
    %v2885 = vpop.permute.xlu0 %2884
    %v2887 = vmul.f32 %v2869, %v2885
    %2889 = vrot.lane.b32.xlu0 %v2887, 32
    %v2890 = vpop.permute.xlu0 %2889
    %v2891 = vsel %vm145, %v2890, 0
    %2893 = vmatprep.subr.mxu0 0.0
    %2894 = vmatpush1.msra.mxu0 %v129
    %2895 = vmatprep.subr.mxu0 0.0
    %2896 = vmatpush1.msra.mxu0 %v130
    %2897 = vmatprep.subr.mxu0 0.0
    %2898 = vmatpush1.msra.mxu0 %v131
    %2899 = vmatprep.subr.mxu0 0.0
    %2900 = vmatpush1.msra.mxu0 %v132
    %2901 = vmatprep.subr.mxu0 0.0
    %2902 = vmatpush1.msra.mxu0 0.0
    %2903 = vmatprep.subr.mxu0 0.0
    %2904 = vmatpush1.msra.mxu0 0.0
    %2905 = vmatprep.subr.mxu0 0.0
    %2906 = vmatpush1.msra.mxu0 0.0
    %2907 = vmatprep.subr.mxu0 0.0
    %2908 = vmatpush1.msra.mxu0 0.0
    %2909 = vmatprep.subr.mxu0 0.0
    %2910 = vmatpush1.msra.mxu0 0.0
    %2911 = vmatprep.subr.mxu0 0.0
    %2912 = vmatpush1.msra.mxu0 0.0
    %2913 = vmatprep.subr.mxu0 0.0
    %2914 = vmatpush1.msra.mxu0 0.0
    %2915 = vmatprep.subr.mxu0 0.0
    %2916 = vmatpush1.msra.mxu0 0.0
    %2917 = vmatprep.subr.mxu0 0.0
    %2918 = vmatpush1.msra.mxu0 0.0
    %2919 = vmatprep.subr.mxu0 0.0
    %2920 = vmatpush1.msra.mxu0 0.0
    %2921 = vmatprep.subr.mxu0 0.0
    %2922 = vmatpush1.msra.mxu0 0.0
    %2923 = vmatprep.subr.mxu0 0.0
    %2924 = vmatpush1.msra.mxu0 0.0
    %2925 = vmatprep.subr.mxu0 0.0
    %2926 = vmatpush1.msra.mxu0 0.0
    %2927 = vmatprep.subr.mxu0 0.0
    %2928 = vmatpush1.msra.mxu0 0.0
    %2929 = vmatprep.subr.mxu0 0.0
    %2930 = vmatpush1.msra.mxu0 0.0
    %2931 = vmatprep.subr.mxu0 0.0
    %2932 = vmatpush1.msra.mxu0 0.0
    %2933 = vmatprep.subr.mxu0 0.0
    %2934 = vmatpush1.msra.mxu0 0.0
    %2935 = vmatprep.subr.mxu0 0.0
    %2936 = vmatpush1.msra.mxu0 0.0
    %2937 = vmatprep.subr.mxu0 0.0
    %2938 = vmatpush1.msra.mxu0 0.0
    %2939 = vmatprep.subr.mxu0 0.0
    %2940 = vmatpush1.msra.mxu0 0.0
    %2941 = vmatprep.subr.mxu0 0.0
    %2942 = vmatpush1.msra.mxu0 0.0
    %2943 = vmatprep.subr.mxu0 0.0
    %2944 = vmatpush1.msra.mxu0 0.0
    %2945 = vmatprep.subr.mxu0 0.0
    %2946 = vmatpush1.msra.mxu0 0.0
    %2947 = vmatprep.subr.mxu0 0.0
    %2948 = vmatpush1.msra.mxu0 0.0
    %2949 = vmatprep.subr.mxu0 0.0
    %2950 = vmatpush1.msra.mxu0 0.0
    %2951 = vmatprep.subr.mxu0 0.0
    %2952 = vmatpush1.msra.mxu0 0.0
    %2953 = vmatprep.subr.mxu0 0.0
    %2954 = vmatpush1.msra.mxu0 0.0
    %2955 = vmatprep.subr.mxu0 0.0
    %2956 = vmatpush1.msra.mxu0 0.0
    %2957 = vmatprep.mubr.f32.mxu0 0.0
    %2958 = vmatmul.mubr.f32.gmra.mrb[0].mxu0 %v2891
    %v2959 = vpop.f32.mrb[0].mxu0
    %v2960 = vadd.f32 %v2757, %v2959
    %v2961 = vpop.f32.mrb[0].mxu0
    %2962 = vdwg.mxu0
    %v2963 = vadd.f32 %v2960, %v247
    %v2964 = vxor.u32 %v2963, 2147483648
    %v2965 = vmul.f32 %v2964, 1.442695
    %v2966 = vpow.pop %v2965
    %v2967 = vadd.f32 %v2966, 1.0
    %v2968 = vrcp.pop %v2967
    %v2969 = vmul.f32 1.0, %v2968
    %v2970 = vtanh.pop %v2963
    %v2971 = vmul.f32 %v2969, %v2605
    %2973 = vrot.lane.b32.xlu0 %v2970, 64
    %v2974 = vpop.permute.xlu0 %2973
    %v2976 = vmul.f32 %v2969, %v2974
    %2978 = vrot.lane.b32.xlu0 %v2976, 32
    %v2979 = vpop.permute.xlu0 %2978
    %v2981 = vadd.f32 %v2971, %v2979
    %v2982 = vtanh.pop %v2981
    %2984 = vrot.lane.b32.xlu0 %v2982, 64
    %v2985 = vpop.permute.xlu0 %2984
    %v2987 = vmul.f32 %v2969, %v2985
    %2989 = vrot.lane.b32.xlu0 %v2987, 32
    %v2990 = vpop.permute.xlu0 %2989
    %2992 = vst.msk [vmem:[#allocation2 + $0x14] sm:$0xf0] %vm735, %v2990
    %v2993 = vld [vmem:[%s2784] sm:$0xf]
    %2994 = vmatprep.subr.mxu0 0.0
    %2995 = vmatpush1.msra.mxu0 %v124
    %2996 = vmatprep.subr.mxu0 0.0
    %2997 = vmatpush1.msra.mxu0 %v125
    %2998 = vmatprep.subr.mxu0 0.0
    %2999 = vmatpush1.msra.mxu0 %v126
    %3000 = vmatprep.subr.mxu0 0.0
    %3001 = vmatpush1.msra.mxu0 %v127
    %3002 = vmatprep.subr.mxu0 0.0
    %3003 = vmatpush1.msra.mxu0 0.0
    %3004 = vmatprep.subr.mxu0 0.0
    %3005 = vmatpush1.msra.mxu0 0.0
    %3006 = vmatprep.subr.mxu0 0.0
    %3007 = vmatpush1.msra.mxu0 0.0
    %3008 = vmatprep.subr.mxu0 0.0
    %3009 = vmatpush1.msra.mxu0 0.0
    %3010 = vmatprep.subr.mxu0 0.0
    %3011 = vmatpush1.msra.mxu0 0.0
    %3012 = vmatprep.subr.mxu0 0.0
    %3013 = vmatpush1.msra.mxu0 0.0
    %3014 = vmatprep.subr.mxu0 0.0
    %3015 = vmatpush1.msra.mxu0 0.0
    %3016 = vmatprep.subr.mxu0 0.0
    %3017 = vmatpush1.msra.mxu0 0.0
    %3018 = vmatprep.subr.mxu0 0.0
    %3019 = vmatpush1.msra.mxu0 0.0
    %3020 = vmatprep.subr.mxu0 0.0
    %3021 = vmatpush1.msra.mxu0 0.0
    %3022 = vmatprep.subr.mxu0 0.0
    %3023 = vmatpush1.msra.mxu0 0.0
    %3024 = vmatprep.subr.mxu0 0.0
    %3025 = vmatpush1.msra.mxu0 0.0
    %3026 = vmatprep.subr.mxu0 0.0
    %3027 = vmatpush1.msra.mxu0 0.0
    %3028 = vmatprep.subr.mxu0 0.0
    %3029 = vmatpush1.msra.mxu0 0.0
    %3030 = vmatprep.subr.mxu0 0.0
    %3031 = vmatpush1.msra.mxu0 0.0
    %3032 = vmatprep.subr.mxu0 0.0
    %3033 = vmatpush1.msra.mxu0 0.0
    %3034 = vmatprep.subr.mxu0 0.0
    %3035 = vmatpush1.msra.mxu0 0.0
    %3036 = vmatprep.subr.mxu0 0.0
    %3037 = vmatpush1.msra.mxu0 0.0
    %3038 = vmatprep.subr.mxu0 0.0
    %3039 = vmatpush1.msra.mxu0 0.0
    %3040 = vmatprep.subr.mxu0 0.0
    %3041 = vmatpush1.msra.mxu0 0.0
    %3042 = vmatprep.subr.mxu0 0.0
    %3043 = vmatpush1.msra.mxu0 0.0
    %3044 = vmatprep.subr.mxu0 0.0
    %3045 = vmatpush1.msra.mxu0 0.0
    %3046 = vmatprep.subr.mxu0 0.0
    %3047 = vmatpush1.msra.mxu0 0.0
    %3048 = vmatprep.subr.mxu0 0.0
    %3049 = vmatpush1.msra.mxu0 0.0
    %3050 = vmatprep.subr.mxu0 0.0
    %3051 = vmatpush1.msra.mxu0 0.0
    %3052 = vmatprep.subr.mxu0 0.0
    %3053 = vmatpush1.msra.mxu0 0.0
    %3054 = vmatprep.subr.mxu0 0.0
    %3055 = vmatpush1.msra.mxu0 0.0
    %3056 = vmatprep.subr.mxu0 0.0
    %3057 = vmatpush1.msra.mxu0 0.0
    %3058 = vmatprep.mubr.f32.mxu0 0.0
    %3059 = vmatmul.mubr.f32.gmra.mrb[0].mxu0 %v2891
    %v3060 = vpop.f32.mrb[0].mxu0
    %v3061 = vadd.f32 0.0, %v3060
    %v3062 = vpop.f32.mrb[0].mxu0
    %3063 = vdwg.mxu0
    %v3064 = vsel %vm145, %v2990, 0
    %3066 = vmatprep.subr.mxu0 0.0
    %3067 = vmatpush1.msra.mxu0 %v133
    %3068 = vmatprep.subr.mxu0 0.0
    %3069 = vmatpush1.msra.mxu0 %v134
    %3070 = vmatprep.subr.mxu0 0.0
    %3071 = vmatpush1.msra.mxu0 %v135
    %3072 = vmatprep.subr.mxu0 0.0
    %3073 = vmatpush1.msra.mxu0 %v136
    %3074 = vmatprep.subr.mxu0 0.0
    %3075 = vmatpush1.msra.mxu0 0.0
    %3076 = vmatprep.subr.mxu0 0.0
    %3077 = vmatpush1.msra.mxu0 0.0
    %3078 = vmatprep.subr.mxu0 0.0
    %3079 = vmatpush1.msra.mxu0 0.0
    %3080 = vmatprep.subr.mxu0 0.0
    %3081 = vmatpush1.msra.mxu0 0.0
    %3082 = vmatprep.subr.mxu0 0.0
    %3083 = vmatpush1.msra.mxu0 0.0
    %3084 = vmatprep.subr.mxu0 0.0
    %3085 = vmatpush1.msra.mxu0 0.0
    %3086 = vmatprep.subr.mxu0 0.0
    %3087 = vmatpush1.msra.mxu0 0.0
    %3088 = vmatprep.subr.mxu0 0.0
    %3089 = vmatpush1.msra.mxu0 0.0
    %3090 = vmatprep.subr.mxu0 0.0
    %3091 = vmatpush1.msra.mxu0 0.0
    %3092 = vmatprep.subr.mxu0 0.0
    %3093 = vmatpush1.msra.mxu0 0.0
    %3094 = vmatprep.subr.mxu0 0.0
    %3095 = vmatpush1.msra.mxu0 0.0
    %3096 = vmatprep.subr.mxu0 0.0
    %3097 = vmatpush1.msra.mxu0 0.0
    %3098 = vmatprep.subr.mxu0 0.0
    %3099 = vmatpush1.msra.mxu0 0.0
    %3100 = vmatprep.subr.mxu0 0.0
    %3101 = vmatpush1.msra.mxu0 0.0
    %3102 = vmatprep.subr.mxu0 0.0
    %3103 = vmatpush1.msra.mxu0 0.0
    %3104 = vmatprep.subr.mxu0 0.0
    %3105 = vmatpush1.msra.mxu0 0.0
    %3106 = vmatprep.subr.mxu0 0.0
    %3107 = vmatpush1.msra.mxu0 0.0
    %3108 = vmatprep.subr.mxu0 0.0
    %3109 = vmatpush1.msra.mxu0 0.0
    %3110 = vmatprep.subr.mxu0 0.0
    %3111 = vmatpush1.msra.mxu0 0.0
    %3112 = vmatprep.subr.mxu0 0.0
    %3113 = vmatpush1.msra.mxu0 0.0
    %3114 = vmatprep.subr.mxu0 0.0
    %3115 = vmatpush1.msra.mxu0 0.0
    %3116 = vmatprep.subr.mxu0 0.0
    %3117 = vmatpush1.msra.mxu0 0.0
    %3118 = vmatprep.subr.mxu0 0.0
    %3119 = vmatpush1.msra.mxu0 0.0
    %3120 = vmatprep.subr.mxu0 0.0
    %3121 = vmatpush1.msra.mxu0 0.0
    %3122 = vmatprep.subr.mxu0 0.0
    %3123 = vmatpush1.msra.mxu0 0.0
    %3124 = vmatprep.subr.mxu0 0.0
    %3125 = vmatpush1.msra.mxu0 0.0
    %3126 = vmatprep.subr.mxu0 0.0
    %3127 = vmatpush1.msra.mxu0 0.0
    %3128 = vmatprep.subr.mxu0 0.0
    %3129 = vmatpush1.msra.mxu0 0.0
    %3130 = vmatprep.mubr.f32.mxu0 0.0
    %3131 = vmatmul.mubr.f32.gmra.mrb[0].mxu0 %v3064
    %v3132 = vpop.f32.mrb[0].mxu0
    %v3133 = vadd.f32 0.0, %v3132
    %v3134 = vpop.f32.mrb[0].mxu0
    %3135 = vdwg.mxu0
    %3137 = vrot.lane.b32.xlu0 %v2993, 96
    %v3138 = vpop.permute.xlu0 %3137
    %v3140 = vmul.f32 %v2987, %v3138
    %v3141 = vtanh.pop %v3140
    %v3142 = vmul.f32 %v3141, 1.442695
    %v3143 = vpow.pop %v3142
    %v3144 = vsel %vm510, %v3143, 0.0
    %v3145 = vrot.slane %v3144, 4
    %v3146 = vadd.f32 %v3144, %v3145
    %v3147 = vrot.slane %v3146, 2
    %v3148 = vadd.f32 %v3146, %v3147
    %v3149 = vrot.slane %v3148, 1
    %v3150 = vadd.f32 %v3148, %v3149
    %v3151 = vrcp.pop %v3150
    %v3152 = vmul.f32 %v3143, %v3151
    %3154 = vrot.lane.b32.xlu0 %v3152, 32
    %v3155 = vpop.permute.xlu0 %3154
    %s3157 = scalar_lea.vmem %s13, 28
    %3158 = vst.msk [vmem:[%s3157] sm:$0xf] %vm524, %v3155
    %v3159 = vmul.f32 %v2993, %v3155
    %v3161 = vrot.slane %v3159, 4
    %v3163 = vsel %vm348, %v2993, %v3161
    %v3165 = vsel %vm145, %v3163, 0
    %3167 = vmatprep.subr.mxu0 0.0
    %3168 = vmatpush1.msra.mxu0 %v120
    %3169 = vmatprep.subr.mxu0 0.0
    %3170 = vmatpush1.msra.mxu0 %v121
    %3171 = vmatprep.subr.mxu0 0.0
    %3172 = vmatpush1.msra.mxu0 %v122
    %3173 = vmatprep.subr.mxu0 0.0
    %3174 = vmatpush1.msra.mxu0 %v123
    %3175 = vmatprep.subr.mxu0 0.0
    %3176 = vmatpush1.msra.mxu0 0.0
    %3177 = vmatprep.subr.mxu0 0.0
    %3178 = vmatpush1.msra.mxu0 0.0
    %3179 = vmatprep.subr.mxu0 0.0
    %3180 = vmatpush1.msra.mxu0 0.0
    %3181 = vmatprep.subr.mxu0 0.0
    %3182 = vmatpush1.msra.mxu0 0.0
    %3183 = vmatprep.subr.mxu0 0.0
    %3184 = vmatpush1.msra.mxu0 0.0
    %3185 = vmatprep.subr.mxu0 0.0
    %3186 = vmatpush1.msra.mxu0 0.0
    %3187 = vmatprep.subr.mxu0 0.0
    %3188 = vmatpush1.msra.mxu0 0.0
    %3189 = vmatprep.subr.mxu0 0.0
    %3190 = vmatpush1.msra.mxu0 0.0
    %3191 = vmatprep.subr.mxu0 0.0
    %3192 = vmatpush1.msra.mxu0 0.0
    %3193 = vmatprep.subr.mxu0 0.0
    %3194 = vmatpush1.msra.mxu0 0.0
    %3195 = vmatprep.subr.mxu0 0.0
    %3196 = vmatpush1.msra.mxu0 0.0
    %3197 = vmatprep.subr.mxu0 0.0
    %3198 = vmatpush1.msra.mxu0 0.0
    %3199 = vmatprep.subr.mxu0 0.0
    %3200 = vmatpush1.msra.mxu0 0.0
    %3201 = vmatprep.subr.mxu0 0.0
    %3202 = vmatpush1.msra.mxu0 0.0
    %3203 = vmatprep.subr.mxu0 0.0
    %3204 = vmatpush1.msra.mxu0 0.0
    %3205 = vmatprep.subr.mxu0 0.0
    %3206 = vmatpush1.msra.mxu0 0.0
    %3207 = vmatprep.subr.mxu0 0.0
    %3208 = vmatpush1.msra.mxu0 0.0
    %3209 = vmatprep.subr.mxu0 0.0
    %3210 = vmatpush1.msra.mxu0 0.0
    %3211 = vmatprep.subr.mxu0 0.0
    %3212 = vmatpush1.msra.mxu0 0.0
    %3213 = vmatprep.subr.mxu0 0.0
    %3214 = vmatpush1.msra.mxu0 0.0
    %3215 = vmatprep.subr.mxu0 0.0
    %3216 = vmatpush1.msra.mxu0 0.0
    %3217 = vmatprep.subr.mxu0 0.0
    %3218 = vmatpush1.msra.mxu0 0.0
    %3219 = vmatprep.subr.mxu0 0.0
    %3220 = vmatpush1.msra.mxu0 0.0
    %3221 = vmatprep.subr.mxu0 0.0
    %3222 = vmatpush1.msra.mxu0 0.0
    %3223 = vmatprep.subr.mxu0 0.0
    %3224 = vmatpush1.msra.mxu0 0.0
    %3225 = vmatprep.subr.mxu0 0.0
    %3226 = vmatpush1.msra.mxu0 0.0
    %3227 = vmatprep.subr.mxu0 0.0
    %3228 = vmatpush1.msra.mxu0 0.0
    %3229 = vmatprep.subr.mxu0 0.0
    %3230 = vmatpush1.msra.mxu0 0.0
    %3231 = vmatprep.mubr.f32.mxu0 0.0
    %3232 = vmatmul.mubr.f32.gmra.mrb[0].mxu0 %v3165
    %v3233 = vpop.f32.mrb[0].mxu0
    %v3234 = vadd.f32 %v3061, %v3233
    %v3235 = vpop.f32.mrb[0].mxu0
    %3236 = vdwg.mxu0
    %v3237 = vadd.f32 %v3234, %v143
    %v3238 = vxor.u32 %v3237, 2147483648
    %v3239 = vmul.f32 %v3238, 1.442695
    %v3240 = vpow.pop %v3239
    %v3241 = vadd.f32 %v3240, 1.0
    %v3242 = vrcp.pop %v3241
    %v3243 = vmul.f32 1.0, %v3242
    %v3244 = vtanh.pop %v3237
    %v3245 = vmul.f32 %v3243, %v2881
    %3247 = vrot.lane.b32.xlu0 %v3244, 64
    %v3248 = vpop.permute.xlu0 %3247
    %v3250 = vmul.f32 %v3243, %v3248
    %3252 = vrot.lane.b32.xlu0 %v3250, 32
    %v3253 = vpop.permute.xlu0 %3252
    %v3255 = vadd.f32 %v3245, %v3253
    %v3256 = vtanh.pop %v3255
    %3258 = vrot.lane.b32.xlu0 %v3256, 64
    %v3259 = vpop.permute.xlu0 %3258
    %v3261 = vmul.f32 %v3243, %v3259
    %3263 = vrot.lane.b32.xlu0 %v3261, 32
    %v3264 = vpop.permute.xlu0 %3263
    %v3265 = vsel %vm145, %v3264, 0
    %3267 = vmatprep.subr.mxu0 0.0
    %3268 = vmatpush1.msra.mxu0 %v129
    %3269 = vmatprep.subr.mxu0 0.0
    %3270 = vmatpush1.msra.mxu0 %v130
    %3271 = vmatprep.subr.mxu0 0.0
    %3272 = vmatpush1.msra.mxu0 %v131
    %3273 = vmatprep.subr.mxu0 0.0
    %3274 = vmatpush1.msra.mxu0 %v132
    %3275 = vmatprep.subr.mxu0 0.0
    %3276 = vmatpush1.msra.mxu0 0.0
    %3277 = vmatprep.subr.mxu0 0.0
    %3278 = vmatpush1.msra.mxu0 0.0
    %3279 = vmatprep.subr.mxu0 0.0
    %3280 = vmatpush1.msra.mxu0 0.0
    %3281 = vmatprep.subr.mxu0 0.0
    %3282 = vmatpush1.msra.mxu0 0.0
    %3283 = vmatprep.subr.mxu0 0.0
    %3284 = vmatpush1.msra.mxu0 0.0
    %3285 = vmatprep.subr.mxu0 0.0
    %3286 = vmatpush1.msra.mxu0 0.0
    %3287 = vmatprep.subr.mxu0 0.0
    %3288 = vmatpush1.msra.mxu0 0.0
    %3289 = vmatprep.subr.mxu0 0.0
    %3290 = vmatpush1.msra.mxu0 0.0
    %3291 = vmatprep.subr.mxu0 0.0
    %3292 = vmatpush1.msra.mxu0 0.0
    %3293 = vmatprep.subr.mxu0 0.0
    %3294 = vmatpush1.msra.mxu0 0.0
    %3295 = vmatprep.subr.mxu0 0.0
    %3296 = vmatpush1.msra.mxu0 0.0
    %3297 = vmatprep.subr.mxu0 0.0
    %3298 = vmatpush1.msra.mxu0 0.0
    %3299 = vmatprep.subr.mxu0 0.0
    %3300 = vmatpush1.msra.mxu0 0.0
    %3301 = vmatprep.subr.mxu0 0.0
    %3302 = vmatpush1.msra.mxu0 0.0
    %3303 = vmatprep.subr.mxu0 0.0
    %3304 = vmatpush1.msra.mxu0 0.0
    %3305 = vmatprep.subr.mxu0 0.0
    %3306 = vmatpush1.msra.mxu0 0.0
    %3307 = vmatprep.subr.mxu0 0.0
    %3308 = vmatpush1.msra.mxu0 0.0
    %3309 = vmatprep.subr.mxu0 0.0
    %3310 = vmatpush1.msra.mxu0 0.0
    %3311 = vmatprep.subr.mxu0 0.0
    %3312 = vmatpush1.msra.mxu0 0.0
    %3313 = vmatprep.subr.mxu0 0.0
    %3314 = vmatpush1.msra.mxu0 0.0
    %3315 = vmatprep.subr.mxu0 0.0
    %3316 = vmatpush1.msra.mxu0 0.0
    %3317 = vmatprep.subr.mxu0 0.0
    %3318 = vmatpush1.msra.mxu0 0.0
    %3319 = vmatprep.subr.mxu0 0.0
    %3320 = vmatpush1.msra.mxu0 0.0
    %3321 = vmatprep.subr.mxu0 0.0
    %3322 = vmatpush1.msra.mxu0 0.0
    %3323 = vmatprep.subr.mxu0 0.0
    %3324 = vmatpush1.msra.mxu0 0.0
    %3325 = vmatprep.subr.mxu0 0.0
    %3326 = vmatpush1.msra.mxu0 0.0
    %3327 = vmatprep.subr.mxu0 0.0
    %3328 = vmatpush1.msra.mxu0 0.0
    %3329 = vmatprep.subr.mxu0 0.0
    %3330 = vmatpush1.msra.mxu0 0.0
    %3331 = vmatprep.mubr.f32.mxu0 0.0
    %3332 = vmatmul.mubr.f32.gmra.mrb[0].mxu0 %v3265
    %v3333 = vpop.f32.mrb[0].mxu0
    %v3334 = vadd.f32 %v3133, %v3333
    %v3335 = vpop.f32.mrb[0].mxu0
    %3336 = vdwg.mxu0
    %v3337 = vadd.f32 %v3334, %v247
    %v3338 = vxor.u32 %v3337, 2147483648
    %v3339 = vmul.f32 %v3338, 1.442695
    %v3340 = vpow.pop %v3339
    %v3341 = vadd.f32 %v3340, 1.0
    %v3342 = vrcp.pop %v3341
    %v3343 = vmul.f32 1.0, %v3342
    %v3344 = vtanh.pop %v3337
    %v3345 = vmul.f32 %v3343, %v2981
    %3347 = vrot.lane.b32.xlu0 %v3344, 64
    %v3348 = vpop.permute.xlu0 %3347
    %v3350 = vmul.f32 %v3343, %v3348
    %3352 = vrot.lane.b32.xlu0 %v3350, 32
    %v3353 = vpop.permute.xlu0 %3352
    %v3355 = vadd.f32 %v3345, %v3353
    %v3356 = vtanh.pop %v3355
    %3358 = vrot.lane.b32.xlu0 %v3356, 64
    %v3359 = vpop.permute.xlu0 %3358
    %v3361 = vmul.f32 %v3343, %v3359
    %3363 = vrot.lane.b32.xlu0 %v3361, 32
    %v3364 = vpop.permute.xlu0 %3363
    %3366 = vst.msk [vmem:[#allocation2 + $0x18] sm:$0xf0] %vm735, %v3364
    %v3367 = vld [vmem:[#allocation2] sm:$0xff]
    %v3368 = vld [vmem:[#allocation2 + $0x8] sm:$0xff]
    %v3369 = vld [vmem:[#allocation2 + $0x10] sm:$0xff]
    %v3370 = vld [vmem:[#allocation2 + $0x18] sm:$0xff]
    %vm3371 = vcmp.gt.f32.partialorder %v3367, 0.0
    %vm3372 = vcmp.gt.f32.partialorder %v3368, 0.0
    %vm3373 = vcmp.gt.f32.partialorder %v3369, 0.0
    %vm3374 = vcmp.gt.f32.partialorder %v3370, 0.0
    %v3375 = vmul.f32 %v3367, 1.442695
    %v3376 = vpow.pop %v3375
    %v3377 = vmul.f32 %v3368, 1.442695
    %v3378 = vpow.pop %v3377
    %v3379 = vmul.f32 %v3369, 1.442695
    %v3380 = vpow.pop %v3379
    %v3381 = vmul.f32 %v3370, 1.442695
    %v3382 = vpow.pop %v3381
    %v3383 = vsub.f32 %v3376, 1.0
    %v3384 = vsub.f32 %v3378, 1.0
    %v3385 = vsub.f32 %v3380, 1.0
    %v3386 = vsub.f32 %v3382, 1.0
    %v3387 = vmul.f32 %v3383, 1.6732632
    %v3388 = vmul.f32 %v3384, 1.6732632
    %v3389 = vmul.f32 %v3385, 1.6732632
    %v3390 = vmul.f32 %v3386, 1.6732632
    %v3391 = vsel %vm3371, %v3367, %v3387
    %v3392 = vsel %vm3372, %v3368, %v3388
    %v3393 = vsel %vm3373, %v3369, %v3389
    %v3394 = vsel %vm3374, %v3370, %v3390
    %v3395 = vmul.f32 %v3391, 1.050701
    %v3396 = vmul.f32 %v3392, 1.050701
    %v3397 = vmul.f32 %v3393, 1.050701
    %v3398 = vmul.f32 %v3394, 1.050701
    %v3399 = vld [vmem:[#allocation8] sm:$0xff]
    %v3400 = vld [vmem:[#allocation8 + $0x8] sm:$0xff]
    %v3401 = vld [vmem:[#allocation8 + $0x10] sm:$0xff]
    %v3402 = vld [vmem:[#allocation8 + $0x18] sm:$0xff]
    %v3403 = vld [vmem:[#allocation10] sm:$0x1]
    %v3405 = vlaneseq
    %v3406 = vshrl.u32 %v3405, 7
    %v3407 = vsub.s32 0, %v3406
    %v3408 = vrot.slane %v3403, %v3407
    %v3411 = vsel %vm145, %v3395, 0
    %v3414 = vsel %vm145, %v3396, 0
    %v3417 = vsel %vm145, %v3397, 0
    %v3420 = vsel %vm145, %v3398, 0
    %3422 = vmatprep.subr.mxu0 0.0
    %3423 = vmatpush1.msra.mxu0 %v3399
    %3424 = vmatprep.subr.mxu0 0.0
    %3425 = vmatpush1.msra.mxu0 %v3400
    %3426 = vmatprep.subr.mxu0 0.0
    %3427 = vmatpush1.msra.mxu0 %v3401
    %3428 = vmatprep.subr.mxu0 0.0
    %3429 = vmatpush1.msra.mxu0 %v3402
    %3430 = vmatprep.subr.mxu0 0.0
    %3431 = vmatpush1.msra.mxu0 0.0
    %3432 = vmatprep.subr.mxu0 0.0
    %3433 = vmatpush1.msra.mxu0 0.0
    %3434 = vmatprep.subr.mxu0 0.0
    %3435 = vmatpush1.msra.mxu0 0.0
    %3436 = vmatprep.subr.mxu0 0.0
    %3437 = vmatpush1.msra.mxu0 0.0
    %3438 = vmatprep.subr.mxu0 0.0
    %3439 = vmatpush1.msra.mxu0 0.0
    %3440 = vmatprep.subr.mxu0 0.0
    %3441 = vmatpush1.msra.mxu0 0.0
    %3442 = vmatprep.subr.mxu0 0.0
    %3443 = vmatpush1.msra.mxu0 0.0
    %3444 = vmatprep.subr.mxu0 0.0
    %3445 = vmatpush1.msra.mxu0 0.0
    %3446 = vmatprep.subr.mxu0 0.0
    %3447 = vmatpush1.msra.mxu0 0.0
    %3448 = vmatprep.subr.mxu0 0.0
    %3449 = vmatpush1.msra.mxu0 0.0
    %3450 = vmatprep.subr.mxu0 0.0
    %3451 = vmatpush1.msra.mxu0 0.0
    %3452 = vmatprep.subr.mxu0 0.0
    %3453 = vmatpush1.msra.mxu0 0.0
    %3454 = vmatprep.subr.mxu0 0.0
    %3455 = vmatpush1.msra.mxu0 0.0
    %3456 = vmatprep.subr.mxu0 0.0
    %3457 = vmatpush1.msra.mxu0 0.0
    %3458 = vmatprep.subr.mxu0 0.0
    %3459 = vmatpush1.msra.mxu0 0.0
    %3460 = vmatprep.subr.mxu0 0.0
    %3461 = vmatpush1.msra.mxu0 0.0
    %3462 = vmatprep.subr.mxu0 0.0
    %3463 = vmatpush1.msra.mxu0 0.0
    %3464 = vmatprep.subr.mxu0 0.0
    %3465 = vmatpush1.msra.mxu0 0.0
    %3466 = vmatprep.subr.mxu0 0.0
    %3467 = vmatpush1.msra.mxu0 0.0
    %3468 = vmatprep.subr.mxu0 0.0
    %3469 = vmatpush1.msra.mxu0 0.0
    %3470 = vmatprep.subr.mxu0 0.0
    %3471 = vmatpush1.msra.mxu0 0.0
    %3472 = vmatprep.subr.mxu0 0.0
    %3473 = vmatpush1.msra.mxu0 0.0
    %3474 = vmatprep.subr.mxu0 0.0
    %3475 = vmatpush1.msra.mxu0 0.0
    %3476 = vmatprep.subr.mxu0 0.0
    %3477 = vmatpush1.msra.mxu0 0.0
    %3478 = vmatprep.subr.mxu0 0.0
    %3479 = vmatpush1.msra.mxu0 0.0
    %3480 = vmatprep.subr.mxu0 0.0
    %3481 = vmatpush1.msra.mxu0 0.0
    %3482 = vmatprep.subr.mxu0 0.0
    %3483 = vmatpush1.msra.mxu0 0.0
    %3484 = vmatprep.subr.mxu0 0.0
    %3485 = vmatpush1.msra.mxu0 0.0
    %3486 = vmatprep.mubr.f32.mxu0 0.0
    %3487 = vmatmul.mubr.f32.gmra.mrb[0].mxu0 %v3411
    %v3488 = vpop.f32.mrb[0].mxu0
    %v3489 = vadd.f32 %v3408, %v3488
    %v3490 = vpop.f32.mrb[0].mxu0
    %3491 = vmatprep.mubr.f32.mxu0 0.0
    %3492 = vmatmul.mubr.f32.gmra.mrb[0].mxu0 %v3414
    %v3493 = vpop.f32.mrb[0].mxu0
    %v3494 = vadd.f32 %v3408, %v3493
    %v3495 = vpop.f32.mrb[0].mxu0
    %3496 = vmatprep.mubr.f32.mxu0 0.0
    %3497 = vmatmul.mubr.f32.gmra.mrb[0].mxu0 %v3417
    %v3498 = vpop.f32.mrb[0].mxu0
    %v3499 = vadd.f32 %v3408, %v3498
    %v3500 = vpop.f32.mrb[0].mxu0
    %3501 = vmatprep.mubr.f32.mxu0 0.0
    %3502 = vmatmul.mubr.f32.gmra.mrb[0].mxu0 %v3420
    %v3503 = vpop.f32.mrb[0].mxu0
    %v3504 = vadd.f32 %v3408, %v3503
    %v3505 = vpop.f32.mrb[0].mxu0
    %3506 = vdwg.mxu0
    %v3507 = vld [vmem:[%s9] sm:$0xff]
    %v3508 = vld [vmem:[%s9 + $0x8] sm:$0xff]
    %v3509 = vld [vmem:[%s9 + $0x10] sm:$0xff]
    %v3510 = vld [vmem:[%s9 + $0x18] sm:$0xff]
    %3512 = vset.pattern.permute.xlu0 0
    %3513 = vperm.xlu0 %3512, %v3507
    %v3514 = vpop.permute.xlu0 %3513
    %3517 = vset.pattern.permute.xlu0 0
    %3518 = vperm.xlu0 %3517, %v3508
    %v3519 = vpop.permute.xlu0 %3518
    %3522 = vset.pattern.permute.xlu0 0
    %3523 = vperm.xlu0 %3522, %v3509
    %v3524 = vpop.permute.xlu0 %3523
    %3527 = vset.pattern.permute.xlu0 0
    %3528 = vperm.xlu0 %3527, %v3510
    %v3529 = vpop.permute.xlu0 %3528
    %v3531 = vmul.f32 %v3489, %v3514
    %v3532 = vmul.f32 %v3494, %v3519
    %v3533 = vmul.f32 %v3499, %v3524
    %v3534 = vmul.f32 %v3504, %v3529
    %v3535 = vld [vmem:[%s10] sm:$0xff]
    %v3536 = vld [vmem:[%s10 + $0x8] sm:$0xff]
    %v3537 = vld [vmem:[%s10 + $0x10] sm:$0xff]
    %v3538 = vld [vmem:[%s10 + $0x18] sm:$0xff]
    %3540 = vset.pattern.permute.xlu0 0
    %3541 = vperm.xlu0 %3540, %v3535
    %v3542 = vpop.permute.xlu0 %3541
    %3545 = vset.pattern.permute.xlu0 0
    %3546 = vperm.xlu0 %3545, %v3536
    %v3547 = vpop.permute.xlu0 %3546
    %3550 = vset.pattern.permute.xlu0 0
    %3551 = vperm.xlu0 %3550, %v3537
    %v3552 = vpop.permute.xlu0 %3551
    %3555 = vset.pattern.permute.xlu0 0
    %3556 = vperm.xlu0 %3555, %v3538
    %v3557 = vpop.permute.xlu0 %3556
    %v3559 = vadd.f32 %v3531, %v3542
    %v3560 = vadd.f32 %v3532, %v3547
    %v3561 = vadd.f32 %v3533, %v3552
    %v3562 = vadd.f32 %v3534, %v3557
    %vm3563 = vcmp.gt.f32.partialorder %v3559, 0.0
    %vm3564 = vcmp.gt.f32.partialorder %v3560, 0.0
    %vm3565 = vcmp.gt.f32.partialorder %v3561, 0.0
    %vm3566 = vcmp.gt.f32.partialorder %v3562, 0.0
    %v3567 = vmul.f32 %v3559, 1.442695
    %v3568 = vpow.pop %v3567
    %v3569 = vmul.f32 %v3560, 1.442695
    %v3570 = vpow.pop %v3569
    %v3571 = vmul.f32 %v3561, 1.442695
    %v3572 = vpow.pop %v3571
    %v3573 = vmul.f32 %v3562, 1.442695
    %v3574 = vpow.pop %v3573
    %v3575 = vsub.f32 %v3568, 1.0
    %v3576 = vsub.f32 %v3570, 1.0
    %v3577 = vsub.f32 %v3572, 1.0
    %v3578 = vsub.f32 %v3574, 1.0
    %v3579 = vmul.f32 %v3575, 1.6732632
    %v3580 = vmul.f32 %v3576, 1.6732632
    %v3581 = vmul.f32 %v3577, 1.6732632
    %v3582 = vmul.f32 %v3578, 1.6732632
    %v3583 = vsel %vm3563, %v3559, %v3579
    %v3584 = vsel %vm3564, %v3560, %v3580
    %v3585 = vsel %vm3565, %v3561, %v3581
    %v3586 = vsel %vm3566, %v3562, %v3582
    %v3587 = vmul.f32 %v3583, 1.050701
    %v3588 = vmul.f32 %v3584, 1.050701
    %v3589 = vmul.f32 %v3585, 1.050701
    %v3590 = vmul.f32 %v3586, 1.050701
    %v3591 = vld [vmem:[%s11] sm:$0xff]
    %v3592 = vld [vmem:[%s11 + $0x8] sm:$0xff]
    %v3593 = vld [vmem:[%s11 + $0x10] sm:$0xff]
    %v3594 = vld [vmem:[%s11 + $0x18] sm:$0xff]
    %v3595 = vld [vmem:[%s11 + $0x20] sm:$0xff]
    %v3596 = vld [vmem:[%s11 + $0x28] sm:$0xff]
    %v3597 = vld [vmem:[%s11 + $0x30] sm:$0xff]
    %v3598 = vld [vmem:[%s11 + $0x38] sm:$0xff]
    %v3599 = vld [vmem:[#allocation11] sm:$0x1]
    %v3601 = vlaneseq
    %v3602 = vshrl.u32 %v3601, 7
    %v3603 = vsub.s32 0, %v3602
    %v3604 = vrot.slane %v3599, %v3603
    %vm3606 = vcmask 523264
    %v3608 = vsel %vm3606, %v3587, 0
    %v3611 = vsel %vm3606, %v3588, 0
    %v3614 = vsel %vm3606, %v3589, 0
    %v3617 = vsel %vm3606, %v3590, 0
    %3619 = vmatprep.subr.mxu0 0.0
    %3620 = vmatpush1.msra.mxu0 %v3591
    %3621 = vmatprep.subr.mxu0 0.0
    %3622 = vmatpush1.msra.mxu0 %v3592
    %3623 = vmatprep.subr.mxu0 0.0
    %3624 = vmatpush1.msra.mxu0 %v3593
    %3625 = vmatprep.subr.mxu0 0.0
    %3626 = vmatpush1.msra.mxu0 %v3594
    %3627 = vmatprep.subr.mxu0 0.0
    %3628 = vmatpush1.msra.mxu0 %v3595
    %3629 = vmatprep.subr.mxu0 0.0
    %3630 = vmatpush1.msra.mxu0 %v3596
    %3631 = vmatprep.subr.mxu0 0.0
    %3632 = vmatpush1.msra.mxu0 %v3597
    %3633 = vmatprep.subr.mxu0 0.0
    %3634 = vmatpush1.msra.mxu0 %v3598
    %3635 = vmatprep.subr.mxu0 0.0
    %3636 = vmatpush1.msra.mxu0 0.0
    %3637 = vmatprep.subr.mxu0 0.0
    %3638 = vmatpush1.msra.mxu0 0.0
    %3639 = vmatprep.subr.mxu0 0.0
    %3640 = vmatpush1.msra.mxu0 0.0
    %3641 = vmatprep.subr.mxu0 0.0
    %3642 = vmatpush1.msra.mxu0 0.0
    %3643 = vmatprep.subr.mxu0 0.0
    %3644 = vmatpush1.msra.mxu0 0.0
    %3645 = vmatprep.subr.mxu0 0.0
    %3646 = vmatpush1.msra.mxu0 0.0
    %3647 = vmatprep.subr.mxu0 0.0
    %3648 = vmatpush1.msra.mxu0 0.0
    %3649 = vmatprep.subr.mxu0 0.0
    %3650 = vmatpush1.msra.mxu0 0.0
    %3651 = vmatprep.subr.mxu0 0.0
    %3652 = vmatpush1.msra.mxu0 0.0
    %3653 = vmatprep.subr.mxu0 0.0
    %3654 = vmatpush1.msra.mxu0 0.0
    %3655 = vmatprep.subr.mxu0 0.0
    %3656 = vmatpush1.msra.mxu0 0.0
    %3657 = vmatprep.subr.mxu0 0.0
    %3658 = vmatpush1.msra.mxu0 0.0
    %3659 = vmatprep.subr.mxu0 0.0
    %3660 = vmatpush1.msra.mxu0 0.0
    %3661 = vmatprep.subr.mxu0 0.0
    %3662 = vmatpush1.msra.mxu0 0.0
    %3663 = vmatprep.subr.mxu0 0.0
    %3664 = vmatpush1.msra.mxu0 0.0
    %3665 = vmatprep.subr.mxu0 0.0
    %3666 = vmatpush1.msra.mxu0 0.0
    %3667 = vmatprep.subr.mxu0 0.0
    %3668 = vmatpush1.msra.mxu0 0.0
    %3669 = vmatprep.subr.mxu0 0.0
    %3670 = vmatpush1.msra.mxu0 0.0
    %3671 = vmatprep.subr.mxu0 0.0
    %3672 = vmatpush1.msra.mxu0 0.0
    %3673 = vmatprep.subr.mxu0 0.0
    %3674 = vmatpush1.msra.mxu0 0.0
    %3675 = vmatprep.subr.mxu0 0.0
    %3676 = vmatpush1.msra.mxu0 0.0
    %3677 = vmatprep.subr.mxu0 0.0
    %3678 = vmatpush1.msra.mxu0 0.0
    %3679 = vmatprep.subr.mxu0 0.0
    %3680 = vmatpush1.msra.mxu0 0.0
    %3681 = vmatprep.subr.mxu0 0.0
    %3682 = vmatpush1.msra.mxu0 0.0
    %3683 = vmatprep.mubr.f32.mxu0 0.0
    %3684 = vmatmul.mubr.f32.gmra.mrb[0].mxu0 %v3608
    %v3685 = vpop.f32.mrb[0].mxu0
    %v3686 = vadd.f32 %v3604, %v3685
    %v3687 = vpop.f32.mrb[0].mxu0
    %3688 = vmatprep.mubr.f32.mxu0 0.0
    %3689 = vmatmul.mubr.f32.gmra.mrb[0].mxu0 %v3611
    %v3690 = vpop.f32.mrb[0].mxu0
    %v3691 = vadd.f32 %v3604, %v3690
    %v3692 = vpop.f32.mrb[0].mxu0
    %3693 = vmatprep.mubr.f32.mxu0 0.0
    %3694 = vmatmul.mubr.f32.gmra.mrb[0].mxu0 %v3614
    %v3695 = vpop.f32.mrb[0].mxu0
    %v3696 = vadd.f32 %v3604, %v3695
    %v3697 = vpop.f32.mrb[0].mxu0
    %3698 = vmatprep.mubr.f32.mxu0 0.0
    %3699 = vmatmul.mubr.f32.gmra.mrb[0].mxu0 %v3617
    %v3700 = vpop.f32.mrb[0].mxu0
    %v3701 = vadd.f32 %v3604, %v3700
    %v3702 = vpop.f32.mrb[0].mxu0
    %3703 = vdwg.mxu0
    %vm3704 = vcmp.gt.f32.partialorder %v3686, 0.0
    %vm3705 = vcmp.gt.f32.partialorder %v3691, 0.0
    %vm3706 = vcmp.gt.f32.partialorder %v3696, 0.0
    %vm3707 = vcmp.gt.f32.partialorder %v3701, 0.0
    %v3708 = vmul.f32 %v3686, 1.442695
    %v3709 = vpow.pop %v3708
    %v3710 = vmul.f32 %v3691, 1.442695
    %v3711 = vpow.pop %v3710
    %v3712 = vmul.f32 %v3696, 1.442695
    %v3713 = vpow.pop %v3712
    %v3714 = vmul.f32 %v3701, 1.442695
    %v3715 = vpow.pop %v3714
    %v3716 = vsub.f32 %v3709, 1.0
    %v3717 = vsub.f32 %v3711, 1.0
    %v3718 = vsub.f32 %v3713, 1.0
    %v3719 = vsub.f32 %v3715, 1.0
    %v3720 = vmul.f32 %v3716, 1.6732632
    %v3721 = vmul.f32 %v3717, 1.6732632
    %v3722 = vmul.f32 %v3718, 1.6732632
    %v3723 = vmul.f32 %v3719, 1.6732632
    %v3724 = vsel %vm3704, %v3686, %v3720
    %v3725 = vsel %vm3705, %v3691, %v3721
    %v3726 = vsel %vm3706, %v3696, %v3722
    %v3727 = vsel %vm3707, %v3701, %v3723
    %v3728 = vmul.f32 %v3724, 1.050701
    %v3729 = vmul.f32 %v3725, 1.050701
    %v3730 = vmul.f32 %v3726, 1.050701
    %v3731 = vmul.f32 %v3727, 1.050701
    %3732 = vst [vmem:[%s14] sm:$0xff] %v3728
    %3733 = vst [vmem:[%s14 + $0x8] sm:$0xff] %v3729
    %3734 = vst [vmem:[%s14 + $0x10] sm:$0xff] %v3730
    %3735 = vst [vmem:[%s14 + $0x18] sm:$0xff] %v3731
    // Predicated region
    $region78: #{rdecoder_forward.1} parent=1 // pred_check
      _
    $region79: #{rdecoder_forward.1} parent=1 // pred_check_branch
      %3737 = sbr.rel (0) target = $region81
    $region80: #{rdecoder_forward.1} parent=1 // pred_region
      _
    $region81: #{rdecoder_forward.1} parent=1 // pred_fallthru
      _
    // Predicated region
    $region82: #{rdecoder_forward.1} parent=1 // pred_check
      _
    $region83: #{rdecoder_forward.1} parent=1 // pred_check_branch
      %3739 = sbr.rel (0) target = $region85
    $region84: #{rdecoder_forward.1} parent=1 // pred_region
      _
    $region85: #{rdecoder_forward.1} parent=1 // pred_fallthru
      _
    // Predicated region
    $region86: #{rdecoder_forward.1} parent=1 // pred_check
      _
    $region87: #{rdecoder_forward.1} parent=1 // pred_check_branch
      %3741 = sbr.rel (0) target = $region89
    $region88: #{rdecoder_forward.1} parent=1 // pred_region
      _
    $region89: #{rdecoder_forward.1} parent=1 // pred_fallthru
      _
    // Predicated region
    $region90: #{rdecoder_forward.1} parent=1 // pred_check
      _
    $region91: #{rdecoder_forward.1} parent=1 // pred_check_branch
      %3743 = sbr.rel (0) target = $region93
    $region92: #{rdecoder_forward.1} parent=1 // pred_region
      _
    $region93: #{rdecoder_forward.1} parent=1 // pred_fallthru
      _
    %3744 = vsyncpa [#allocation4], 1
    %3745 = vsyncpa [#allocation6], 1
    %3746 = vsyncpa [#allocation9], 1
    %3747 = vsyncpa [#allocation12], 1

</llo_original>
